<compile_context>
chip_gen: v6e
topology: v6e:2x2x1
jax: 0.10.0
libtpu: 0.0.40
codegen_flags: <defaults>
</compile_context>

<pallas_src>
import functools

import jax
import jax.numpy as jnp
from jax import lax
from jax.experimental import pallas as pl
from jax.experimental.pallas import tpu as pltpu

EMB_DIM = 128
H1 = 128
H2 = 64
H2_PAD = 128          # lane-dense padding of the 64-wide hidden layer
_ISSUE_UNROLL = 8     # row-DMA issue chunk (manual unroll inside fori_loop)


def mlp_kernel(uid_ref, iid_ref,                 # scalar-prefetch ids (SMEM)
               utab_hbm, itab_hbm,               # full tables, HBM-resident
               w1_ref, b1_ref, w2_ref, b2_ref, w3_ref, b3_ref,   # weights
               out_ref,                          # (TB, 1)
               xu_scr, xi_scr, sem):             # (2, TB, 128) x2 + DMA sems
    t = pl.program_id(0)
    nt = pl.num_programs(0)
    tb = out_ref.shape[0]

    def issue_gather(tile, slot):
        """Issue 2*tb row DMAs for `tile` into buffer `slot`.

        All user-row copies signal sem[0, slot] and all item-row copies signal
        sem[1, slot] (DMA sems count bytes, so one aggregated wait per table
        retires the whole gather).  Issued in unrolled chunks of
        _ISSUE_UNROLL rows so scalar id loads co-issue with descriptor pushes.
        """
        base = tile * tb

        def chunk(c, carry):
            i0 = c * _ISSUE_UNROLL
            for j in range(_ISSUE_UNROLL):          # static unroll
                i = i0 + j
                u = uid_ref[base + i]
                v = iid_ref[base + i]
                pltpu.make_async_copy(
                    utab_hbm.at[pl.ds(u, 1), :],
                    xu_scr.at[slot, pl.ds(i, 1), :],
                    sem.at[0, slot]).start()
                pltpu.make_async_copy(
                    itab_hbm.at[pl.ds(v, 1), :],
                    xi_scr.at[slot, pl.ds(i, 1), :],
                    sem.at[1, slot]).start()
            return carry

        lax.fori_loop(0, tb // _ISSUE_UNROLL, chunk, 0)

    def wait_gather(slot):
        """One aggregated wait per table: descriptor spans exactly the union
        of the tb row copies (tb*128*dtype bytes), so a single .wait()
        retires them all.  src/dst are the scratch slot itself so the
        descriptor is always in-bounds (it is only used for its byte count)."""
        pltpu.make_async_copy(xu_scr.at[slot], xu_scr.at[slot],
                              sem.at[0, slot]).wait()
        pltpu.make_async_copy(xi_scr.at[slot], xi_scr.at[slot],
                              sem.at[1, slot]).wait()

    # ---- double-buffered cross-tile gather prefetch -------------------------
    @pl.when(t == 0)
    def _():
        issue_gather(0, 0)                 # prime slot 0 with the first tile

    slot = lax.rem(t, 2)
    wait_gather(slot)                      # tile t's rows are now in `slot`

    @pl.when(t + 1 < nt)
    def _():
        issue_gather(t + 1, 1 - slot)      # prefetch next tile behind compute

    # ---- 3-layer MLP on the gathered tile ------------------------------------
    xu = xu_scr[slot]                                    # (TB, 128)
    xi = xi_scr[slot]                                    # (TB, 128)

    # concat(xu, xi) @ w1  ==  xu @ w1[:128] + xi @ w1[128:]
    h1 = jnp.dot(xu, w1_ref[0:EMB_DIM, :], preferred_element_type=jnp.float32)
    h1 = h1 + jnp.dot(xi, w1_ref[EMB_DIM:2 * EMB_DIM, :],
                      preferred_element_type=jnp.float32)
    h1 = jnp.maximum(h1 + b1_ref[...], 0.0)              # (TB, 128)

    h2 = jnp.dot(h1, w2_ref[...], preferred_element_type=jnp.float32)
    h2 = jnp.maximum(h2 + b2_ref[...], 0.0)              # (TB, 128); cols [64:) are 0

    # final Linear(64, 1): VPU multiply + cross-lane reduce (MXU N=1 avoided)
    y = jnp.sum(h2 * w3_ref[...], axis=-1, keepdims=True) + b3_ref[0, 0]
    out_ref[...] = y                                     # (TB, 1)


def prepare_params(params):
    """One-time kernel-side packing: zero-pad the 64-wide layer to 128 lanes.
    Do this once (not per forward call)."""
    utab, itab, w1, b1, w2, b2, w3, b3 = params
    w2p = jnp.zeros((H1, H2_PAD), w2.dtype).at[:, :H2].set(w2)
    b2p = jnp.zeros((1, H2_PAD), b2.dtype).at[:, :H2].set(b2)
    w3row = jnp.zeros((1, H2_PAD), w3.dtype).at[:, :H2].set(w3[:, 0])
    return (utab, itab, w1, b1, w2p, b2p, w3row, b3)


@functools.partial(jax.jit, static_argnames=("tb",))
def mlp_forward(user_id, item_id, prepared, *, tb=256):
    """tb: batch tile (multiple of 8). Default 256 (full MXU pass on v6e/v7x);
    use 512+ on v5e.  VMEM use is < 1 MiB even at tb=1024."""
    utab, itab, w1, b1, w2p, b2p, w3row, b3 = prepared
    B = user_id.shape[0]

    # Pad batch to a multiple of the tile (padded rows gather row 0 of each
    # table, outputs dropped), keeping "every scratch row is written".
    B_pad = ((B + tb - 1) // tb) * tb
    pad = B_pad - B
    uid = jnp.pad(user_id.astype(jnp.int32), (0, pad))
    iid = jnp.pad(item_id.astype(jnp.int32), (0, pad))
    n_tiles = B_pad // tb

    grid_spec = pltpu.PrefetchScalarGridSpec(
        num_scalar_prefetch=2,                              # uid, iid -> SMEM
        grid=(n_tiles,),
        in_specs=[
            pl.BlockSpec(memory_space=pl.ANY),              # user table (HBM)
            pl.BlockSpec(memory_space=pl.ANY),              # item table (HBM)
            pl.BlockSpec((2 * EMB_DIM, H1), lambda t, u, i: (0, 0)),   # w1
            pl.BlockSpec((1, H1), lambda t, u, i: (0, 0)),             # b1
            pl.BlockSpec((H1, H2_PAD), lambda t, u, i: (0, 0)),        # w2 (padded)
            pl.BlockSpec((1, H2_PAD), lambda t, u, i: (0, 0)),         # b2 (padded)
            pl.BlockSpec((1, H2_PAD), lambda t, u, i: (0, 0)),         # w3 row (padded)
            pl.BlockSpec(memory_space=pltpu.MemorySpace.SMEM),         # b3 scalar
        ],
        out_specs=pl.BlockSpec((tb, 1), lambda t, u, i: (t, 0)),
        scratch_shapes=[
            pltpu.VMEM((2, tb, EMB_DIM), utab.dtype),       # user rows (2 slots)
            pltpu.VMEM((2, tb, EMB_DIM), itab.dtype),       # item rows (2 slots)
            pltpu.SemaphoreType.DMA((2, 2)),                # [table, slot]
        ],
    )

    out = pl.pallas_call(
        mlp_kernel,
        out_shape=jax.ShapeDtypeStruct((B_pad, 1), jnp.float32),
        grid_spec=grid_spec,
        compiler_params=pltpu.CompilerParams(
            # "arbitrary": the t -> t+1 gather-prefetch chain requires
            # sequential grid iteration (also megacore-safe on v7x).
            dimension_semantics=("arbitrary",)),
    )(uid, iid, utab, itab, w1, b1, w2p, b2p, w3row, b3)

    # Matches torch .squeeze() for B > 1.
    # TODO(synk): for B == 1 torch .squeeze() returns a 0-d scalar; here it is shape (1,).
    return out[:B, 0]


def make_params(user_num, item_num, key):
    ks = jax.random.split(key, 8)
    # Tables may also be bf16 to halve gather bytes; kept f32 here for an
    # exact check against the f32 reference.
    utab = jax.random.normal(ks[0], (user_num, EMB_DIM), jnp.float32)
    itab = jax.random.normal(ks[1], (item_num, EMB_DIM), jnp.float32)
    # Linear weights stored as (in, out) == PyTorch weight.T
    w1 = jax.random.normal(ks[2], (2 * EMB_DIM, H1), jnp.float32) * 0.05
    b1 = jax.random.normal(ks[3], (1, H1), jnp.float32) * 0.05
    w2 = jax.random.normal(ks[4], (H1, H2), jnp.float32) * 0.05
    b2 = jax.random.normal(ks[5], (1, H2), jnp.float32) * 0.05
    w3 = jax.random.normal(ks[6], (H2, 1), jnp.float32) * 0.05
    b3 = jax.random.normal(ks[7], (1, 1), jnp.float32) * 0.05
    return (utab, itab, w1, b1, w2, b2, w3, b3)


def mlp_reference(user_id, item_id, params):
    utab, itab, w1, b1, w2, b2, w3, b3 = params
    x = jnp.concatenate([utab[user_id], itab[item_id]], axis=1)
    h1 = jnp.maximum(x @ w1 + b1, 0.0)
    h2 = jnp.maximum(h1 @ w2 + b2, 0.0)
    return (h2 @ w3 + b3)[:, 0]


if __name__ == "__main__":
    # batch > tb exercises the 2-tile double-buffered prefetch chain, and is
    # deliberately not a multiple of the tile to exercise padding.
    user_num, item_num, batch, tb = 64, 80, 300, 256
    key = jax.random.PRNGKey(0)
    kp, ku, ki = jax.random.split(key, 3)

    params = make_params(user_num, item_num, kp)
    prepared = prepare_params(params)
    user_id = jax.random.randint(ku, (batch,), 0, user_num, dtype=jnp.int32)
    item_id = jax.random.randint(ki, (batch,), 0, item_num, dtype=jnp.int32)

    out = mlp_forward(user_id, item_id, prepared, tb=tb)
    out = jax.block_until_ready(out)

    ref = mlp_reference(user_id, item_id, params)
    assert out.shape == (batch,)
    assert jnp.allclose(out, ref, atol=1e-4, rtol=1e-4)
    print("KERNEL_OK")
</pallas_src>

<mosaic_0001>
module attributes {stable_mosaic.version = 11 : i64} {
  func.func @mlp_kernel(%arg0: i32, %arg1: memref<512xi32, #tpu.memory_space<smem>>, %arg2: memref<512xi32, #tpu.memory_space<smem>>, %arg3: memref<64x128xf32, #tpu.memory_space<any>>, %arg4: memref<80x128xf32, #tpu.memory_space<any>>, %arg5: memref<256x128xf32, #tpu.memory_space<vmem>>, %arg6: memref<1x128xf32, #tpu.memory_space<vmem>>, %arg7: memref<128x128xf32, #tpu.memory_space<vmem>>, %arg8: memref<1x128xf32, #tpu.memory_space<vmem>>, %arg9: memref<1x128xf32, #tpu.memory_space<vmem>>, %arg10: memref<1x1xf32, #tpu.memory_space<smem>>, %arg11: memref<256x1xf32, #tpu.memory_space<vmem>>, %arg12: memref<2x256x128xf32, #tpu.memory_space<vmem>>, %arg13: memref<2x256x128xf32, #tpu.memory_space<vmem>>, %arg14: memref<2x2x!tpu.dma_semaphore, #tpu.memory_space<semaphore_mem>>) attributes {dimension_semantics = [#tpu.dimension_semantics<arbitrary>], iteration_bounds = array<i64: 2>, scalar_prefetch = 2 : i64, scratch_operands = 3 : i64, tpu.core_type = #tpu.core_type<tc>, window_params = [{}, {}, {pipeline_mode = #tpu.pipeline_mode<synchronous>, transform_indices = @transform_2, window_bounds = array<i64: 256, 128>}, {pipeline_mode = #tpu.pipeline_mode<synchronous>, transform_indices = @transform_3, window_bounds = array<i64: 1, 128>}, {pipeline_mode = #tpu.pipeline_mode<synchronous>, transform_indices = @transform_4, window_bounds = array<i64: 128, 128>}, {pipeline_mode = #tpu.pipeline_mode<synchronous>, transform_indices = @transform_5, window_bounds = array<i64: 1, 128>}, {pipeline_mode = #tpu.pipeline_mode<synchronous>, transform_indices = @transform_6, window_bounds = array<i64: 1, 128>}, {transform_indices = @transform_7, window_bounds = array<i64: 1, 1>}, {transform_indices = @transform_8, window_bounds = array<i64: 256, 1>}]} {
    %c0_i32 = arith.constant 0 : i32
    %0 = arith.cmpi eq, %arg0, %c0_i32 : i32
    %1 = arith.extui %0 : i1 to i32
    %c0_i32_0 = arith.constant 0 : i32
    %2 = arith.cmpi ne, %1, %c0_i32_0 : i32
    scf.if %2 {
      %c0_i32_36 = arith.constant 0 : i32
      %c32_i32 = arith.constant 32 : i32
      %52 = arith.addi %c0_i32_36, %c32_i32 : i32
      %c1_i32_37 = arith.constant 1 : i32
      scf.for %arg15 = %c0_i32_36 to %52 step %c1_i32_37  : i32 {
        %c8_i32 = arith.constant 8 : i32
        %53 = arith.muli %arg15, %c8_i32 : i32
        %c0_i32_39 = arith.constant 0 : i32
        %54 = arith.addi %53, %c0_i32_39 : i32
        %c0_i32_40 = arith.constant 0 : i32
        %55 = arith.addi %c0_i32_40, %54 : i32
        %56 = arith.index_cast %55 : i32 to index
        %57 = memref.load %arg1[%56] : memref<512xi32, #tpu.memory_space<smem>>
        %c0_i32_41 = arith.constant 0 : i32
        %58 = arith.addi %c0_i32_41, %54 : i32
        %59 = arith.index_cast %58 : i32 to index
        %60 = memref.load %arg2[%59] : memref<512xi32, #tpu.memory_space<smem>>
        %c0_i32_42 = arith.constant 0 : i32
        %c0_i32_43 = arith.constant 0 : i32
        %c0_i32_44 = arith.constant 0 : i32
        %c0_i32_45 = arith.constant 0 : i32
        %61 = tpu.memref_slice %arg3[%57, %c0_i32_45] : memref<64x128xf32, #tpu.memory_space<any>> -> memref<1x128xf32, #tpu.memory_space<any>>
        %c0_i32_46 = arith.constant 0 : i32
        %62 = tpu.memref_slice %arg12[%c0_i32_42, %54, %c0_i32_46] : memref<2x256x128xf32, #tpu.memory_space<vmem>> -> memref<1x1x128xf32, #tpu.memory_space<vmem>>
        %63 = tpu.memref_squeeze %62 : memref<1x1x128xf32, #tpu.memory_space<vmem>> -> memref<1x128xf32, #tpu.memory_space<vmem>>
        %64 = tpu.memref_slice %arg14[%c0_i32_43, %c0_i32_44] : memref<2x2x!tpu.dma_semaphore, #tpu.memory_space<semaphore_mem>> -> memref<1x1x!tpu.dma_semaphore, #tpu.memory_space<semaphore_mem>>
        %65 = tpu.memref_squeeze %64 : memref<1x1x!tpu.dma_semaphore, #tpu.memory_space<semaphore_mem>> -> memref<!tpu.dma_semaphore, #tpu.memory_space<semaphore_mem>>
        tpu.enqueue_dma source(%61 : memref<1x128xf32, #tpu.memory_space<any>>) target(%63 : memref<1x128xf32, #tpu.memory_space<vmem>>) target_semaphore(%65 : memref<!tpu.dma_semaphore, #tpu.memory_space<semaphore_mem>>)
        %c0_i32_47 = arith.constant 0 : i32
        %c1_i32_48 = arith.constant 1 : i32
        %c0_i32_49 = arith.constant 0 : i32
        %c0_i32_50 = arith.constant 0 : i32
        %66 = tpu.memref_slice %arg4[%60, %c0_i32_50] : memref<80x128xf32, #tpu.memory_space<any>> -> memref<1x128xf32, #tpu.memory_space<any>>
        %c0_i32_51 = arith.constant 0 : i32
        %67 = tpu.memref_slice %arg13[%c0_i32_47, %54, %c0_i32_51] : memref<2x256x128xf32, #tpu.memory_space<vmem>> -> memref<1x1x128xf32, #tpu.memory_space<vmem>>
        %68 = tpu.memref_squeeze %67 : memref<1x1x128xf32, #tpu.memory_space<vmem>> -> memref<1x128xf32, #tpu.memory_space<vmem>>
        %69 = tpu.memref_slice %arg14[%c1_i32_48, %c0_i32_49] : memref<2x2x!tpu.dma_semaphore, #tpu.memory_space<semaphore_mem>> -> memref<1x1x!tpu.dma_semaphore, #tpu.memory_space<semaphore_mem>>
        %70 = tpu.memref_squeeze %69 : memref<1x1x!tpu.dma_semaphore, #tpu.memory_space<semaphore_mem>> -> memref<!tpu.dma_semaphore, #tpu.memory_space<semaphore_mem>>
        tpu.enqueue_dma source(%66 : memref<1x128xf32, #tpu.memory_space<any>>) target(%68 : memref<1x128xf32, #tpu.memory_space<vmem>>) target_semaphore(%70 : memref<!tpu.dma_semaphore, #tpu.memory_space<semaphore_mem>>)
        %c1_i32_52 = arith.constant 1 : i32
        %71 = arith.addi %53, %c1_i32_52 : i32
        %c0_i32_53 = arith.constant 0 : i32
        %72 = arith.addi %c0_i32_53, %71 : i32
        %73 = arith.index_cast %72 : i32 to index
        %74 = memref.load %arg1[%73] : memref<512xi32, #tpu.memory_space<smem>>
        %c0_i32_54 = arith.constant 0 : i32
        %75 = arith.addi %c0_i32_54, %71 : i32
        %76 = arith.index_cast %75 : i32 to index
        %77 = memref.load %arg2[%76] : memref<512xi32, #tpu.memory_space<smem>>
        %c0_i32_55 = arith.constant 0 : i32
        %c0_i32_56 = arith.constant 0 : i32
        %c0_i32_57 = arith.constant 0 : i32
        %c0_i32_58 = arith.constant 0 : i32
        %78 = tpu.memref_slice %arg3[%74, %c0_i32_58] : memref<64x128xf32, #tpu.memory_space<any>> -> memref<1x128xf32, #tpu.memory_space<any>>
        %c0_i32_59 = arith.constant 0 : i32
        %79 = tpu.memref_slice %arg12[%c0_i32_55, %71, %c0_i32_59] : memref<2x256x128xf32, #tpu.memory_space<vmem>> -> memref<1x1x128xf32, #tpu.memory_space<vmem>>
        %80 = tpu.memref_squeeze %79 : memref<1x1x128xf32, #tpu.memory_space<vmem>> -> memref<1x128xf32, #tpu.memory_space<vmem>>
        %81 = tpu.memref_slice %arg14[%c0_i32_56, %c0_i32_57] : memref<2x2x!tpu.dma_semaphore, #tpu.memory_space<semaphore_mem>> -> memref<1x1x!tpu.dma_semaphore, #tpu.memory_space<semaphore_mem>>
        %82 = tpu.memref_squeeze %81 : memref<1x1x!tpu.dma_semaphore, #tpu.memory_space<semaphore_mem>> -> memref<!tpu.dma_semaphore, #tpu.memory_space<semaphore_mem>>
        tpu.enqueue_dma source(%78 : memref<1x128xf32, #tpu.memory_space<any>>) target(%80 : memref<1x128xf32, #tpu.memory_space<vmem>>) target_semaphore(%82 : memref<!tpu.dma_semaphore, #tpu.memory_space<semaphore_mem>>)
        %c0_i32_60 = arith.constant 0 : i32
        %c1_i32_61 = arith.constant 1 : i32
        %c0_i32_62 = arith.constant 0 : i32
        %c0_i32_63 = arith.constant 0 : i32
        %83 = tpu.memref_slice %arg4[%77, %c0_i32_63] : memref<80x128xf32, #tpu.memory_space<any>> -> memref<1x128xf32, #tpu.memory_space<any>>
        %c0_i32_64 = arith.constant 0 : i32
        %84 = tpu.memref_slice %arg13[%c0_i32_60, %71, %c0_i32_64] : memref<2x256x128xf32, #tpu.memory_space<vmem>> -> memref<1x1x128xf32, #tpu.memory_space<vmem>>
        %85 = tpu.memref_squeeze %84 : memref<1x1x128xf32, #tpu.memory_space<vmem>> -> memref<1x128xf32, #tpu.memory_space<vmem>>
        %86 = tpu.memref_slice %arg14[%c1_i32_61, %c0_i32_62] : memref<2x2x!tpu.dma_semaphore, #tpu.memory_space<semaphore_mem>> -> memref<1x1x!tpu.dma_semaphore, #tpu.memory_space<semaphore_mem>>
        %87 = tpu.memref_squeeze %86 : memref<1x1x!tpu.dma_semaphore, #tpu.memory_space<semaphore_mem>> -> memref<!tpu.dma_semaphore, #tpu.memory_space<semaphore_mem>>
        tpu.enqueue_dma source(%83 : memref<1x128xf32, #tpu.memory_space<any>>) target(%85 : memref<1x128xf32, #tpu.memory_space<vmem>>) target_semaphore(%87 : memref<!tpu.dma_semaphore, #tpu.memory_space<semaphore_mem>>)
        %c2_i32_65 = arith.constant 2 : i32
        %88 = arith.addi %53, %c2_i32_65 : i32
        %c0_i32_66 = arith.constant 0 : i32
        %89 = arith.addi %c0_i32_66, %88 : i32
        %90 = arith.index_cast %89 : i32 to index
        %91 = memref.load %arg1[%90] : memref<512xi32, #tpu.memory_space<smem>>
        %c0_i32_67 = arith.constant 0 : i32
        %92 = arith.addi %c0_i32_67, %88 : i32
        %93 = arith.index_cast %92 : i32 to index
        %94 = memref.load %arg2[%93] : memref<512xi32, #tpu.memory_space<smem>>
        %c0_i32_68 = arith.constant 0 : i32
        %c0_i32_69 = arith.constant 0 : i32
        %c0_i32_70 = arith.constant 0 : i32
        %c0_i32_71 = arith.constant 0 : i32
        %95 = tpu.memref_slice %arg3[%91, %c0_i32_71] : memref<64x128xf32, #tpu.memory_space<any>> -> memref<1x128xf32, #tpu.memory_space<any>>
        %c0_i32_72 = arith.constant 0 : i32
        %96 = tpu.memref_slice %arg12[%c0_i32_68, %88, %c0_i32_72] : memref<2x256x128xf32, #tpu.memory_space<vmem>> -> memref<1x1x128xf32, #tpu.memory_space<vmem>>
        %97 = tpu.memref_squeeze %96 : memref<1x1x128xf32, #tpu.memory_space<vmem>> -> memref<1x128xf32, #tpu.memory_space<vmem>>
        %98 = tpu.memref_slice %arg14[%c0_i32_69, %c0_i32_70] : memref<2x2x!tpu.dma_semaphore, #tpu.memory_space<semaphore_mem>> -> memref<1x1x!tpu.dma_semaphore, #tpu.memory_space<semaphore_mem>>
        %99 = tpu.memref_squeeze %98 : memref<1x1x!tpu.dma_semaphore, #tpu.memory_space<semaphore_mem>> -> memref<!tpu.dma_semaphore, #tpu.memory_space<semaphore_mem>>
        tpu.enqueue_dma source(%95 : memref<1x128xf32, #tpu.memory_space<any>>) target(%97 : memref<1x128xf32, #tpu.memory_space<vmem>>) target_semaphore(%99 : memref<!tpu.dma_semaphore, #tpu.memory_space<semaphore_mem>>)
        %c0_i32_73 = arith.constant 0 : i32
        %c1_i32_74 = arith.constant 1 : i32
        %c0_i32_75 = arith.constant 0 : i32
        %c0_i32_76 = arith.constant 0 : i32
        %100 = tpu.memref_slice %arg4[%94, %c0_i32_76] : memref<80x128xf32, #tpu.memory_space<any>> -> memref<1x128xf32, #tpu.memory_space<any>>
        %c0_i32_77 = arith.constant 0 : i32
        %101 = tpu.memref_slice %arg13[%c0_i32_73, %88, %c0_i32_77] : memref<2x256x128xf32, #tpu.memory_space<vmem>> -> memref<1x1x128xf32, #tpu.memory_space<vmem>>
        %102 = tpu.memref_squeeze %101 : memref<1x1x128xf32, #tpu.memory_space<vmem>> -> memref<1x128xf32, #tpu.memory_space<vmem>>
        %103 = tpu.memref_slice %arg14[%c1_i32_74, %c0_i32_75] : memref<2x2x!tpu.dma_semaphore, #tpu.memory_space<semaphore_mem>> -> memref<1x1x!tpu.dma_semaphore, #tpu.memory_space<semaphore_mem>>
        %104 = tpu.memref_squeeze %103 : memref<1x1x!tpu.dma_semaphore, #tpu.memory_space<semaphore_mem>> -> memref<!tpu.dma_semaphore, #tpu.memory_space<semaphore_mem>>
        tpu.enqueue_dma source(%100 : memref<1x128xf32, #tpu.memory_space<any>>) target(%102 : memref<1x128xf32, #tpu.memory_space<vmem>>) target_semaphore(%104 : memref<!tpu.dma_semaphore, #tpu.memory_space<semaphore_mem>>)
        %c3_i32 = arith.constant 3 : i32
        %105 = arith.addi %53, %c3_i32 : i32
        %c0_i32_78 = arith.constant 0 : i32
        %106 = arith.addi %c0_i32_78, %105 : i32
        %107 = arith.index_cast %106 : i32 to index
        %108 = memref.load %arg1[%107] : memref<512xi32, #tpu.memory_space<smem>>
        %c0_i32_79 = arith.constant 0 : i32
        %109 = arith.addi %c0_i32_79, %105 : i32
        %110 = arith.index_cast %109 : i32 to index
        %111 = memref.load %arg2[%110] : memref<512xi32, #tpu.memory_space<smem>>
        %c0_i32_80 = arith.constant 0 : i32
        %c0_i32_81 = arith.constant 0 : i32
        %c0_i32_82 = arith.constant 0 : i32
        %c0_i32_83 = arith.constant 0 : i32
        %112 = tpu.memref_slice %arg3[%108, %c0_i32_83] : memref<64x128xf32, #tpu.memory_space<any>> -> memref<1x128xf32, #tpu.memory_space<any>>
        %c0_i32_84 = arith.constant 0 : i32
        %113 = tpu.memref_slice %arg12[%c0_i32_80, %105, %c0_i32_84] : memref<2x256x128xf32, #tpu.memory_space<vmem>> -> memref<1x1x128xf32, #tpu.memory_space<vmem>>
        %114 = tpu.memref_squeeze %113 : memref<1x1x128xf32, #tpu.memory_space<vmem>> -> memref<1x128xf32, #tpu.memory_space<vmem>>
        %115 = tpu.memref_slice %arg14[%c0_i32_81, %c0_i32_82] : memref<2x2x!tpu.dma_semaphore, #tpu.memory_space<semaphore_mem>> -> memref<1x1x!tpu.dma_semaphore, #tpu.memory_space<semaphore_mem>>
        %116 = tpu.memref_squeeze %115 : memref<1x1x!tpu.dma_semaphore, #tpu.memory_space<semaphore_mem>> -> memref<!tpu.dma_semaphore, #tpu.memory_space<semaphore_mem>>
        tpu.enqueue_dma source(%112 : memref<1x128xf32, #tpu.memory_space<any>>) target(%114 : memref<1x128xf32, #tpu.memory_space<vmem>>) target_semaphore(%116 : memref<!tpu.dma_semaphore, #tpu.memory_space<semaphore_mem>>)
        %c0_i32_85 = arith.constant 0 : i32
        %c1_i32_86 = arith.constant 1 : i32
        %c0_i32_87 = arith.constant 0 : i32
        %c0_i32_88 = arith.constant 0 : i32
        %117 = tpu.memref_slice %arg4[%111, %c0_i32_88] : memref<80x128xf32, #tpu.memory_space<any>> -> memref<1x128xf32, #tpu.memory_space<any>>
        %c0_i32_89 = arith.constant 0 : i32
        %118 = tpu.memref_slice %arg13[%c0_i32_85, %105, %c0_i32_89] : memref<2x256x128xf32, #tpu.memory_space<vmem>> -> memref<1x1x128xf32, #tpu.memory_space<vmem>>
        %119 = tpu.memref_squeeze %118 : memref<1x1x128xf32, #tpu.memory_space<vmem>> -> memref<1x128xf32, #tpu.memory_space<vmem>>
        %120 = tpu.memref_slice %arg14[%c1_i32_86, %c0_i32_87] : memref<2x2x!tpu.dma_semaphore, #tpu.memory_space<semaphore_mem>> -> memref<1x1x!tpu.dma_semaphore, #tpu.memory_space<semaphore_mem>>
        %121 = tpu.memref_squeeze %120 : memref<1x1x!tpu.dma_semaphore, #tpu.memory_space<semaphore_mem>> -> memref<!tpu.dma_semaphore, #tpu.memory_space<semaphore_mem>>
        tpu.enqueue_dma source(%117 : memref<1x128xf32, #tpu.memory_space<any>>) target(%119 : memref<1x128xf32, #tpu.memory_space<vmem>>) target_semaphore(%121 : memref<!tpu.dma_semaphore, #tpu.memory_space<semaphore_mem>>)
        %c4_i32 = arith.constant 4 : i32
        %122 = arith.addi %53, %c4_i32 : i32
        %c0_i32_90 = arith.constant 0 : i32
        %123 = arith.addi %c0_i32_90, %122 : i32
        %124 = arith.index_cast %123 : i32 to index
        %125 = memref.load %arg1[%124] : memref<512xi32, #tpu.memory_space<smem>>
        %c0_i32_91 = arith.constant 0 : i32
        %126 = arith.addi %c0_i32_91, %122 : i32
        %127 = arith.index_cast %126 : i32 to index
        %128 = memref.load %arg2[%127] : memref<512xi32, #tpu.memory_space<smem>>
        %c0_i32_92 = arith.constant 0 : i32
        %c0_i32_93 = arith.constant 0 : i32
        %c0_i32_94 = arith.constant 0 : i32
        %c0_i32_95 = arith.constant 0 : i32
        %129 = tpu.memref_slice %arg3[%125, %c0_i32_95] : memref<64x128xf32, #tpu.memory_space<any>> -> memref<1x128xf32, #tpu.memory_space<any>>
        %c0_i32_96 = arith.constant 0 : i32
        %130 = tpu.memref_slice %arg12[%c0_i32_92, %122, %c0_i32_96] : memref<2x256x128xf32, #tpu.memory_space<vmem>> -> memref<1x1x128xf32, #tpu.memory_space<vmem>>
        %131 = tpu.memref_squeeze %130 : memref<1x1x128xf32, #tpu.memory_space<vmem>> -> memref<1x128xf32, #tpu.memory_space<vmem>>
        %132 = tpu.memref_slice %arg14[%c0_i32_93, %c0_i32_94] : memref<2x2x!tpu.dma_semaphore, #tpu.memory_space<semaphore_mem>> -> memref<1x1x!tpu.dma_semaphore, #tpu.memory_space<semaphore_mem>>
        %133 = tpu.memref_squeeze %132 : memref<1x1x!tpu.dma_semaphore, #tpu.memory_space<semaphore_mem>> -> memref<!tpu.dma_semaphore, #tpu.memory_space<semaphore_mem>>
        tpu.enqueue_dma source(%129 : memref<1x128xf32, #tpu.memory_space<any>>) target(%131 : memref<1x128xf32, #tpu.memory_space<vmem>>) target_semaphore(%133 : memref<!tpu.dma_semaphore, #tpu.memory_space<semaphore_mem>>)
        %c0_i32_97 = arith.constant 0 : i32
        %c1_i32_98 = arith.constant 1 : i32
        %c0_i32_99 = arith.constant 0 : i32
        %c0_i32_100 = arith.constant 0 : i32
        %134 = tpu.memref_slice %arg4[%128, %c0_i32_100] : memref<80x128xf32, #tpu.memory_space<any>> -> memref<1x128xf32, #tpu.memory_space<any>>
        %c0_i32_101 = arith.constant 0 : i32
        %135 = tpu.memref_slice %arg13[%c0_i32_97, %122, %c0_i32_101] : memref<2x256x128xf32, #tpu.memory_space<vmem>> -> memref<1x1x128xf32, #tpu.memory_space<vmem>>
        %136 = tpu.memref_squeeze %135 : memref<1x1x128xf32, #tpu.memory_space<vmem>> -> memref<1x128xf32, #tpu.memory_space<vmem>>
        %137 = tpu.memref_slice %arg14[%c1_i32_98, %c0_i32_99] : memref<2x2x!tpu.dma_semaphore, #tpu.memory_space<semaphore_mem>> -> memref<1x1x!tpu.dma_semaphore, #tpu.memory_space<semaphore_mem>>
        %138 = tpu.memref_squeeze %137 : memref<1x1x!tpu.dma_semaphore, #tpu.memory_space<semaphore_mem>> -> memref<!tpu.dma_semaphore, #tpu.memory_space<semaphore_mem>>
        tpu.enqueue_dma source(%134 : memref<1x128xf32, #tpu.memory_space<any>>) target(%136 : memref<1x128xf32, #tpu.memory_space<vmem>>) target_semaphore(%138 : memref<!tpu.dma_semaphore, #tpu.memory_space<semaphore_mem>>)
        %c5_i32 = arith.constant 5 : i32
        %139 = arith.addi %53, %c5_i32 : i32
        %c0_i32_102 = arith.constant 0 : i32
        %140 = arith.addi %c0_i32_102, %139 : i32
        %141 = arith.index_cast %140 : i32 to index
        %142 = memref.load %arg1[%141] : memref<512xi32, #tpu.memory_space<smem>>
        %c0_i32_103 = arith.constant 0 : i32
        %143 = arith.addi %c0_i32_103, %139 : i32
        %144 = arith.index_cast %143 : i32 to index
        %145 = memref.load %arg2[%144] : memref<512xi32, #tpu.memory_space<smem>>
        %c0_i32_104 = arith.constant 0 : i32
        %c0_i32_105 = arith.constant 0 : i32
        %c0_i32_106 = arith.constant 0 : i32
        %c0_i32_107 = arith.constant 0 : i32
        %146 = tpu.memref_slice %arg3[%142, %c0_i32_107] : memref<64x128xf32, #tpu.memory_space<any>> -> memref<1x128xf32, #tpu.memory_space<any>>
        %c0_i32_108 = arith.constant 0 : i32
        %147 = tpu.memref_slice %arg12[%c0_i32_104, %139, %c0_i32_108] : memref<2x256x128xf32, #tpu.memory_space<vmem>> -> memref<1x1x128xf32, #tpu.memory_space<vmem>>
        %148 = tpu.memref_squeeze %147 : memref<1x1x128xf32, #tpu.memory_space<vmem>> -> memref<1x128xf32, #tpu.memory_space<vmem>>
        %149 = tpu.memref_slice %arg14[%c0_i32_105, %c0_i32_106] : memref<2x2x!tpu.dma_semaphore, #tpu.memory_space<semaphore_mem>> -> memref<1x1x!tpu.dma_semaphore, #tpu.memory_space<semaphore_mem>>
        %150 = tpu.memref_squeeze %149 : memref<1x1x!tpu.dma_semaphore, #tpu.memory_space<semaphore_mem>> -> memref<!tpu.dma_semaphore, #tpu.memory_space<semaphore_mem>>
        tpu.enqueue_dma source(%146 : memref<1x128xf32, #tpu.memory_space<any>>) target(%148 : memref<1x128xf32, #tpu.memory_space<vmem>>) target_semaphore(%150 : memref<!tpu.dma_semaphore, #tpu.memory_space<semaphore_mem>>)
        %c0_i32_109 = arith.constant 0 : i32
        %c1_i32_110 = arith.constant 1 : i32
        %c0_i32_111 = arith.constant 0 : i32
        %c0_i32_112 = arith.constant 0 : i32
        %151 = tpu.memref_slice %arg4[%145, %c0_i32_112] : memref<80x128xf32, #tpu.memory_space<any>> -> memref<1x128xf32, #tpu.memory_space<any>>
        %c0_i32_113 = arith.constant 0 : i32
        %152 = tpu.memref_slice %arg13[%c0_i32_109, %139, %c0_i32_113] : memref<2x256x128xf32, #tpu.memory_space<vmem>> -> memref<1x1x128xf32, #tpu.memory_space<vmem>>
        %153 = tpu.memref_squeeze %152 : memref<1x1x128xf32, #tpu.memory_space<vmem>> -> memref<1x128xf32, #tpu.memory_space<vmem>>
        %154 = tpu.memref_slice %arg14[%c1_i32_110, %c0_i32_111] : memref<2x2x!tpu.dma_semaphore, #tpu.memory_space<semaphore_mem>> -> memref<1x1x!tpu.dma_semaphore, #tpu.memory_space<semaphore_mem>>
        %155 = tpu.memref_squeeze %154 : memref<1x1x!tpu.dma_semaphore, #tpu.memory_space<semaphore_mem>> -> memref<!tpu.dma_semaphore, #tpu.memory_space<semaphore_mem>>
        tpu.enqueue_dma source(%151 : memref<1x128xf32, #tpu.memory_space<any>>) target(%153 : memref<1x128xf32, #tpu.memory_space<vmem>>) target_semaphore(%155 : memref<!tpu.dma_semaphore, #tpu.memory_space<semaphore_mem>>)
        %c6_i32 = arith.constant 6 : i32
        %156 = arith.addi %53, %c6_i32 : i32
        %c0_i32_114 = arith.constant 0 : i32
        %157 = arith.addi %c0_i32_114, %156 : i32
        %158 = arith.index_cast %157 : i32 to index
        %159 = memref.load %arg1[%158] : memref<512xi32, #tpu.memory_space<smem>>
        %c0_i32_115 = arith.constant 0 : i32
        %160 = arith.addi %c0_i32_115, %156 : i32
        %161 = arith.index_cast %160 : i32 to index
        %162 = memref.load %arg2[%161] : memref<512xi32, #tpu.memory_space<smem>>
        %c0_i32_116 = arith.constant 0 : i32
        %c0_i32_117 = arith.constant 0 : i32
        %c0_i32_118 = arith.constant 0 : i32
        %c0_i32_119 = arith.constant 0 : i32
        %163 = tpu.memref_slice %arg3[%159, %c0_i32_119] : memref<64x128xf32, #tpu.memory_space<any>> -> memref<1x128xf32, #tpu.memory_space<any>>
        %c0_i32_120 = arith.constant 0 : i32
        %164 = tpu.memref_slice %arg12[%c0_i32_116, %156, %c0_i32_120] : memref<2x256x128xf32, #tpu.memory_space<vmem>> -> memref<1x1x128xf32, #tpu.memory_space<vmem>>
        %165 = tpu.memref_squeeze %164 : memref<1x1x128xf32, #tpu.memory_space<vmem>> -> memref<1x128xf32, #tpu.memory_space<vmem>>
        %166 = tpu.memref_slice %arg14[%c0_i32_117, %c0_i32_118] : memref<2x2x!tpu.dma_semaphore, #tpu.memory_space<semaphore_mem>> -> memref<1x1x!tpu.dma_semaphore, #tpu.memory_space<semaphore_mem>>
        %167 = tpu.memref_squeeze %166 : memref<1x1x!tpu.dma_semaphore, #tpu.memory_space<semaphore_mem>> -> memref<!tpu.dma_semaphore, #tpu.memory_space<semaphore_mem>>
        tpu.enqueue_dma source(%163 : memref<1x128xf32, #tpu.memory_space<any>>) target(%165 : memref<1x128xf32, #tpu.memory_space<vmem>>) target_semaphore(%167 : memref<!tpu.dma_semaphore, #tpu.memory_space<semaphore_mem>>)
        %c0_i32_121 = arith.constant 0 : i32
        %c1_i32_122 = arith.constant 1 : i32
        %c0_i32_123 = arith.constant 0 : i32
        %c0_i32_124 = arith.constant 0 : i32
        %168 = tpu.memref_slice %arg4[%162, %c0_i32_124] : memref<80x128xf32, #tpu.memory_space<any>> -> memref<1x128xf32, #tpu.memory_space<any>>
        %c0_i32_125 = arith.constant 0 : i32
        %169 = tpu.memref_slice %arg13[%c0_i32_121, %156, %c0_i32_125] : memref<2x256x128xf32, #tpu.memory_space<vmem>> -> memref<1x1x128xf32, #tpu.memory_space<vmem>>
        %170 = tpu.memref_squeeze %169 : memref<1x1x128xf32, #tpu.memory_space<vmem>> -> memref<1x128xf32, #tpu.memory_space<vmem>>
        %171 = tpu.memref_slice %arg14[%c1_i32_122, %c0_i32_123] : memref<2x2x!tpu.dma_semaphore, #tpu.memory_space<semaphore_mem>> -> memref<1x1x!tpu.dma_semaphore, #tpu.memory_space<semaphore_mem>>
        %172 = tpu.memref_squeeze %171 : memref<1x1x!tpu.dma_semaphore, #tpu.memory_space<semaphore_mem>> -> memref<!tpu.dma_semaphore, #tpu.memory_space<semaphore_mem>>
        tpu.enqueue_dma source(%168 : memref<1x128xf32, #tpu.memory_space<any>>) target(%170 : memref<1x128xf32, #tpu.memory_space<vmem>>) target_semaphore(%172 : memref<!tpu.dma_semaphore, #tpu.memory_space<semaphore_mem>>)
        %c7_i32 = arith.constant 7 : i32
        %173 = arith.addi %53, %c7_i32 : i32
        %c0_i32_126 = arith.constant 0 : i32
        %174 = arith.addi %c0_i32_126, %173 : i32
        %175 = arith.index_cast %174 : i32 to index
        %176 = memref.load %arg1[%175] : memref<512xi32, #tpu.memory_space<smem>>
        %c0_i32_127 = arith.constant 0 : i32
        %177 = arith.addi %c0_i32_127, %173 : i32
        %178 = arith.index_cast %177 : i32 to index
        %179 = memref.load %arg2[%178] : memref<512xi32, #tpu.memory_space<smem>>
        %c0_i32_128 = arith.constant 0 : i32
        %c0_i32_129 = arith.constant 0 : i32
        %c0_i32_130 = arith.constant 0 : i32
        %c0_i32_131 = arith.constant 0 : i32
        %180 = tpu.memref_slice %arg3[%176, %c0_i32_131] : memref<64x128xf32, #tpu.memory_space<any>> -> memref<1x128xf32, #tpu.memory_space<any>>
        %c0_i32_132 = arith.constant 0 : i32
        %181 = tpu.memref_slice %arg12[%c0_i32_128, %173, %c0_i32_132] : memref<2x256x128xf32, #tpu.memory_space<vmem>> -> memref<1x1x128xf32, #tpu.memory_space<vmem>>
        %182 = tpu.memref_squeeze %181 : memref<1x1x128xf32, #tpu.memory_space<vmem>> -> memref<1x128xf32, #tpu.memory_space<vmem>>
        %183 = tpu.memref_slice %arg14[%c0_i32_129, %c0_i32_130] : memref<2x2x!tpu.dma_semaphore, #tpu.memory_space<semaphore_mem>> -> memref<1x1x!tpu.dma_semaphore, #tpu.memory_space<semaphore_mem>>
        %184 = tpu.memref_squeeze %183 : memref<1x1x!tpu.dma_semaphore, #tpu.memory_space<semaphore_mem>> -> memref<!tpu.dma_semaphore, #tpu.memory_space<semaphore_mem>>
        tpu.enqueue_dma source(%180 : memref<1x128xf32, #tpu.memory_space<any>>) target(%182 : memref<1x128xf32, #tpu.memory_space<vmem>>) target_semaphore(%184 : memref<!tpu.dma_semaphore, #tpu.memory_space<semaphore_mem>>)
        %c0_i32_133 = arith.constant 0 : i32
        %c1_i32_134 = arith.constant 1 : i32
        %c0_i32_135 = arith.constant 0 : i32
        %c0_i32_136 = arith.constant 0 : i32
        %185 = tpu.memref_slice %arg4[%179, %c0_i32_136] : memref<80x128xf32, #tpu.memory_space<any>> -> memref<1x128xf32, #tpu.memory_space<any>>
        %c0_i32_137 = arith.constant 0 : i32
        %186 = tpu.memref_slice %arg13[%c0_i32_133, %173, %c0_i32_137] : memref<2x256x128xf32, #tpu.memory_space<vmem>> -> memref<1x1x128xf32, #tpu.memory_space<vmem>>
        %187 = tpu.memref_squeeze %186 : memref<1x1x128xf32, #tpu.memory_space<vmem>> -> memref<1x128xf32, #tpu.memory_space<vmem>>
        %188 = tpu.memref_slice %arg14[%c1_i32_134, %c0_i32_135] : memref<2x2x!tpu.dma_semaphore, #tpu.memory_space<semaphore_mem>> -> memref<1x1x!tpu.dma_semaphore, #tpu.memory_space<semaphore_mem>>
        %189 = tpu.memref_squeeze %188 : memref<1x1x!tpu.dma_semaphore, #tpu.memory_space<semaphore_mem>> -> memref<!tpu.dma_semaphore, #tpu.memory_space<semaphore_mem>>
        tpu.enqueue_dma source(%185 : memref<1x128xf32, #tpu.memory_space<any>>) target(%187 : memref<1x128xf32, #tpu.memory_space<vmem>>) target_semaphore(%189 : memref<!tpu.dma_semaphore, #tpu.memory_space<semaphore_mem>>)
      }
      %c32_i32_38 = arith.constant 32 : i32
    } else {
    }
    %c2_i32 = arith.constant 2 : i32
    %3 = arith.remsi %arg0, %c2_i32 : i32
    %c0_i32_1 = arith.constant 0 : i32
    %c0_i32_2 = arith.constant 0 : i32
    %c0_i32_3 = arith.constant 0 : i32
    %4 = tpu.memref_slice %arg12[%3, %c0_i32_2, %c0_i32_3] : memref<2x256x128xf32, #tpu.memory_space<vmem>> -> memref<1x256x128xf32, #tpu.memory_space<vmem>>
    %5 = tpu.memref_squeeze %4 : memref<1x256x128xf32, #tpu.memory_space<vmem>> -> memref<256x128xf32, #tpu.memory_space<vmem>>
    %c0_i32_4 = arith.constant 0 : i32
    %c0_i32_5 = arith.constant 0 : i32
    %6 = tpu.memref_slice %arg12[%3, %c0_i32_4, %c0_i32_5] : memref<2x256x128xf32, #tpu.memory_space<vmem>> -> memref<1x256x128xf32, #tpu.memory_space<vmem>>
    %7 = tpu.memref_squeeze %6 : memref<1x256x128xf32, #tpu.memory_space<vmem>> -> memref<256x128xf32, #tpu.memory_space<vmem>>
    %8 = tpu.memref_slice %arg14[%c0_i32_1, %3] : memref<2x2x!tpu.dma_semaphore, #tpu.memory_space<semaphore_mem>> -> memref<1x1x!tpu.dma_semaphore, #tpu.memory_space<semaphore_mem>>
    %9 = tpu.memref_squeeze %8 : memref<1x1x!tpu.dma_semaphore, #tpu.memory_space<semaphore_mem>> -> memref<!tpu.dma_semaphore, #tpu.memory_space<semaphore_mem>>
    tpu.wait_dma2 semaphore(%9 : memref<!tpu.dma_semaphore, #tpu.memory_space<semaphore_mem>>) src(%5 : memref<256x128xf32, #tpu.memory_space<vmem>>) dst(%7 : memref<256x128xf32, #tpu.memory_space<vmem>>)
    %c1_i32 = arith.constant 1 : i32
    %c0_i32_6 = arith.constant 0 : i32
    %c0_i32_7 = arith.constant 0 : i32
    %10 = tpu.memref_slice %arg13[%3, %c0_i32_6, %c0_i32_7] : memref<2x256x128xf32, #tpu.memory_space<vmem>> -> memref<1x256x128xf32, #tpu.memory_space<vmem>>
    %11 = tpu.memref_squeeze %10 : memref<1x256x128xf32, #tpu.memory_space<vmem>> -> memref<256x128xf32, #tpu.memory_space<vmem>>
    %c0_i32_8 = arith.constant 0 : i32
    %c0_i32_9 = arith.constant 0 : i32
    %12 = tpu.memref_slice %arg13[%3, %c0_i32_8, %c0_i32_9] : memref<2x256x128xf32, #tpu.memory_space<vmem>> -> memref<1x256x128xf32, #tpu.memory_space<vmem>>
    %13 = tpu.memref_squeeze %12 : memref<1x256x128xf32, #tpu.memory_space<vmem>> -> memref<256x128xf32, #tpu.memory_space<vmem>>
    %14 = tpu.memref_slice %arg14[%c1_i32, %3] : memref<2x2x!tpu.dma_semaphore, #tpu.memory_space<semaphore_mem>> -> memref<1x1x!tpu.dma_semaphore, #tpu.memory_space<semaphore_mem>>
    %15 = tpu.memref_squeeze %14 : memref<1x1x!tpu.dma_semaphore, #tpu.memory_space<semaphore_mem>> -> memref<!tpu.dma_semaphore, #tpu.memory_space<semaphore_mem>>
    tpu.wait_dma2 semaphore(%15 : memref<!tpu.dma_semaphore, #tpu.memory_space<semaphore_mem>>) src(%11 : memref<256x128xf32, #tpu.memory_space<vmem>>) dst(%13 : memref<256x128xf32, #tpu.memory_space<vmem>>)
    %c1_i32_10 = arith.constant 1 : i32
    %16 = arith.addi %arg0, %c1_i32_10 : i32
    %c2_i32_11 = arith.constant 2 : i32
    %17 = arith.cmpi slt, %16, %c2_i32_11 : i32
    %18 = arith.extui %17 : i1 to i32
    %c0_i32_12 = arith.constant 0 : i32
    %19 = arith.cmpi ne, %18, %c0_i32_12 : i32
    scf.if %19 {
      %c1_i32_36 = arith.constant 1 : i32
      %52 = arith.addi %arg0, %c1_i32_36 : i32
      %c1_i32_37 = arith.constant 1 : i32
      %53 = arith.subi %c1_i32_37, %3 : i32
      %c256_i32 = arith.constant 256 : i32
      %54 = arith.muli %52, %c256_i32 : i32
      %c0_i32_38 = arith.constant 0 : i32
      %c32_i32 = arith.constant 32 : i32
      %55 = arith.addi %c0_i32_38, %c32_i32 : i32
      %c1_i32_39 = arith.constant 1 : i32
      scf.for %arg15 = %c0_i32_38 to %55 step %c1_i32_39  : i32 {
        %c8_i32 = arith.constant 8 : i32
        %56 = arith.muli %arg15, %c8_i32 : i32
        %c0_i32_41 = arith.constant 0 : i32
        %57 = arith.addi %56, %c0_i32_41 : i32
        %58 = arith.addi %54, %57 : i32
        %59 = arith.index_cast %58 : i32 to index
        %60 = memref.load %arg1[%59] : memref<512xi32, #tpu.memory_space<smem>>
        %61 = arith.addi %54, %57 : i32
        %62 = arith.index_cast %61 : i32 to index
        %63 = memref.load %arg2[%62] : memref<512xi32, #tpu.memory_space<smem>>
        %c0_i32_42 = arith.constant 0 : i32
        %c0_i32_43 = arith.constant 0 : i32
        %64 = tpu.memref_slice %arg3[%60, %c0_i32_43] : memref<64x128xf32, #tpu.memory_space<any>> -> memref<1x128xf32, #tpu.memory_space<any>>
        %c0_i32_44 = arith.constant 0 : i32
        %65 = tpu.memref_slice %arg12[%53, %57, %c0_i32_44] : memref<2x256x128xf32, #tpu.memory_space<vmem>> -> memref<1x1x128xf32, #tpu.memory_space<vmem>>
        %66 = tpu.memref_squeeze %65 : memref<1x1x128xf32, #tpu.memory_space<vmem>> -> memref<1x128xf32, #tpu.memory_space<vmem>>
        %67 = tpu.memref_slice %arg14[%c0_i32_42, %53] : memref<2x2x!tpu.dma_semaphore, #tpu.memory_space<semaphore_mem>> -> memref<1x1x!tpu.dma_semaphore, #tpu.memory_space<semaphore_mem>>
        %68 = tpu.memref_squeeze %67 : memref<1x1x!tpu.dma_semaphore, #tpu.memory_space<semaphore_mem>> -> memref<!tpu.dma_semaphore, #tpu.memory_space<semaphore_mem>>
        tpu.enqueue_dma source(%64 : memref<1x128xf32, #tpu.memory_space<any>>) target(%66 : memref<1x128xf32, #tpu.memory_space<vmem>>) target_semaphore(%68 : memref<!tpu.dma_semaphore, #tpu.memory_space<semaphore_mem>>)
        %c1_i32_45 = arith.constant 1 : i32
        %c0_i32_46 = arith.constant 0 : i32
        %69 = tpu.memref_slice %arg4[%63, %c0_i32_46] : memref<80x128xf32, #tpu.memory_space<any>> -> memref<1x128xf32, #tpu.memory_space<any>>
        %c0_i32_47 = arith.constant 0 : i32
        %70 = tpu.memref_slice %arg13[%53, %57, %c0_i32_47] : memref<2x256x128xf32, #tpu.memory_space<vmem>> -> memref<1x1x128xf32, #tpu.memory_space<vmem>>
        %71 = tpu.memref_squeeze %70 : memref<1x1x128xf32, #tpu.memory_space<vmem>> -> memref<1x128xf32, #tpu.memory_space<vmem>>
        %72 = tpu.memref_slice %arg14[%c1_i32_45, %53] : memref<2x2x!tpu.dma_semaphore, #tpu.memory_space<semaphore_mem>> -> memref<1x1x!tpu.dma_semaphore, #tpu.memory_space<semaphore_mem>>
        %73 = tpu.memref_squeeze %72 : memref<1x1x!tpu.dma_semaphore, #tpu.memory_space<semaphore_mem>> -> memref<!tpu.dma_semaphore, #tpu.memory_space<semaphore_mem>>
        tpu.enqueue_dma source(%69 : memref<1x128xf32, #tpu.memory_space<any>>) target(%71 : memref<1x128xf32, #tpu.memory_space<vmem>>) target_semaphore(%73 : memref<!tpu.dma_semaphore, #tpu.memory_space<semaphore_mem>>)
        %c1_i32_48 = arith.constant 1 : i32
        %74 = arith.addi %56, %c1_i32_48 : i32
        %75 = arith.addi %54, %74 : i32
        %76 = arith.index_cast %75 : i32 to index
        %77 = memref.load %arg1[%76] : memref<512xi32, #tpu.memory_space<smem>>
        %78 = arith.addi %54, %74 : i32
        %79 = arith.index_cast %78 : i32 to index
        %80 = memref.load %arg2[%79] : memref<512xi32, #tpu.memory_space<smem>>
        %c0_i32_49 = arith.constant 0 : i32
        %c0_i32_50 = arith.constant 0 : i32
        %81 = tpu.memref_slice %arg3[%77, %c0_i32_50] : memref<64x128xf32, #tpu.memory_space<any>> -> memref<1x128xf32, #tpu.memory_space<any>>
        %c0_i32_51 = arith.constant 0 : i32
        %82 = tpu.memref_slice %arg12[%53, %74, %c0_i32_51] : memref<2x256x128xf32, #tpu.memory_space<vmem>> -> memref<1x1x128xf32, #tpu.memory_space<vmem>>
        %83 = tpu.memref_squeeze %82 : memref<1x1x128xf32, #tpu.memory_space<vmem>> -> memref<1x128xf32, #tpu.memory_space<vmem>>
        %84 = tpu.memref_slice %arg14[%c0_i32_49, %53] : memref<2x2x!tpu.dma_semaphore, #tpu.memory_space<semaphore_mem>> -> memref<1x1x!tpu.dma_semaphore, #tpu.memory_space<semaphore_mem>>
        %85 = tpu.memref_squeeze %84 : memref<1x1x!tpu.dma_semaphore, #tpu.memory_space<semaphore_mem>> -> memref<!tpu.dma_semaphore, #tpu.memory_space<semaphore_mem>>
        tpu.enqueue_dma source(%81 : memref<1x128xf32, #tpu.memory_space<any>>) target(%83 : memref<1x128xf32, #tpu.memory_space<vmem>>) target_semaphore(%85 : memref<!tpu.dma_semaphore, #tpu.memory_space<semaphore_mem>>)
        %c1_i32_52 = arith.constant 1 : i32
        %c0_i32_53 = arith.constant 0 : i32
        %86 = tpu.memref_slice %arg4[%80, %c0_i32_53] : memref<80x128xf32, #tpu.memory_space<any>> -> memref<1x128xf32, #tpu.memory_space<any>>
        %c0_i32_54 = arith.constant 0 : i32
        %87 = tpu.memref_slice %arg13[%53, %74, %c0_i32_54] : memref<2x256x128xf32, #tpu.memory_space<vmem>> -> memref<1x1x128xf32, #tpu.memory_space<vmem>>
        %88 = tpu.memref_squeeze %87 : memref<1x1x128xf32, #tpu.memory_space<vmem>> -> memref<1x128xf32, #tpu.memory_space<vmem>>
        %89 = tpu.memref_slice %arg14[%c1_i32_52, %53] : memref<2x2x!tpu.dma_semaphore, #tpu.memory_space<semaphore_mem>> -> memref<1x1x!tpu.dma_semaphore, #tpu.memory_space<semaphore_mem>>
        %90 = tpu.memref_squeeze %89 : memref<1x1x!tpu.dma_semaphore, #tpu.memory_space<semaphore_mem>> -> memref<!tpu.dma_semaphore, #tpu.memory_space<semaphore_mem>>
        tpu.enqueue_dma source(%86 : memref<1x128xf32, #tpu.memory_space<any>>) target(%88 : memref<1x128xf32, #tpu.memory_space<vmem>>) target_semaphore(%90 : memref<!tpu.dma_semaphore, #tpu.memory_space<semaphore_mem>>)
        %c2_i32_55 = arith.constant 2 : i32
        %91 = arith.addi %56, %c2_i32_55 : i32
        %92 = arith.addi %54, %91 : i32
        %93 = arith.index_cast %92 : i32 to index
        %94 = memref.load %arg1[%93] : memref<512xi32, #tpu.memory_space<smem>>
        %95 = arith.addi %54, %91 : i32
        %96 = arith.index_cast %95 : i32 to index
        %97 = memref.load %arg2[%96] : memref<512xi32, #tpu.memory_space<smem>>
        %c0_i32_56 = arith.constant 0 : i32
        %c0_i32_57 = arith.constant 0 : i32
        %98 = tpu.memref_slice %arg3[%94, %c0_i32_57] : memref<64x128xf32, #tpu.memory_space<any>> -> memref<1x128xf32, #tpu.memory_space<any>>
        %c0_i32_58 = arith.constant 0 : i32
        %99 = tpu.memref_slice %arg12[%53, %91, %c0_i32_58] : memref<2x256x128xf32, #tpu.memory_space<vmem>> -> memref<1x1x128xf32, #tpu.memory_space<vmem>>
        %100 = tpu.memref_squeeze %99 : memref<1x1x128xf32, #tpu.memory_space<vmem>> -> memref<1x128xf32, #tpu.memory_space<vmem>>
        %101 = tpu.memref_slice %arg14[%c0_i32_56, %53] : memref<2x2x!tpu.dma_semaphore, #tpu.memory_space<semaphore_mem>> -> memref<1x1x!tpu.dma_semaphore, #tpu.memory_space<semaphore_mem>>
        %102 = tpu.memref_squeeze %101 : memref<1x1x!tpu.dma_semaphore, #tpu.memory_space<semaphore_mem>> -> memref<!tpu.dma_semaphore, #tpu.memory_space<semaphore_mem>>
        tpu.enqueue_dma source(%98 : memref<1x128xf32, #tpu.memory_space<any>>) target(%100 : memref<1x128xf32, #tpu.memory_space<vmem>>) target_semaphore(%102 : memref<!tpu.dma_semaphore, #tpu.memory_space<semaphore_mem>>)
        %c1_i32_59 = arith.constant 1 : i32
        %c0_i32_60 = arith.constant 0 : i32
        %103 = tpu.memref_slice %arg4[%97, %c0_i32_60] : memref<80x128xf32, #tpu.memory_space<any>> -> memref<1x128xf32, #tpu.memory_space<any>>
        %c0_i32_61 = arith.constant 0 : i32
        %104 = tpu.memref_slice %arg13[%53, %91, %c0_i32_61] : memref<2x256x128xf32, #tpu.memory_space<vmem>> -> memref<1x1x128xf32, #tpu.memory_space<vmem>>
        %105 = tpu.memref_squeeze %104 : memref<1x1x128xf32, #tpu.memory_space<vmem>> -> memref<1x128xf32, #tpu.memory_space<vmem>>
        %106 = tpu.memref_slice %arg14[%c1_i32_59, %53] : memref<2x2x!tpu.dma_semaphore, #tpu.memory_space<semaphore_mem>> -> memref<1x1x!tpu.dma_semaphore, #tpu.memory_space<semaphore_mem>>
        %107 = tpu.memref_squeeze %106 : memref<1x1x!tpu.dma_semaphore, #tpu.memory_space<semaphore_mem>> -> memref<!tpu.dma_semaphore, #tpu.memory_space<semaphore_mem>>
        tpu.enqueue_dma source(%103 : memref<1x128xf32, #tpu.memory_space<any>>) target(%105 : memref<1x128xf32, #tpu.memory_space<vmem>>) target_semaphore(%107 : memref<!tpu.dma_semaphore, #tpu.memory_space<semaphore_mem>>)
        %c3_i32 = arith.constant 3 : i32
        %108 = arith.addi %56, %c3_i32 : i32
        %109 = arith.addi %54, %108 : i32
        %110 = arith.index_cast %109 : i32 to index
        %111 = memref.load %arg1[%110] : memref<512xi32, #tpu.memory_space<smem>>
        %112 = arith.addi %54, %108 : i32
        %113 = arith.index_cast %112 : i32 to index
        %114 = memref.load %arg2[%113] : memref<512xi32, #tpu.memory_space<smem>>
        %c0_i32_62 = arith.constant 0 : i32
        %c0_i32_63 = arith.constant 0 : i32
        %115 = tpu.memref_slice %arg3[%111, %c0_i32_63] : memref<64x128xf32, #tpu.memory_space<any>> -> memref<1x128xf32, #tpu.memory_space<any>>
        %c0_i32_64 = arith.constant 0 : i32
        %116 = tpu.memref_slice %arg12[%53, %108, %c0_i32_64] : memref<2x256x128xf32, #tpu.memory_space<vmem>> -> memref<1x1x128xf32, #tpu.memory_space<vmem>>
        %117 = tpu.memref_squeeze %116 : memref<1x1x128xf32, #tpu.memory_space<vmem>> -> memref<1x128xf32, #tpu.memory_space<vmem>>
        %118 = tpu.memref_slice %arg14[%c0_i32_62, %53] : memref<2x2x!tpu.dma_semaphore, #tpu.memory_space<semaphore_mem>> -> memref<1x1x!tpu.dma_semaphore, #tpu.memory_space<semaphore_mem>>
        %119 = tpu.memref_squeeze %118 : memref<1x1x!tpu.dma_semaphore, #tpu.memory_space<semaphore_mem>> -> memref<!tpu.dma_semaphore, #tpu.memory_space<semaphore_mem>>
        tpu.enqueue_dma source(%115 : memref<1x128xf32, #tpu.memory_space<any>>) target(%117 : memref<1x128xf32, #tpu.memory_space<vmem>>) target_semaphore(%119 : memref<!tpu.dma_semaphore, #tpu.memory_space<semaphore_mem>>)
        %c1_i32_65 = arith.constant 1 : i32
        %c0_i32_66 = arith.constant 0 : i32
        %120 = tpu.memref_slice %arg4[%114, %c0_i32_66] : memref<80x128xf32, #tpu.memory_space<any>> -> memref<1x128xf32, #tpu.memory_space<any>>
        %c0_i32_67 = arith.constant 0 : i32
        %121 = tpu.memref_slice %arg13[%53, %108, %c0_i32_67] : memref<2x256x128xf32, #tpu.memory_space<vmem>> -> memref<1x1x128xf32, #tpu.memory_space<vmem>>
        %122 = tpu.memref_squeeze %121 : memref<1x1x128xf32, #tpu.memory_space<vmem>> -> memref<1x128xf32, #tpu.memory_space<vmem>>
        %123 = tpu.memref_slice %arg14[%c1_i32_65, %53] : memref<2x2x!tpu.dma_semaphore, #tpu.memory_space<semaphore_mem>> -> memref<1x1x!tpu.dma_semaphore, #tpu.memory_space<semaphore_mem>>
        %124 = tpu.memref_squeeze %123 : memref<1x1x!tpu.dma_semaphore, #tpu.memory_space<semaphore_mem>> -> memref<!tpu.dma_semaphore, #tpu.memory_space<semaphore_mem>>
        tpu.enqueue_dma source(%120 : memref<1x128xf32, #tpu.memory_space<any>>) target(%122 : memref<1x128xf32, #tpu.memory_space<vmem>>) target_semaphore(%124 : memref<!tpu.dma_semaphore, #tpu.memory_space<semaphore_mem>>)
        %c4_i32 = arith.constant 4 : i32
        %125 = arith.addi %56, %c4_i32 : i32
        %126 = arith.addi %54, %125 : i32
        %127 = arith.index_cast %126 : i32 to index
        %128 = memref.load %arg1[%127] : memref<512xi32, #tpu.memory_space<smem>>
        %129 = arith.addi %54, %125 : i32
        %130 = arith.index_cast %129 : i32 to index
        %131 = memref.load %arg2[%130] : memref<512xi32, #tpu.memory_space<smem>>
        %c0_i32_68 = arith.constant 0 : i32
        %c0_i32_69 = arith.constant 0 : i32
        %132 = tpu.memref_slice %arg3[%128, %c0_i32_69] : memref<64x128xf32, #tpu.memory_space<any>> -> memref<1x128xf32, #tpu.memory_space<any>>
        %c0_i32_70 = arith.constant 0 : i32
        %133 = tpu.memref_slice %arg12[%53, %125, %c0_i32_70] : memref<2x256x128xf32, #tpu.memory_space<vmem>> -> memref<1x1x128xf32, #tpu.memory_space<vmem>>
        %134 = tpu.memref_squeeze %133 : memref<1x1x128xf32, #tpu.memory_space<vmem>> -> memref<1x128xf32, #tpu.memory_space<vmem>>
        %135 = tpu.memref_slice %arg14[%c0_i32_68, %53] : memref<2x2x!tpu.dma_semaphore, #tpu.memory_space<semaphore_mem>> -> memref<1x1x!tpu.dma_semaphore, #tpu.memory_space<semaphore_mem>>
        %136 = tpu.memref_squeeze %135 : memref<1x1x!tpu.dma_semaphore, #tpu.memory_space<semaphore_mem>> -> memref<!tpu.dma_semaphore, #tpu.memory_space<semaphore_mem>>
        tpu.enqueue_dma source(%132 : memref<1x128xf32, #tpu.memory_space<any>>) target(%134 : memref<1x128xf32, #tpu.memory_space<vmem>>) target_semaphore(%136 : memref<!tpu.dma_semaphore, #tpu.memory_space<semaphore_mem>>)
        %c1_i32_71 = arith.constant 1 : i32
        %c0_i32_72 = arith.constant 0 : i32
        %137 = tpu.memref_slice %arg4[%131, %c0_i32_72] : memref<80x128xf32, #tpu.memory_space<any>> -> memref<1x128xf32, #tpu.memory_space<any>>
        %c0_i32_73 = arith.constant 0 : i32
        %138 = tpu.memref_slice %arg13[%53, %125, %c0_i32_73] : memref<2x256x128xf32, #tpu.memory_space<vmem>> -> memref<1x1x128xf32, #tpu.memory_space<vmem>>
        %139 = tpu.memref_squeeze %138 : memref<1x1x128xf32, #tpu.memory_space<vmem>> -> memref<1x128xf32, #tpu.memory_space<vmem>>
        %140 = tpu.memref_slice %arg14[%c1_i32_71, %53] : memref<2x2x!tpu.dma_semaphore, #tpu.memory_space<semaphore_mem>> -> memref<1x1x!tpu.dma_semaphore, #tpu.memory_space<semaphore_mem>>
        %141 = tpu.memref_squeeze %140 : memref<1x1x!tpu.dma_semaphore, #tpu.memory_space<semaphore_mem>> -> memref<!tpu.dma_semaphore, #tpu.memory_space<semaphore_mem>>
        tpu.enqueue_dma source(%137 : memref<1x128xf32, #tpu.memory_space<any>>) target(%139 : memref<1x128xf32, #tpu.memory_space<vmem>>) target_semaphore(%141 : memref<!tpu.dma_semaphore, #tpu.memory_space<semaphore_mem>>)
        %c5_i32 = arith.constant 5 : i32
        %142 = arith.addi %56, %c5_i32 : i32
        %143 = arith.addi %54, %142 : i32
        %144 = arith.index_cast %143 : i32 to index
        %145 = memref.load %arg1[%144] : memref<512xi32, #tpu.memory_space<smem>>
        %146 = arith.addi %54, %142 : i32
        %147 = arith.index_cast %146 : i32 to index
        %148 = memref.load %arg2[%147] : memref<512xi32, #tpu.memory_space<smem>>
        %c0_i32_74 = arith.constant 0 : i32
        %c0_i32_75 = arith.constant 0 : i32
        %149 = tpu.memref_slice %arg3[%145, %c0_i32_75] : memref<64x128xf32, #tpu.memory_space<any>> -> memref<1x128xf32, #tpu.memory_space<any>>
        %c0_i32_76 = arith.constant 0 : i32
        %150 = tpu.memref_slice %arg12[%53, %142, %c0_i32_76] : memref<2x256x128xf32, #tpu.memory_space<vmem>> -> memref<1x1x128xf32, #tpu.memory_space<vmem>>
        %151 = tpu.memref_squeeze %150 : memref<1x1x128xf32, #tpu.memory_space<vmem>> -> memref<1x128xf32, #tpu.memory_space<vmem>>
        %152 = tpu.memref_slice %arg14[%c0_i32_74, %53] : memref<2x2x!tpu.dma_semaphore, #tpu.memory_space<semaphore_mem>> -> memref<1x1x!tpu.dma_semaphore, #tpu.memory_space<semaphore_mem>>
        %153 = tpu.memref_squeeze %152 : memref<1x1x!tpu.dma_semaphore, #tpu.memory_space<semaphore_mem>> -> memref<!tpu.dma_semaphore, #tpu.memory_space<semaphore_mem>>
        tpu.enqueue_dma source(%149 : memref<1x128xf32, #tpu.memory_space<any>>) target(%151 : memref<1x128xf32, #tpu.memory_space<vmem>>) target_semaphore(%153 : memref<!tpu.dma_semaphore, #tpu.memory_space<semaphore_mem>>)
        %c1_i32_77 = arith.constant 1 : i32
        %c0_i32_78 = arith.constant 0 : i32
        %154 = tpu.memref_slice %arg4[%148, %c0_i32_78] : memref<80x128xf32, #tpu.memory_space<any>> -> memref<1x128xf32, #tpu.memory_space<any>>
        %c0_i32_79 = arith.constant 0 : i32
        %155 = tpu.memref_slice %arg13[%53, %142, %c0_i32_79] : memref<2x256x128xf32, #tpu.memory_space<vmem>> -> memref<1x1x128xf32, #tpu.memory_space<vmem>>
        %156 = tpu.memref_squeeze %155 : memref<1x1x128xf32, #tpu.memory_space<vmem>> -> memref<1x128xf32, #tpu.memory_space<vmem>>
        %157 = tpu.memref_slice %arg14[%c1_i32_77, %53] : memref<2x2x!tpu.dma_semaphore, #tpu.memory_space<semaphore_mem>> -> memref<1x1x!tpu.dma_semaphore, #tpu.memory_space<semaphore_mem>>
        %158 = tpu.memref_squeeze %157 : memref<1x1x!tpu.dma_semaphore, #tpu.memory_space<semaphore_mem>> -> memref<!tpu.dma_semaphore, #tpu.memory_space<semaphore_mem>>
        tpu.enqueue_dma source(%154 : memref<1x128xf32, #tpu.memory_space<any>>) target(%156 : memref<1x128xf32, #tpu.memory_space<vmem>>) target_semaphore(%158 : memref<!tpu.dma_semaphore, #tpu.memory_space<semaphore_mem>>)
        %c6_i32 = arith.constant 6 : i32
        %159 = arith.addi %56, %c6_i32 : i32
        %160 = arith.addi %54, %159 : i32
        %161 = arith.index_cast %160 : i32 to index
        %162 = memref.load %arg1[%161] : memref<512xi32, #tpu.memory_space<smem>>
        %163 = arith.addi %54, %159 : i32
        %164 = arith.index_cast %163 : i32 to index
        %165 = memref.load %arg2[%164] : memref<512xi32, #tpu.memory_space<smem>>
        %c0_i32_80 = arith.constant 0 : i32
        %c0_i32_81 = arith.constant 0 : i32
        %166 = tpu.memref_slice %arg3[%162, %c0_i32_81] : memref<64x128xf32, #tpu.memory_space<any>> -> memref<1x128xf32, #tpu.memory_space<any>>
        %c0_i32_82 = arith.constant 0 : i32
        %167 = tpu.memref_slice %arg12[%53, %159, %c0_i32_82] : memref<2x256x128xf32, #tpu.memory_space<vmem>> -> memref<1x1x128xf32, #tpu.memory_space<vmem>>
        %168 = tpu.memref_squeeze %167 : memref<1x1x128xf32, #tpu.memory_space<vmem>> -> memref<1x128xf32, #tpu.memory_space<vmem>>
        %169 = tpu.memref_slice %arg14[%c0_i32_80, %53] : memref<2x2x!tpu.dma_semaphore, #tpu.memory_space<semaphore_mem>> -> memref<1x1x!tpu.dma_semaphore, #tpu.memory_space<semaphore_mem>>
        %170 = tpu.memref_squeeze %169 : memref<1x1x!tpu.dma_semaphore, #tpu.memory_space<semaphore_mem>> -> memref<!tpu.dma_semaphore, #tpu.memory_space<semaphore_mem>>
        tpu.enqueue_dma source(%166 : memref<1x128xf32, #tpu.memory_space<any>>) target(%168 : memref<1x128xf32, #tpu.memory_space<vmem>>) target_semaphore(%170 : memref<!tpu.dma_semaphore, #tpu.memory_space<semaphore_mem>>)
        %c1_i32_83 = arith.constant 1 : i32
        %c0_i32_84 = arith.constant 0 : i32
        %171 = tpu.memref_slice %arg4[%165, %c0_i32_84] : memref<80x128xf32, #tpu.memory_space<any>> -> memref<1x128xf32, #tpu.memory_space<any>>
        %c0_i32_85 = arith.constant 0 : i32
        %172 = tpu.memref_slice %arg13[%53, %159, %c0_i32_85] : memref<2x256x128xf32, #tpu.memory_space<vmem>> -> memref<1x1x128xf32, #tpu.memory_space<vmem>>
        %173 = tpu.memref_squeeze %172 : memref<1x1x128xf32, #tpu.memory_space<vmem>> -> memref<1x128xf32, #tpu.memory_space<vmem>>
        %174 = tpu.memref_slice %arg14[%c1_i32_83, %53] : memref<2x2x!tpu.dma_semaphore, #tpu.memory_space<semaphore_mem>> -> memref<1x1x!tpu.dma_semaphore, #tpu.memory_space<semaphore_mem>>
        %175 = tpu.memref_squeeze %174 : memref<1x1x!tpu.dma_semaphore, #tpu.memory_space<semaphore_mem>> -> memref<!tpu.dma_semaphore, #tpu.memory_space<semaphore_mem>>
        tpu.enqueue_dma source(%171 : memref<1x128xf32, #tpu.memory_space<any>>) target(%173 : memref<1x128xf32, #tpu.memory_space<vmem>>) target_semaphore(%175 : memref<!tpu.dma_semaphore, #tpu.memory_space<semaphore_mem>>)
        %c7_i32 = arith.constant 7 : i32
        %176 = arith.addi %56, %c7_i32 : i32
        %177 = arith.addi %54, %176 : i32
        %178 = arith.index_cast %177 : i32 to index
        %179 = memref.load %arg1[%178] : memref<512xi32, #tpu.memory_space<smem>>
        %180 = arith.addi %54, %176 : i32
        %181 = arith.index_cast %180 : i32 to index
        %182 = memref.load %arg2[%181] : memref<512xi32, #tpu.memory_space<smem>>
        %c0_i32_86 = arith.constant 0 : i32
        %c0_i32_87 = arith.constant 0 : i32
        %183 = tpu.memref_slice %arg3[%179, %c0_i32_87] : memref<64x128xf32, #tpu.memory_space<any>> -> memref<1x128xf32, #tpu.memory_space<any>>
        %c0_i32_88 = arith.constant 0 : i32
        %184 = tpu.memref_slice %arg12[%53, %176, %c0_i32_88] : memref<2x256x128xf32, #tpu.memory_space<vmem>> -> memref<1x1x128xf32, #tpu.memory_space<vmem>>
        %185 = tpu.memref_squeeze %184 : memref<1x1x128xf32, #tpu.memory_space<vmem>> -> memref<1x128xf32, #tpu.memory_space<vmem>>
        %186 = tpu.memref_slice %arg14[%c0_i32_86, %53] : memref<2x2x!tpu.dma_semaphore, #tpu.memory_space<semaphore_mem>> -> memref<1x1x!tpu.dma_semaphore, #tpu.memory_space<semaphore_mem>>
        %187 = tpu.memref_squeeze %186 : memref<1x1x!tpu.dma_semaphore, #tpu.memory_space<semaphore_mem>> -> memref<!tpu.dma_semaphore, #tpu.memory_space<semaphore_mem>>
        tpu.enqueue_dma source(%183 : memref<1x128xf32, #tpu.memory_space<any>>) target(%185 : memref<1x128xf32, #tpu.memory_space<vmem>>) target_semaphore(%187 : memref<!tpu.dma_semaphore, #tpu.memory_space<semaphore_mem>>)
        %c1_i32_89 = arith.constant 1 : i32
        %c0_i32_90 = arith.constant 0 : i32
        %188 = tpu.memref_slice %arg4[%182, %c0_i32_90] : memref<80x128xf32, #tpu.memory_space<any>> -> memref<1x128xf32, #tpu.memory_space<any>>
        %c0_i32_91 = arith.constant 0 : i32
        %189 = tpu.memref_slice %arg13[%53, %176, %c0_i32_91] : memref<2x256x128xf32, #tpu.memory_space<vmem>> -> memref<1x1x128xf32, #tpu.memory_space<vmem>>
        %190 = tpu.memref_squeeze %189 : memref<1x1x128xf32, #tpu.memory_space<vmem>> -> memref<1x128xf32, #tpu.memory_space<vmem>>
        %191 = tpu.memref_slice %arg14[%c1_i32_89, %53] : memref<2x2x!tpu.dma_semaphore, #tpu.memory_space<semaphore_mem>> -> memref<1x1x!tpu.dma_semaphore, #tpu.memory_space<semaphore_mem>>
        %192 = tpu.memref_squeeze %191 : memref<1x1x!tpu.dma_semaphore, #tpu.memory_space<semaphore_mem>> -> memref<!tpu.dma_semaphore, #tpu.memory_space<semaphore_mem>>
        tpu.enqueue_dma source(%188 : memref<1x128xf32, #tpu.memory_space<any>>) target(%190 : memref<1x128xf32, #tpu.memory_space<vmem>>) target_semaphore(%192 : memref<!tpu.dma_semaphore, #tpu.memory_space<semaphore_mem>>)
      }
      %c32_i32_40 = arith.constant 32 : i32
    } else {
    }
    %20 = arith.index_cast %3 : i32 to index
    %c0 = arith.constant 0 : index
    %c0_13 = arith.constant 0 : index
    %21 = vector.load %arg12[%20, %c0, %c0_13] : memref<2x256x128xf32, #tpu.memory_space<vmem>>, vector<1x256x128xf32>
    %22 = vector.shape_cast %21 : vector<1x256x128xf32> to vector<256x128xf32>
    %23 = arith.index_cast %3 : i32 to index
    %c0_14 = arith.constant 0 : index
    %c0_15 = arith.constant 0 : index
    %24 = vector.load %arg13[%23, %c0_14, %c0_15] : memref<2x256x128xf32, #tpu.memory_space<vmem>>, vector<1x256x128xf32>
    %25 = vector.shape_cast %24 : vector<1x256x128xf32> to vector<256x128xf32>
    %c0_16 = arith.constant 0 : index
    %c0_17 = arith.constant 0 : index
    %26 = vector.load %arg5[%c0_16, %c0_17] : memref<256x128xf32, #tpu.memory_space<vmem>>, vector<128x128xf32>
    %cst = arith.constant dense<0.000000e+00> : vector<256x128xf32>
    %27 = tpu.matmul %22, %26, %cst {dimension_numbers = #tpu.dot_dimension_numbers<[1], [0], [0], [1], [0, 0, 1, 1], [], []>} : vector<256x128xf32>, vector<128x128xf32>, vector<256x128xf32> -> vector<256x128xf32>
    %c128 = arith.constant 128 : index
    %c0_18 = arith.constant 0 : index
    %28 = vector.load %arg5[%c128, %c0_18] : memref<256x128xf32, #tpu.memory_space<vmem>>, vector<128x128xf32>
    %cst_19 = arith.constant dense<0.000000e+00> : vector<256x128xf32>
    %29 = tpu.matmul %25, %28, %cst_19 {dimension_numbers = #tpu.dot_dimension_numbers<[1], [0], [0], [1], [0, 0, 1, 1], [], []>} : vector<256x128xf32>, vector<128x128xf32>, vector<256x128xf32> -> vector<256x128xf32>
    %30 = arith.addf %27, %29 : vector<256x128xf32>
    %c0_20 = arith.constant 0 : index
    %c0_21 = arith.constant 0 : index
    %31 = vector.load %arg6[%c0_20, %c0_21] : memref<1x128xf32, #tpu.memory_space<vmem>>, vector<1x128xf32>
    %32 = vector.broadcast %31 : vector<1x128xf32> to vector<256x128xf32>
    %33 = arith.addf %30, %32 : vector<256x128xf32>
    %cst_22 = arith.constant 0.000000e+00 : f32
    %34 = vector.broadcast %cst_22 : f32 to vector<256x128xf32>
    %35 = arith.maximumf %33, %34 : vector<256x128xf32>
    %c0_23 = arith.constant 0 : index
    %c0_24 = arith.constant 0 : index
    %36 = vector.load %arg7[%c0_23, %c0_24] : memref<128x128xf32, #tpu.memory_space<vmem>>, vector<128x128xf32>
    %cst_25 = arith.constant dense<0.000000e+00> : vector<256x128xf32>
    %37 = tpu.matmul %35, %36, %cst_25 {dimension_numbers = #tpu.dot_dimension_numbers<[1], [0], [0], [1], [0, 0, 1, 1], [], []>} : vector<256x128xf32>, vector<128x128xf32>, vector<256x128xf32> -> vector<256x128xf32>
    %c0_26 = arith.constant 0 : index
    %c0_27 = arith.constant 0 : index
    %38 = vector.load %arg8[%c0_26, %c0_27] : memref<1x128xf32, #tpu.memory_space<vmem>>, vector<1x128xf32>
    %39 = vector.broadcast %38 : vector<1x128xf32> to vector<256x128xf32>
    %40 = arith.addf %37, %39 : vector<256x128xf32>
    %cst_28 = arith.constant 0.000000e+00 : f32
    %41 = vector.broadcast %cst_28 : f32 to vector<256x128xf32>
    %42 = arith.maximumf %40, %41 : vector<256x128xf32>
    %c0_29 = arith.constant 0 : index
    %c0_30 = arith.constant 0 : index
    %43 = vector.load %arg9[%c0_29, %c0_30] : memref<1x128xf32, #tpu.memory_space<vmem>>, vector<1x128xf32>
    %44 = vector.broadcast %43 : vector<1x128xf32> to vector<256x128xf32>
    %45 = arith.mulf %42, %44 : vector<256x128xf32>
    %cst_31 = arith.constant dense<0.000000e+00> : vector<256xf32>
    %46 = vector.multi_reduction <add>, %45, %cst_31 [1] : vector<256x128xf32> to vector<256xf32>
    %47 = vector.shape_cast %46 : vector<256xf32> to vector<256x1xf32>
    %c0_32 = arith.constant 0 : index
    %c0_33 = arith.constant 0 : index
    %48 = memref.load %arg10[%c0_32, %c0_33] : memref<1x1xf32, #tpu.memory_space<smem>>
    %49 = vector.broadcast %48 : f32 to vector<256x1xf32>
    %50 = arith.addf %47, %49 : vector<256x1xf32>
    %c0_34 = arith.constant 0 : index
    %c0_35 = arith.constant 0 : index
    %51 = vector.load %arg11[%c0_34, %c0_35] : memref<256x1xf32, #tpu.memory_space<vmem>>, vector<256x1xf32>
    tpu.vector_store %arg11[%c0_34, %c0_35], %50 {strides = array<i32>} : memref<256x1xf32, #tpu.memory_space<vmem>>, vector<256x1xf32>,
    return
  }
  func.func @transform_2(%arg0: i32, %arg1: memref<512xi32, #tpu.memory_space<smem>>, %arg2: memref<512xi32, #tpu.memory_space<smem>>) -> (i32, i32) {
    %c0_i32 = arith.constant 0 : i32
    %c0_i32_0 = arith.constant 0 : i32
    %c0_i32_1 = arith.constant 0 : i32
    return %c0_i32, %c0_i32_0 : i32, i32
  }
  func.func @transform_3(%arg0: i32, %arg1: memref<512xi32, #tpu.memory_space<smem>>, %arg2: memref<512xi32, #tpu.memory_space<smem>>) -> (i32, i32) {
    %c0_i32 = arith.constant 0 : i32
    %c0_i32_0 = arith.constant 0 : i32
    %c0_i32_1 = arith.constant 0 : i32
    return %c0_i32, %c0_i32_0 : i32, i32
  }
  func.func @transform_4(%arg0: i32, %arg1: memref<512xi32, #tpu.memory_space<smem>>, %arg2: memref<512xi32, #tpu.memory_space<smem>>) -> (i32, i32) {
    %c0_i32 = arith.constant 0 : i32
    %c0_i32_0 = arith.constant 0 : i32
    %c0_i32_1 = arith.constant 0 : i32
    return %c0_i32, %c0_i32_0 : i32, i32
  }
  func.func @transform_5(%arg0: i32, %arg1: memref<512xi32, #tpu.memory_space<smem>>, %arg2: memref<512xi32, #tpu.memory_space<smem>>) -> (i32, i32) {
    %c0_i32 = arith.constant 0 : i32
    %c0_i32_0 = arith.constant 0 : i32
    %c0_i32_1 = arith.constant 0 : i32
    return %c0_i32, %c0_i32_0 : i32, i32
  }
  func.func @transform_6(%arg0: i32, %arg1: memref<512xi32, #tpu.memory_space<smem>>, %arg2: memref<512xi32, #tpu.memory_space<smem>>) -> (i32, i32) {
    %c0_i32 = arith.constant 0 : i32
    %c0_i32_0 = arith.constant 0 : i32
    %c0_i32_1 = arith.constant 0 : i32
    return %c0_i32, %c0_i32_0 : i32, i32
  }
  func.func @transform_7(%arg0: i32, %arg1: memref<512xi32, #tpu.memory_space<smem>>, %arg2: memref<512xi32, #tpu.memory_space<smem>>) -> (i32, i32) {
    %c0_i32 = arith.constant 0 : i32
    %c0_i32_0 = arith.constant 0 : i32
    %c0_i32_1 = arith.constant 0 : i32
    return %c0_i32, %c0_i32_0 : i32, i32
  }
  func.func @transform_8(%arg0: i32, %arg1: memref<512xi32, #tpu.memory_space<smem>>, %arg2: memref<512xi32, #tpu.memory_space<smem>>) -> (i32, i32) {
    %c0_i32 = arith.constant 0 : i32
    %c0_i32_0 = arith.constant 0 : i32
    return %arg0, %c0_i32 : i32, i32
  }
}

</mosaic_0001>

<llo_original>
// kernel: mlp_forward.1
$region0: #{mlp_forward.1}
  #allocation0 [shape = 'u32[]', space=smem, size = 0x4, offset = 0x4, fixed_abs, tag = 'smem constant byte address 0x4 - core index']
  #allocation1 [shape = 'u32[144,128]{1,0:T(1,128)}', space=vmem, size = 0x12000, scoped, tag = 'internal scratch']
  #allocation2 [shape = 'f32[2,256,128]{2,1,0:T(8,128)}', space=vmem, size = 0x40000, scoped, tag = 'scratch operand']
  #allocation3 [shape = 'f32[2,256,128]{2,1,0:T(8,128)}', space=vmem, size = 0x40000, scoped, tag = 'scratch operand']
  #allocation4 [shape = 's32[4]{0}', space=sflag, size = 0x10, scoped, tag = 'scratch operand']
  #allocation5 [shape = 's32[1]{0}', space=sflag, size = 0x4, scoped, tag = 'scoped memory for mlp_forward.1']
  #allocation6 [shape = 'u8[2048]{0}', space=smem, size = 0x800, scoped, tag = 'prefetched SMEM operand 0']
  #allocation7 [shape = 'u8[2048]{0}', space=smem, size = 0x800, scoped, tag = 'prefetched SMEM operand 1']
  #allocation8 [shape = 'f32[1,1]{1,0:T(1,128)S(6)}', space=smem, size = 0x200, scoped, tag = 'scoped memory for mlp_forward.1']
  #allocation13 [shape = 's32[]', space=sflag, size = 0x4, offset = 0, fixed_abs, tag = 'sflag constant byte address 0x0 - dummy sync flag']
  #allocation14 [shape = 's32[]', space=sflag, size = 0x4, offset = 0, fixed_abs, tag = 'sflag constant byte address 0x0 - dummy sync flag']
  #allocation15 [shape = 'u32[]', space=smem, size = 0x4, offset = 0x44, fixed_abs, tag = 'smem constant byte address 0x44 - assertion arg 0']
  #allocation16 [shape = 'u32[]', space=smem, size = 0x4, offset = 0x48, fixed_abs, tag = 'smem constant byte address 0x48 - assertion arg 1']
  #allocation17 [shape = 's32[]', space=sflag, size = 0x4, offset = 0, fixed_abs, tag = 'sflag constant byte address 0x0 - dummy sync flag']
  #allocation18 [shape = 's32[]', space=sflag, size = 0x4, offset = 0, fixed_abs, tag = 'sflag constant byte address 0x0 - dummy sync flag']
  #allocation19 [shape = 's32[]', space=sflag, size = 0x4, offset = 0, fixed_abs, tag = 'sflag constant byte address 0x0 - dummy sync flag']
  #allocation20 [shape = 's32[]', space=sflag, size = 0x4, offset = 0, fixed_abs, tag = 'sflag constant byte address 0x0 - dummy sync flag']
  #allocation21 [shape = 's32[]', space=sflag, size = 0x4, offset = 0, fixed_abs, tag = 'sflag constant byte address 0x0 - dummy sync flag']
  #allocation22 [shape = 's32[]', space=sflag, size = 0x4, offset = 0, fixed_abs, tag = 'sflag constant byte address 0x0 - dummy sync flag']
  #allocation23 [shape = 's32[]', space=sflag, size = 0x4, offset = 0, fixed_abs, tag = 'sflag constant byte address 0x0 - dummy sync flag']
  #allocation24 [shape = 's32[]', space=sflag, size = 0x4, offset = 0, fixed_abs, tag = 'sflag constant byte address 0x0 - dummy sync flag']
  #allocation25 [shape = 's32[]', space=sflag, size = 0x4, offset = 0, fixed_abs, tag = 'sflag constant byte address 0x0 - dummy sync flag']
  #allocation26 [shape = 's32[]', space=sflag, size = 0x4, offset = 0, fixed_abs, tag = 'sflag constant byte address 0x0 - dummy sync flag']
  #allocation27 [shape = 's32[]', space=sflag, size = 0x4, offset = 0, fixed_abs, tag = 'sflag constant byte address 0x0 - dummy sync flag']
  #allocation28 [shape = 's32[]', space=sflag, size = 0x4, offset = 0, fixed_abs, tag = 'sflag constant byte address 0x0 - dummy sync flag']
  #allocation29 [shape = 's32[]', space=sflag, size = 0x4, offset = 0, fixed_abs, tag = 'sflag constant byte address 0x0 - dummy sync flag']
  #allocation30 [shape = 's32[]', space=sflag, size = 0x4, offset = 0, fixed_abs, tag = 'sflag constant byte address 0x0 - dummy sync flag']
  #allocation31 [shape = 's32[]', space=sflag, size = 0x4, offset = 0, fixed_abs, tag = 'sflag constant byte address 0x0 - dummy sync flag']
  #allocation32 [shape = 's32[]', space=sflag, size = 0x4, offset = 0, fixed_abs, tag = 'sflag constant byte address 0x0 - dummy sync flag']
  #allocation33 [shape = 's32[]', space=sflag, size = 0x4, offset = 0, fixed_abs, tag = 'sflag constant byte address 0x0 - dummy sync flag']
  #allocation34 [shape = 's32[]', space=sflag, size = 0x4, offset = 0, fixed_abs, tag = 'sflag constant byte address 0x0 - dummy sync flag']
  #allocation35 [shape = 's32[]', space=sflag, size = 0x4, offset = 0, fixed_abs, tag = 'sflag constant byte address 0x0 - dummy sync flag']
  #allocation36 [shape = 's32[]', space=sflag, size = 0x4, offset = 0, fixed_abs, tag = 'sflag constant byte address 0x0 - dummy sync flag']
  #allocation37 [shape = 's32[]', space=sflag, size = 0x4, offset = 0, fixed_abs, tag = 'sflag constant byte address 0x0 - dummy sync flag']
  #allocation38 [shape = 's32[]', space=sflag, size = 0x4, offset = 0, fixed_abs, tag = 'sflag constant byte address 0x0 - dummy sync flag']
  #allocation39 [shape = 's32[]', space=sflag, size = 0x4, offset = 0, fixed_abs, tag = 'sflag constant byte address 0x0 - dummy sync flag']
  #allocation40 [shape = 's32[]', space=sflag, size = 0x4, offset = 0, fixed_abs, tag = 'sflag constant byte address 0x0 - dummy sync flag']
  #allocation41 [shape = 's32[]', space=sflag, size = 0x4, offset = 0, fixed_abs, tag = 'sflag constant byte address 0x0 - dummy sync flag']
  #allocation42 [shape = 's32[]', space=sflag, size = 0x4, offset = 0, fixed_abs, tag = 'sflag constant byte address 0x0 - dummy sync flag']
  #allocation43 [shape = 's32[]', space=sflag, size = 0x4, offset = 0, fixed_abs, tag = 'sflag constant byte address 0x0 - dummy sync flag']
  #allocation44 [shape = 's32[]', space=sflag, size = 0x4, offset = 0, fixed_abs, tag = 'sflag constant byte address 0x0 - dummy sync flag']
  #allocation45 [shape = 's32[]', space=sflag, size = 0x4, offset = 0, fixed_abs, tag = 'sflag constant byte address 0x0 - dummy sync flag']
  #allocation46 [shape = 's32[]', space=sflag, size = 0x4, offset = 0, fixed_abs, tag = 'sflag constant byte address 0x0 - dummy sync flag']
  #allocation47 [shape = 's32[]', space=sflag, size = 0x4, offset = 0, fixed_abs, tag = 'sflag constant byte address 0x0 - dummy sync flag']
  #allocation48 [shape = 's32[]', space=sflag, size = 0x4, offset = 0, fixed_abs, tag = 'sflag constant byte address 0x0 - dummy sync flag']
  #allocation49 [shape = 's32[]', space=sflag, size = 0x4, offset = 0, fixed_abs, tag = 'sflag constant byte address 0x0 - dummy sync flag']
  #allocation50 [shape = 's32[]', space=sflag, size = 0x4, offset = 0, fixed_abs, tag = 'sflag constant byte address 0x0 - dummy sync flag']
  #allocation51 [shape = 's32[]', space=sflag, size = 0x4, offset = 0, fixed_abs, tag = 'sflag constant byte address 0x0 - dummy sync flag']
  #allocation52 [shape = 's32[]', space=sflag, size = 0x4, offset = 0, fixed_abs, tag = 'sflag constant byte address 0x0 - dummy sync flag']
  #allocation53 [shape = 's32[]', space=sflag, size = 0x4, offset = 0, fixed_abs, tag = 'sflag constant byte address 0x0 - dummy sync flag']
  #allocation54 [shape = 's32[]', space=sflag, size = 0x4, offset = 0, fixed_abs, tag = 'sflag constant byte address 0x0 - dummy sync flag']
  #allocation55 [shape = 's32[]', space=sflag, size = 0x4, offset = 0, fixed_abs, tag = 'sflag constant byte address 0x0 - dummy sync flag']
  #allocation56 [shape = 's32[]', space=sflag, size = 0x4, offset = 0, fixed_abs, tag = 'sflag constant byte address 0x0 - dummy sync flag']
  #allocation57 [shape = 's32[]', space=sflag, size = 0x4, offset = 0, fixed_abs, tag = 'sflag constant byte address 0x0 - dummy sync flag']
  #allocation58 [shape = 's32[]', space=sflag, size = 0x4, offset = 0, fixed_abs, tag = 'sflag constant byte address 0x0 - dummy sync flag']
  #allocation59 [shape = 's32[]', space=sflag, size = 0x4, offset = 0, fixed_abs, tag = 'sflag constant byte address 0x0 - dummy sync flag']
  #allocation60 [shape = 's32[]', space=sflag, size = 0x4, offset = 0, fixed_abs, tag = 'sflag constant byte address 0x0 - dummy sync flag']
  #allocation61 [shape = 's32[]', space=sflag, size = 0x4, offset = 0, fixed_abs, tag = 'sflag constant byte address 0x0 - dummy sync flag']
  #allocation62 [shape = 's32[]', space=sflag, size = 0x4, offset = 0, fixed_abs, tag = 'sflag constant byte address 0x0 - dummy sync flag']
  #allocation63 [shape = 's32[]', space=sflag, size = 0x4, offset = 0, fixed_abs, tag = 'sflag constant byte address 0x0 - dummy sync flag']
  #allocation64 [shape = 's32[]', space=sflag, size = 0x4, offset = 0, fixed_abs, tag = 'sflag constant byte address 0x0 - dummy sync flag']
  #allocation65 [shape = 's32[]', space=sflag, size = 0x4, offset = 0, fixed_abs, tag = 'sflag constant byte address 0x0 - dummy sync flag']
  #allocation66 [shape = 's32[]', space=sflag, size = 0x4, offset = 0, fixed_abs, tag = 'sflag constant byte address 0x0 - dummy sync flag']
  #allocation67 [shape = 's32[]', space=sflag, size = 0x4, offset = 0, fixed_abs, tag = 'sflag constant byte address 0x0 - dummy sync flag']
  #allocation68 [shape = 's32[]', space=sflag, size = 0x4, offset = 0, fixed_abs, tag = 'sflag constant byte address 0x0 - dummy sync flag']
  #allocation69 [shape = 's32[]', space=sflag, size = 0x4, offset = 0, fixed_abs, tag = 'sflag constant byte address 0x0 - dummy sync flag']
  #allocation70 [shape = 's32[]', space=sflag, size = 0x4, offset = 0, fixed_abs, tag = 'sflag constant byte address 0x0 - dummy sync flag']
  #allocation71 [shape = 's32[]', space=sflag, size = 0x4, offset = 0, fixed_abs, tag = 'sflag constant byte address 0x0 - dummy sync flag']
  #allocation72 [shape = 's32[]', space=sflag, size = 0x4, offset = 0, fixed_abs, tag = 'sflag constant byte address 0x0 - dummy sync flag']
  #allocation73 [shape = 's32[]', space=sflag, size = 0x4, offset = 0, fixed_abs, tag = 'sflag constant byte address 0x0 - dummy sync flag']
  #allocation74 [shape = 's32[]', space=sflag, size = 0x4, offset = 0, fixed_abs, tag = 'sflag constant byte address 0x0 - dummy sync flag']
  #allocation75 [shape = 's32[]', space=sflag, size = 0x4, offset = 0, fixed_abs, tag = 'sflag constant byte address 0x0 - dummy sync flag']
  #allocation76 [shape = 's32[]', space=sflag, size = 0x4, offset = 0, fixed_abs, tag = 'sflag constant byte address 0x0 - dummy sync flag']
  #allocation77 [shape = 's32[]', space=sflag, size = 0x4, offset = 0, fixed_abs, tag = 'sflag constant byte address 0x0 - dummy sync flag']
  #allocation78 [shape = 's32[]', space=sflag, size = 0x4, offset = 0, fixed_abs, tag = 'sflag constant byte address 0x0 - dummy sync flag']
  %s0 = inlined_call_operand.vmem [shape: s32[512], index: 0, kind: input, shape index: {}]
  %s1 = inlined_call_operand.vmem [shape: s32[512], index: 1, kind: input, shape index: {}]
  %s2 = inlined_call_operand.hbm [shape: f32[64,128], index: 2, kind: input, shape index: {}]
  %s3 = inlined_call_operand.hbm [shape: f32[80,128], index: 3, kind: input, shape index: {}]
  %s4 = inlined_call_operand.hbm [shape: f32[256,128], index: 4, kind: input, shape index: {}]
  %s5 = inlined_call_operand.vmem [shape: f32[1,128], index: 5, kind: input, shape index: {}]
  %s6 = inlined_call_operand.hbm [shape: f32[128,128], index: 6, kind: input, shape index: {}]
  %s7 = inlined_call_operand.vmem [shape: f32[1,128], index: 7, kind: input, shape index: {}]
  %s8 = inlined_call_operand.vmem [shape: f32[1,128], index: 8, kind: input, shape index: {}]
  %s9 = inlined_call_operand.<no memory space> [shape: f32[1,1], index: 9, kind: input, shape index: {}]
  %s10 = inlined_call_operand.vmem [shape: f32[512,1], index: 10, kind: output, shape index: {}]
  %s11 = sld [smem:[#allocation0]]
  $region215: #{mlp_forward.1} parent=0
    _
  %s13 = ssub.s32 1, %s11
  %s14 = scalar_select 0, %s13, %s11
  %s15 = sshll.u32 %s0, 4
  %s16 = int_to_ptr.vmem [resolvable:$true] %s15
  %18 = dma.vmem_to_smem %s16, 64, [#allocation6], [#allocation5]
  %s19 = sshll.u32 %s1, 4
  %s20 = int_to_ptr.vmem [resolvable:$true] %s19
  %22 = dma.vmem_to_smem %s20, 64, [#allocation7], [#allocation5]
  %23 = sst [smem:[#allocation8]] %s9
  %24 = dma.done [#allocation5], 128
  %25 = sfence
  $region1: #{mlp_forward.1} parent=0
    #allocation9 [shape = 'u8[131072]{0}', space=vmem, size = 0x20000, scoped, tag = 'input window, operand 4, single buffered']
    #allocation10 [shape = 's32[2]{0}', space=sflag, size = 0x8, scoped, tag = 'scoped memory for mlp_forward.1']
    #allocation11 [shape = 'u8[65536]{0}', space=vmem, size = 0x10000, scoped, tag = 'input window, operand 6, single buffered']
    #allocation12 [shape = 's32[1]{0}', space=sflag, size = 0x4, scoped, tag = 'scoped memory for mlp_forward.1']
    %26 = vsyncpa [#allocation10], 0
    %27 = vsyncpa [#allocation12], 0
    loop: start=0, step=1, limit=4
    $region2: #{mlp_forward.1} parent=1 // loop_pre_header
      _
    $region3: #{mlp_forward.1} parent=1 // loop_header
      %s29 = sphi 0, %s33
      %p30 = scmp.ge.s32.totalorder %s29, 4
      %s37 = sphi 0, %s37
      %s39 = sphi 0, %s37
      %s40 = sphi 0, %s39
      %s54 = sphi 0, %s40
      %s58 = sphi 0, %s58
      %s60 = sphi 0, %s58
      %s61 = sphi 0, %s60
      %s75 = sphi 0, %s61
      %s79 = sphi 0, %s79
      %s81 = sphi 0, %s79
      %s82 = sphi 0, %s81
      %s96 = sphi 0, %s82
      %s100 = sphi 0, %s100
      %s102 = sphi 0, %s100
      %s103 = sphi 0, %s102
      %s117 = sphi 0, %s103
      %s121 = sphi 0, %s121
      %s123 = sphi 0, %s121
      %s124 = sphi 0, %s123
      %s138 = sphi 0, %s124
      %s142 = sphi 0, %s142
      %s144 = sphi 0, %s142
      %s145 = sphi 0, %s144
      %s159 = sphi 0, %s145
      %s165 = sphi 0, %s167
      %s168 = sphi 0, %s165
      %s169 = sphi 0, %s168
      %s185 = sphi 0, %s169
    $region4: #{mlp_forward.1} parent=1 // loop_header_branch
      %32 = sbr.rel (%p30) target = $region8
    $region5: #{mlp_forward.1} parent=1 // loop_body
      %s34 = ssub.s32 %s29, 1
      %s35 = ssub.s32 %s29, 2
      %s36 = sadd.s32 %s29, 1
      %s38 = sadd.s32 %s37, 1
      %p41 = scmp.eq.s32.totalorder %s29, 1
      %p42 = scmp.ne.s32.totalorder %s37, %s39
      %p43 = scmp.eq.s32.totalorder %s29, 0
      %p44 = por %p42, %p43
      %p45 = scmp.ne.s32.totalorder %s37, %s39
      %p46 = scmp.eq.s32.totalorder %s34, 1
      %p47 = por %p45, %p46
      %p48 = scmp.ne.s32.totalorder %s39, %s40
      %p49 = scmp.eq.s32.totalorder %s34, 0
      %p50 = por %p48, %p49
      %p51 = scmp.ne.s32.totalorder %s39, %s40
      %p52 = scmp.eq.s32.totalorder %s35, 1
      %p53 = por %p51, %p52
      %p55 = scmp.ne.s32.totalorder %s40, %s54
      %p56 = scmp.eq.s32.totalorder %s35, 0
      %p57 = por %p55, %p56
      %s59 = sadd.s32 %s58, 1
      %p62 = scmp.eq.s32.totalorder %s29, 1
      %p63 = scmp.ne.s32.totalorder %s58, %s60
      %p64 = scmp.eq.s32.totalorder %s29, 0
      %p65 = por %p63, %p64
      %p66 = scmp.ne.s32.totalorder %s58, %s60
      %p67 = scmp.eq.s32.totalorder %s34, 1
      %p68 = por %p66, %p67
      %p69 = scmp.ne.s32.totalorder %s60, %s61
      %p70 = scmp.eq.s32.totalorder %s34, 0
      %p71 = por %p69, %p70
      %p72 = scmp.ne.s32.totalorder %s60, %s61
      %p73 = scmp.eq.s32.totalorder %s35, 1
      %p74 = por %p72, %p73
      %p76 = scmp.ne.s32.totalorder %s61, %s75
      %p77 = scmp.eq.s32.totalorder %s35, 0
      %p78 = por %p76, %p77
      %s80 = sadd.s32 %s79, 1
      %p83 = scmp.eq.s32.totalorder %s29, 1
      %p84 = scmp.ne.s32.totalorder %s79, %s81
      %p85 = scmp.eq.s32.totalorder %s29, 0
      %p86 = por %p84, %p85
      %p87 = scmp.ne.s32.totalorder %s79, %s81
      %p88 = scmp.eq.s32.totalorder %s34, 1
      %p89 = por %p87, %p88
      %p90 = scmp.ne.s32.totalorder %s81, %s82
      %p91 = scmp.eq.s32.totalorder %s34, 0
      %p92 = por %p90, %p91
      %p93 = scmp.ne.s32.totalorder %s81, %s82
      %p94 = scmp.eq.s32.totalorder %s35, 1
      %p95 = por %p93, %p94
      %p97 = scmp.ne.s32.totalorder %s82, %s96
      %p98 = scmp.eq.s32.totalorder %s35, 0
      %p99 = por %p97, %p98
      %s101 = sadd.s32 %s100, 1
      %p104 = scmp.eq.s32.totalorder %s29, 1
      %p105 = scmp.ne.s32.totalorder %s100, %s102
      %p106 = scmp.eq.s32.totalorder %s29, 0
      %p107 = por %p105, %p106
      %p108 = scmp.ne.s32.totalorder %s100, %s102
      %p109 = scmp.eq.s32.totalorder %s34, 1
      %p110 = por %p108, %p109
      %p111 = scmp.ne.s32.totalorder %s102, %s103
      %p112 = scmp.eq.s32.totalorder %s34, 0
      %p113 = por %p111, %p112
      %p114 = scmp.ne.s32.totalorder %s102, %s103
      %p115 = scmp.eq.s32.totalorder %s35, 1
      %p116 = por %p114, %p115
      %p118 = scmp.ne.s32.totalorder %s103, %s117
      %p119 = scmp.eq.s32.totalorder %s35, 0
      %p120 = por %p118, %p119
      %s122 = sadd.s32 %s121, 1
      %p125 = scmp.eq.s32.totalorder %s29, 1
      %p126 = scmp.ne.s32.totalorder %s121, %s123
      %p127 = scmp.eq.s32.totalorder %s29, 0
      %p128 = por %p126, %p127
      %p129 = scmp.ne.s32.totalorder %s121, %s123
      %p130 = scmp.eq.s32.totalorder %s34, 1
      %p131 = por %p129, %p130
      %p132 = scmp.ne.s32.totalorder %s123, %s124
      %p133 = scmp.eq.s32.totalorder %s34, 0
      %p134 = por %p132, %p133
      %p135 = scmp.ne.s32.totalorder %s123, %s124
      %p136 = scmp.eq.s32.totalorder %s35, 1
      %p137 = por %p135, %p136
      %p139 = scmp.ne.s32.totalorder %s124, %s138
      %p140 = scmp.eq.s32.totalorder %s35, 0
      %p141 = por %p139, %p140
      %s143 = sadd.s32 %s142, 1
      %p146 = scmp.eq.s32.totalorder %s29, 1
      %p147 = scmp.ne.s32.totalorder %s142, %s144
      %p148 = scmp.eq.s32.totalorder %s29, 0
      %p149 = por %p147, %p148
      %p150 = scmp.ne.s32.totalorder %s142, %s144
      %p151 = scmp.eq.s32.totalorder %s34, 1
      %p152 = por %p150, %p151
      %p153 = scmp.ne.s32.totalorder %s144, %s145
      %p154 = scmp.eq.s32.totalorder %s34, 0
      %p155 = por %p153, %p154
      %p156 = scmp.ne.s32.totalorder %s144, %s145
      %p157 = scmp.eq.s32.totalorder %s35, 1
      %p158 = por %p156, %p157
      %p160 = scmp.ne.s32.totalorder %s145, %s159
      %p161 = scmp.eq.s32.totalorder %s35, 0
      %p162 = por %p160, %p161
      %s163 = ssub.s32 %s29, %s36
      %p164 = scmp.eq.s32.totalorder %s163, 0
      %s166 = sadd.s32 %s165, 1
      %s167 = scalar_select %p164, %s165, %s166
      %p170 = pneg %p164
      %p171 = scmp.eq.s32.totalorder %s29, 1
      %p172 = por %p170, %p171
      %p173 = scmp.ne.s32.totalorder %s165, %s168
      %p174 = scmp.eq.s32.totalorder %s29, 0
      %p175 = por %p173, %p174
      %p176 = scmp.ne.s32.totalorder %s165, %s168
      %p177 = scmp.eq.s32.totalorder %s34, 1
      %p178 = por %p176, %p177
      %p179 = scmp.ne.s32.totalorder %s168, %s169
      %p180 = scmp.eq.s32.totalorder %s34, 0
      %p181 = por %p179, %p180
      %p182 = scmp.ne.s32.totalorder %s168, %s169
      %p183 = scmp.eq.s32.totalorder %s35, 1
      %p184 = por %p182, %p183
      %p186 = scmp.ne.s32.totalorder %s169, %s185
      %p187 = scmp.eq.s32.totalorder %s35, 0
      %p188 = por %p186, %p187
      %p189 = scmp.le.s32.totalorder 1, %s29
      %p190 = scmp.lt.s32.totalorder %s29, 3
      %p191 = pnand %p189, %p190
      %p192 = pneg %p191
      // Predicated region
      $region9: #{mlp_forward.1} parent=5 // pred_check
        _
      $region10: #{mlp_forward.1} parent=5 // pred_check_branch
        %194 = sbr.rel (%p191) target = $region12
      $region11: #{mlp_forward.1} parent=5 // pred_region
        %s195 = ssub.s32 %s29, 1
        // Predicated region
        $region13: #{mlp_forward.1} parent=11 // pred_check
          %p196 = pneg %p50
        $region14: #{mlp_forward.1} parent=11 // pred_check_branch
          %198 = sbr.rel (%p196) target = $region16
        $region15: #{mlp_forward.1} parent=11 // pred_region
          %s200 = ssub.s32 4096, 4096
          %201 = vsyncadd [#allocation10], %s200
          %s202 = sshll.u32 [#allocation9], 4
          %s203 = int_to_ptr.vmem [resolvable:$true] %s202
          %208 = dma.hbm_to_vmem [thread:$0]  %s4, 4096, %s203, [#allocation10], 128, 128, 8
        $region16: #{mlp_forward.1} parent=11 // pred_fallthru
          _
        // Predicated region
        $region17: #{mlp_forward.1} parent=11 // pred_check
          %p209 = pneg %p71
        $region18: #{mlp_forward.1} parent=11 // pred_check_branch
          %211 = sbr.rel (%p209) target = $region20
        $region19: #{mlp_forward.1} parent=11 // pred_region
          _
        $region20: #{mlp_forward.1} parent=11 // pred_fallthru
          _
        // Predicated region
        $region21: #{mlp_forward.1} parent=11 // pred_check
          %p212 = pneg %p92
        $region22: #{mlp_forward.1} parent=11 // pred_check_branch
          %214 = sbr.rel (%p212) target = $region24
        $region23: #{mlp_forward.1} parent=11 // pred_region
          %s216 = ssub.s32 2048, 2048
          %217 = vsyncadd [#allocation12], %s216
          %s218 = sshll.u32 [#allocation11], 4
          %s219 = int_to_ptr.vmem [resolvable:$true] %s218
          %224 = dma.hbm_to_vmem [thread:$0]  %s6, 2048, %s219, [#allocation12], 128, 128, 8
        $region24: #{mlp_forward.1} parent=11 // pred_fallthru
          _
        // Predicated region
        $region25: #{mlp_forward.1} parent=11 // pred_check
          %p225 = pneg %p113
        $region26: #{mlp_forward.1} parent=11 // pred_check_branch
          %227 = sbr.rel (%p225) target = $region28
        $region27: #{mlp_forward.1} parent=11 // pred_region
          _
        $region28: #{mlp_forward.1} parent=11 // pred_fallthru
          _
        // Predicated region
        $region29: #{mlp_forward.1} parent=11 // pred_check
          %p228 = pneg %p134
        $region30: #{mlp_forward.1} parent=11 // pred_check_branch
          %230 = sbr.rel (%p228) target = $region32
        $region31: #{mlp_forward.1} parent=11 // pred_region
          _
        $region32: #{mlp_forward.1} parent=11 // pred_fallthru
          _
        // Predicated region
        $region33: #{mlp_forward.1} parent=11 // pred_check
          %p231 = pneg %p155
        $region34: #{mlp_forward.1} parent=11 // pred_check_branch
          %233 = sbr.rel (%p231) target = $region36
        $region35: #{mlp_forward.1} parent=11 // pred_region
          _
        $region36: #{mlp_forward.1} parent=11 // pred_fallthru
          _
      $region12: #{mlp_forward.1} parent=5 // pred_fallthru
        _
      %p234 = scmp.lt.s32.totalorder %s29, 2
      // Predicated region
      $region37: #{mlp_forward.1} parent=5 // pred_check
        %p235 = pneg %p234
      $region38: #{mlp_forward.1} parent=5 // pred_check_branch
        %237 = sbr.rel (%p235) target = $region40
      $region39: #{mlp_forward.1} parent=5 // pred_region
        _
      $region40: #{mlp_forward.1} parent=5 // pred_fallthru
        _
      %p238 = scmp.le.s32.totalorder 1, %s29
      %p239 = scmp.lt.s32.totalorder %s29, 3
      %p240 = pnand %p238, %p239
      %p241 = pneg %p240
      // Predicated region
      $region41: #{mlp_forward.1} parent=5 // pred_check
        _
      $region42: #{mlp_forward.1} parent=5 // pred_check_branch
        %243 = sbr.rel (%p240) target = $region44
      $region43: #{mlp_forward.1} parent=5 // pred_region
        %s244 = ssub.s32 %s29, 1
        // Predicated region
        $region45: #{mlp_forward.1} parent=43 // pred_check
          %p245 = pneg %p50
        $region46: #{mlp_forward.1} parent=43 // pred_check_branch
          %247 = sbr.rel (%p245) target = $region48
        $region47: #{mlp_forward.1} parent=43 // pred_region
          %248 = dma.done [#allocation10], 4096
        $region48: #{mlp_forward.1} parent=43 // pred_fallthru
          _
        // Predicated region
        $region49: #{mlp_forward.1} parent=43 // pred_check
          %p249 = pneg %p92
        $region50: #{mlp_forward.1} parent=43 // pred_check_branch
          %251 = sbr.rel (%p249) target = $region52
        $region51: #{mlp_forward.1} parent=43 // pred_region
          %252 = dma.done [#allocation12], 2048
        $region52: #{mlp_forward.1} parent=43 // pred_fallthru
          _
        %p253 = pneg %p50
        %p254 = pneg %p47
        %p255 = pneg %p71
        %p256 = pneg %p68
        %p257 = pneg %p92
        %p258 = pneg %p89
        %p259 = pneg %p113
        %p260 = pneg %p110
        %p261 = pneg %p134
        %p262 = pneg %p131
        %p263 = pneg %p155
        %p264 = pneg %p152
        %p265 = pneg %p181
        %p266 = pneg %p178
        %s267 = smul.u32 32, %s34
        %p268 = scmp.lt.s32.totalorder %s267, 63
        %s269 = scalar_select %p268, %s267, 63
        %s270 = smul.addr %s269, 8
        %s271 = scalar_lea.vmem %s10, %s270
        %s272 = smul.u32 32, %s34
        %p273 = scmp.lt.s32.totalorder %s272, 63
        %s274 = scalar_select %p273, %s272, 63
        %s275 = smul.addr %s274, 8
        %s276 = scalar_lea.vmem %s10, %s275
        %s277 = smul.u32 32, %s34
        %p278 = scmp.eq.s32.totalorder %s34, 0
        // Predicated region
        $region53: #{mlp_forward.1} parent=43 // pred_check
          %p279 = pneg %p278
        $region54: #{mlp_forward.1} parent=43 // pred_check_branch
          %281 = sbr.rel (%p279) target = $region56
        $region55: #{mlp_forward.1} parent=43 // pred_region
          loop: start=0, step=1, limit=32
          $region57: #{mlp_forward.1} parent=55 // loop_pre_header
            _
          $region58: #{mlp_forward.1} parent=55 // loop_header
            %s283 = sphi 0, %s287
            %p284 = scmp.ge.s32.totalorder %s283, 32
          $region59: #{mlp_forward.1} parent=55 // loop_header_branch
            %286 = sbr.rel (%p284) target = $region63
          $region60: #{mlp_forward.1} parent=55 // loop_body
            %s288 = smul.u32 %s283, 8
            %s289 = sld [smem:[#allocation6 + %s288]]
            %s290 = sld [smem:[#allocation7 + %s288]]
            %s291 = smul.addr %s289, 16
            %s292 = scalar_lea.hbm %s2, %s291
            %s293 = scalar_lea.vmem [#allocation2], %s288
            // Predicated region
            $region64: #{mlp_forward.1} parent=60 // pred_check
              _
            $region65: #{mlp_forward.1} parent=60 // pred_check_branch
              %295 = sbr.rel target = $region67
            $region66: #{mlp_forward.1} parent=60 // pred_region
              %296 = sst [smem:[#allocation15]] [#allocation14]
              %297 = sst [smem:[#allocation16]] [#allocation13]
            $region67: #{mlp_forward.1} parent=60 // pred_fallthru
              _
            %299 = shalt.err (0)
            %s301 = sshll.u32 %s293, 4
            %s302 = int_to_ptr.vmem [resolvable:$true] %s301
            %304 = dma.hbm_to_vmem [thread:$0]  %s292, 16, %s302, [#allocation4]
            %s305 = smul.addr %s290, 16
            %s306 = scalar_lea.hbm %s3, %s305
            %s307 = scalar_lea.vmem [#allocation3], %s288
            %s308 = scalar_lea.sflag [#allocation4], 2
            // Predicated region
            $region68: #{mlp_forward.1} parent=60 // pred_check
              _
            $region69: #{mlp_forward.1} parent=60 // pred_check_branch
              %310 = sbr.rel target = $region71
            $region70: #{mlp_forward.1} parent=60 // pred_region
              %311 = sst [smem:[#allocation15]] [#allocation18]
              %312 = sst [smem:[#allocation16]] [#allocation17]
            $region71: #{mlp_forward.1} parent=60 // pred_fallthru
              _
            %314 = shalt.err (0)
            %s316 = sshll.u32 %s307, 4
            %s317 = int_to_ptr.vmem [resolvable:$true] %s316
            %319 = dma.hbm_to_vmem [thread:$0]  %s306, 16, %s317, %s308
            %s320 = sadd.s32 %s288, 1
            %s321 = sld [smem:[#allocation6 + %s320]]
            %s322 = sld [smem:[#allocation7 + %s320]]
            %s323 = smul.addr %s321, 16
            %s324 = scalar_lea.hbm %s2, %s323
            %s325 = scalar_lea.vmem [#allocation2], %s320
            // Predicated region
            $region72: #{mlp_forward.1} parent=60 // pred_check
              _
            $region73: #{mlp_forward.1} parent=60 // pred_check_branch
              %327 = sbr.rel target = $region75
            $region74: #{mlp_forward.1} parent=60 // pred_region
              %328 = sst [smem:[#allocation15]] [#allocation20]
              %329 = sst [smem:[#allocation16]] [#allocation19]
            $region75: #{mlp_forward.1} parent=60 // pred_fallthru
              _
            %331 = shalt.err (0)
            %s333 = sshll.u32 %s325, 4
            %s334 = int_to_ptr.vmem [resolvable:$true] %s333
            %336 = dma.hbm_to_vmem [thread:$0]  %s324, 16, %s334, [#allocation4]
            %s337 = smul.addr %s322, 16
            %s338 = scalar_lea.hbm %s3, %s337
            %s339 = scalar_lea.vmem [#allocation3], %s320
            // Predicated region
            $region76: #{mlp_forward.1} parent=60 // pred_check
              _
            $region77: #{mlp_forward.1} parent=60 // pred_check_branch
              %341 = sbr.rel target = $region79
            $region78: #{mlp_forward.1} parent=60 // pred_region
              %342 = sst [smem:[#allocation15]] [#allocation22]
              %343 = sst [smem:[#allocation16]] [#allocation21]
            $region79: #{mlp_forward.1} parent=60 // pred_fallthru
              _
            %345 = shalt.err (0)
            %s347 = sshll.u32 %s339, 4
            %s348 = int_to_ptr.vmem [resolvable:$true] %s347
            %350 = dma.hbm_to_vmem [thread:$0]  %s338, 16, %s348, %s308
            %s351 = sadd.s32 %s288, 2
            %s352 = sld [smem:[#allocation6 + %s351]]
            %s353 = sld [smem:[#allocation7 + %s351]]
            %s354 = smul.addr %s352, 16
            %s355 = scalar_lea.hbm %s2, %s354
            %s356 = scalar_lea.vmem [#allocation2], %s351
            // Predicated region
            $region80: #{mlp_forward.1} parent=60 // pred_check
              _
            $region81: #{mlp_forward.1} parent=60 // pred_check_branch
              %358 = sbr.rel target = $region83
            $region82: #{mlp_forward.1} parent=60 // pred_region
              %359 = sst [smem:[#allocation15]] [#allocation24]
              %360 = sst [smem:[#allocation16]] [#allocation23]
            $region83: #{mlp_forward.1} parent=60 // pred_fallthru
              _
            %362 = shalt.err (0)
            %s364 = sshll.u32 %s356, 4
            %s365 = int_to_ptr.vmem [resolvable:$true] %s364
            %367 = dma.hbm_to_vmem [thread:$0]  %s355, 16, %s365, [#allocation4]
            %s368 = smul.addr %s353, 16
            %s369 = scalar_lea.hbm %s3, %s368
            %s370 = scalar_lea.vmem [#allocation3], %s351
            // Predicated region
            $region84: #{mlp_forward.1} parent=60 // pred_check
              _
            $region85: #{mlp_forward.1} parent=60 // pred_check_branch
              %372 = sbr.rel target = $region87
            $region86: #{mlp_forward.1} parent=60 // pred_region
              %373 = sst [smem:[#allocation15]] [#allocation26]
              %374 = sst [smem:[#allocation16]] [#allocation25]
            $region87: #{mlp_forward.1} parent=60 // pred_fallthru
              _
            %376 = shalt.err (0)
            %s378 = sshll.u32 %s370, 4
            %s379 = int_to_ptr.vmem [resolvable:$true] %s378
            %381 = dma.hbm_to_vmem [thread:$0]  %s369, 16, %s379, %s308
            %s382 = sadd.s32 %s288, 3
            %s383 = sld [smem:[#allocation6 + %s382]]
            %s384 = sld [smem:[#allocation7 + %s382]]
            %s385 = smul.addr %s383, 16
            %s386 = scalar_lea.hbm %s2, %s385
            %s387 = scalar_lea.vmem [#allocation2], %s382
            // Predicated region
            $region88: #{mlp_forward.1} parent=60 // pred_check
              _
            $region89: #{mlp_forward.1} parent=60 // pred_check_branch
              %389 = sbr.rel target = $region91
            $region90: #{mlp_forward.1} parent=60 // pred_region
              %390 = sst [smem:[#allocation15]] [#allocation28]
              %391 = sst [smem:[#allocation16]] [#allocation27]
            $region91: #{mlp_forward.1} parent=60 // pred_fallthru
              _
            %393 = shalt.err (0)
            %s395 = sshll.u32 %s387, 4
            %s396 = int_to_ptr.vmem [resolvable:$true] %s395
            %398 = dma.hbm_to_vmem [thread:$0]  %s386, 16, %s396, [#allocation4]
            %s399 = smul.addr %s384, 16
            %s400 = scalar_lea.hbm %s3, %s399
            %s401 = scalar_lea.vmem [#allocation3], %s382
            // Predicated region
            $region92: #{mlp_forward.1} parent=60 // pred_check
              _
            $region93: #{mlp_forward.1} parent=60 // pred_check_branch
              %403 = sbr.rel target = $region95
            $region94: #{mlp_forward.1} parent=60 // pred_region
              %404 = sst [smem:[#allocation15]] [#allocation30]
              %405 = sst [smem:[#allocation16]] [#allocation29]
            $region95: #{mlp_forward.1} parent=60 // pred_fallthru
              _
            %407 = shalt.err (0)
            %s409 = sshll.u32 %s401, 4
            %s410 = int_to_ptr.vmem [resolvable:$true] %s409
            %412 = dma.hbm_to_vmem [thread:$0]  %s400, 16, %s410, %s308
            %s413 = sadd.s32 %s288, 4
            %s414 = sld [smem:[#allocation6 + %s413]]
            %s415 = sld [smem:[#allocation7 + %s413]]
            %s416 = smul.addr %s414, 16
            %s417 = scalar_lea.hbm %s2, %s416
            %s418 = scalar_lea.vmem [#allocation2], %s413
            // Predicated region
            $region96: #{mlp_forward.1} parent=60 // pred_check
              _
            $region97: #{mlp_forward.1} parent=60 // pred_check_branch
              %420 = sbr.rel target = $region99
            $region98: #{mlp_forward.1} parent=60 // pred_region
              %421 = sst [smem:[#allocation15]] [#allocation32]
              %422 = sst [smem:[#allocation16]] [#allocation31]
            $region99: #{mlp_forward.1} parent=60 // pred_fallthru
              _
            %424 = shalt.err (0)
            %s426 = sshll.u32 %s418, 4
            %s427 = int_to_ptr.vmem [resolvable:$true] %s426
            %429 = dma.hbm_to_vmem [thread:$0]  %s417, 16, %s427, [#allocation4]
            %s430 = smul.addr %s415, 16
            %s431 = scalar_lea.hbm %s3, %s430
            %s432 = scalar_lea.vmem [#allocation3], %s413
            // Predicated region
            $region100: #{mlp_forward.1} parent=60 // pred_check
              _
            $region101: #{mlp_forward.1} parent=60 // pred_check_branch
              %434 = sbr.rel target = $region103
            $region102: #{mlp_forward.1} parent=60 // pred_region
              %435 = sst [smem:[#allocation15]] [#allocation34]
              %436 = sst [smem:[#allocation16]] [#allocation33]
            $region103: #{mlp_forward.1} parent=60 // pred_fallthru
              _
            %438 = shalt.err (0)
            %s440 = sshll.u32 %s432, 4
            %s441 = int_to_ptr.vmem [resolvable:$true] %s440
            %443 = dma.hbm_to_vmem [thread:$0]  %s431, 16, %s441, %s308
            %s444 = sadd.s32 %s288, 5
            %s445 = sld [smem:[#allocation6 + %s444]]
            %s446 = sld [smem:[#allocation7 + %s444]]
            %s447 = smul.addr %s445, 16
            %s448 = scalar_lea.hbm %s2, %s447
            %s449 = scalar_lea.vmem [#allocation2], %s444
            // Predicated region
            $region104: #{mlp_forward.1} parent=60 // pred_check
              _
            $region105: #{mlp_forward.1} parent=60 // pred_check_branch
              %451 = sbr.rel target = $region107
            $region106: #{mlp_forward.1} parent=60 // pred_region
              %452 = sst [smem:[#allocation15]] [#allocation36]
              %453 = sst [smem:[#allocation16]] [#allocation35]
            $region107: #{mlp_forward.1} parent=60 // pred_fallthru
              _
            %455 = shalt.err (0)
            %s457 = sshll.u32 %s449, 4
            %s458 = int_to_ptr.vmem [resolvable:$true] %s457
            %460 = dma.hbm_to_vmem [thread:$0]  %s448, 16, %s458, [#allocation4]
            %s461 = smul.addr %s446, 16
            %s462 = scalar_lea.hbm %s3, %s461
            %s463 = scalar_lea.vmem [#allocation3], %s444
            // Predicated region
            $region108: #{mlp_forward.1} parent=60 // pred_check
              _
            $region109: #{mlp_forward.1} parent=60 // pred_check_branch
              %465 = sbr.rel target = $region111
            $region110: #{mlp_forward.1} parent=60 // pred_region
              %466 = sst [smem:[#allocation15]] [#allocation38]
              %467 = sst [smem:[#allocation16]] [#allocation37]
            $region111: #{mlp_forward.1} parent=60 // pred_fallthru
              _
            %469 = shalt.err (0)
            %s471 = sshll.u32 %s463, 4
            %s472 = int_to_ptr.vmem [resolvable:$true] %s471
            %474 = dma.hbm_to_vmem [thread:$0]  %s462, 16, %s472, %s308
            %s475 = sadd.s32 %s288, 6
            %s476 = sld [smem:[#allocation6 + %s475]]
            %s477 = sld [smem:[#allocation7 + %s475]]
            %s478 = smul.addr %s476, 16
            %s479 = scalar_lea.hbm %s2, %s478
            %s480 = scalar_lea.vmem [#allocation2], %s475
            // Predicated region
            $region112: #{mlp_forward.1} parent=60 // pred_check
              _
            $region113: #{mlp_forward.1} parent=60 // pred_check_branch
              %482 = sbr.rel target = $region115
            $region114: #{mlp_forward.1} parent=60 // pred_region
              %483 = sst [smem:[#allocation15]] [#allocation40]
              %484 = sst [smem:[#allocation16]] [#allocation39]
            $region115: #{mlp_forward.1} parent=60 // pred_fallthru
              _
            %486 = shalt.err (0)
            %s488 = sshll.u32 %s480, 4
            %s489 = int_to_ptr.vmem [resolvable:$true] %s488
            %491 = dma.hbm_to_vmem [thread:$0]  %s479, 16, %s489, [#allocation4]
            %s492 = smul.addr %s477, 16
            %s493 = scalar_lea.hbm %s3, %s492
            %s494 = scalar_lea.vmem [#allocation3], %s475
            // Predicated region
            $region116: #{mlp_forward.1} parent=60 // pred_check
              _
            $region117: #{mlp_forward.1} parent=60 // pred_check_branch
              %496 = sbr.rel target = $region119
            $region118: #{mlp_forward.1} parent=60 // pred_region
              %497 = sst [smem:[#allocation15]] [#allocation42]
              %498 = sst [smem:[#allocation16]] [#allocation41]
            $region119: #{mlp_forward.1} parent=60 // pred_fallthru
              _
            %500 = shalt.err (0)
            %s502 = sshll.u32 %s494, 4
            %s503 = int_to_ptr.vmem [resolvable:$true] %s502
            %505 = dma.hbm_to_vmem [thread:$0]  %s493, 16, %s503, %s308
            %s506 = sadd.s32 %s288, 7
            %s507 = sld [smem:[#allocation6 + %s506]]
            %s508 = sld [smem:[#allocation7 + %s506]]
            %s509 = smul.addr %s507, 16
            %s510 = scalar_lea.hbm %s2, %s509
            %s511 = scalar_lea.vmem [#allocation2], %s506
            // Predicated region
            $region120: #{mlp_forward.1} parent=60 // pred_check
              _
            $region121: #{mlp_forward.1} parent=60 // pred_check_branch
              %513 = sbr.rel target = $region123
            $region122: #{mlp_forward.1} parent=60 // pred_region
              %514 = sst [smem:[#allocation15]] [#allocation44]
              %515 = sst [smem:[#allocation16]] [#allocation43]
            $region123: #{mlp_forward.1} parent=60 // pred_fallthru
              _
            %517 = shalt.err (0)
            %s519 = sshll.u32 %s511, 4
            %s520 = int_to_ptr.vmem [resolvable:$true] %s519
            %522 = dma.hbm_to_vmem [thread:$0]  %s510, 16, %s520, [#allocation4]
            %s523 = smul.addr %s508, 16
            %s524 = scalar_lea.hbm %s3, %s523
            %s525 = scalar_lea.vmem [#allocation3], %s506
            // Predicated region
            $region124: #{mlp_forward.1} parent=60 // pred_check
              _
            $region125: #{mlp_forward.1} parent=60 // pred_check_branch
              %527 = sbr.rel target = $region127
            $region126: #{mlp_forward.1} parent=60 // pred_region
              %528 = sst [smem:[#allocation15]] [#allocation46]
              %529 = sst [smem:[#allocation16]] [#allocation45]
            $region127: #{mlp_forward.1} parent=60 // pred_fallthru
              _
            %531 = shalt.err (0)
            %s533 = sshll.u32 %s525, 4
            %s534 = int_to_ptr.vmem [resolvable:$true] %s533
            %536 = dma.hbm_to_vmem [thread:$0]  %s524, 16, %s534, %s308
          $region61: #{mlp_forward.1} parent=55 // loop_footer
            %s287 = sadd.s32 1, %s283
          $region62: #{mlp_forward.1} parent=55 // loop_footer_branch
            %282 = sbr.rel target = $region58
          $region63: #{mlp_forward.1} parent=55 // loop_exit
            _
        $region56: #{mlp_forward.1} parent=43 // pred_fallthru
          _
        %p537 = scmp.lt.s32.totalorder %s34, 0
        %s538 = ssub.s32 0, %s34
        %s539 = scalar_select %p537, %s538, %s34
        %s540 = sand.u32 %s539, 1
        %s541 = ssub.s32 0, %s540
        %s542 = scalar_select %p537, %s541, %s540
        %s543 = smul.u32 %s542, 256
        %s544 = scalar_lea.vmem [#allocation2], %s543
        %s545 = scalar_lea.sflag [#allocation4], %s542
        %s546 = smul.u32 256, 1
        %s547 = sshll.u32 %s546, 4
        %548 = dma.done %s545, %s547
        %s549 = scalar_lea.vmem [#allocation3], %s543
        %s550 = sadd.s32 %s542, 2
        %s551 = scalar_lea.sflag [#allocation4], %s550
        %s552 = sshll.u32 %s546, 4
        %553 = dma.done %s551, %s552
        %s554 = sadd.s32 %s34, 1
        %p555 = scmp.lt.s32.totalorder %s554, 2
        // Predicated region
        $region128: #{mlp_forward.1} parent=43 // pred_check
          %p556 = pneg %p555
        $region129: #{mlp_forward.1} parent=43 // pred_check_branch
          %558 = sbr.rel (%p556) target = $region131
        $region130: #{mlp_forward.1} parent=43 // pred_region
          %s559 = ssub.s32 1, %s542
          %s560 = smul.u32 %s554, 256
          loop: start=0, step=1, limit=32
          $region132: #{mlp_forward.1} parent=130 // loop_pre_header
            _
          $region133: #{mlp_forward.1} parent=130 // loop_header
            %s562 = sphi 0, %s566
            %p563 = scmp.ge.s32.totalorder %s562, 32
          $region134: #{mlp_forward.1} parent=130 // loop_header_branch
            %565 = sbr.rel (%p563) target = $region138
          $region135: #{mlp_forward.1} parent=130 // loop_body
            %s567 = smul.u32 %s562, 8
            %s568 = sadd.s32 %s560, %s567
            %s569 = sld [smem:[#allocation6 + %s568]]
            %s570 = sld [smem:[#allocation7 + %s568]]
            %s571 = smul.addr %s569, 16
            %s572 = scalar_lea.hbm %s2, %s571
            %s573 = smul.u32 %s559, 256
            %s574 = sadd.s32 %s567, %s573
            %s575 = scalar_lea.vmem [#allocation2], %s574
            %s576 = scalar_lea.sflag [#allocation4], %s559
            // Predicated region
            $region139: #{mlp_forward.1} parent=135 // pred_check
              _
            $region140: #{mlp_forward.1} parent=135 // pred_check_branch
              %578 = sbr.rel target = $region142
            $region141: #{mlp_forward.1} parent=135 // pred_region
              %579 = sst [smem:[#allocation15]] [#allocation48]
              %580 = sst [smem:[#allocation16]] [#allocation47]
            $region142: #{mlp_forward.1} parent=135 // pred_fallthru
              _
            %582 = shalt.err (0)
            %s584 = sshll.u32 %s575, 4
            %s585 = int_to_ptr.vmem [resolvable:$true] %s584
            %587 = dma.hbm_to_vmem [thread:$0]  %s572, 16, %s585, %s576
            %s588 = smul.addr %s570, 16
            %s589 = scalar_lea.hbm %s3, %s588
            %s590 = scalar_lea.vmem [#allocation3], %s574
            %s591 = sadd.s32 %s559, 2
            %s592 = scalar_lea.sflag [#allocation4], %s591
            // Predicated region
            $region143: #{mlp_forward.1} parent=135 // pred_check
              _
            $region144: #{mlp_forward.1} parent=135 // pred_check_branch
              %594 = sbr.rel target = $region146
            $region145: #{mlp_forward.1} parent=135 // pred_region
              %595 = sst [smem:[#allocation15]] [#allocation50]
              %596 = sst [smem:[#allocation16]] [#allocation49]
            $region146: #{mlp_forward.1} parent=135 // pred_fallthru
              _
            %598 = shalt.err (0)
            %s600 = sshll.u32 %s590, 4
            %s601 = int_to_ptr.vmem [resolvable:$true] %s600
            %603 = dma.hbm_to_vmem [thread:$0]  %s589, 16, %s601, %s592
            %s604 = sadd.s32 %s567, 1
            %s605 = sadd.s32 %s560, %s604
            %s606 = sld [smem:[#allocation6 + %s605]]
            %s607 = sld [smem:[#allocation7 + %s605]]
            %s608 = smul.addr %s606, 16
            %s609 = scalar_lea.hbm %s2, %s608
            %s610 = sadd.s32 %s604, %s573
            %s611 = scalar_lea.vmem [#allocation2], %s610
            // Predicated region
            $region147: #{mlp_forward.1} parent=135 // pred_check
              _
            $region148: #{mlp_forward.1} parent=135 // pred_check_branch
              %613 = sbr.rel target = $region150
            $region149: #{mlp_forward.1} parent=135 // pred_region
              %614 = sst [smem:[#allocation15]] [#allocation52]
              %615 = sst [smem:[#allocation16]] [#allocation51]
            $region150: #{mlp_forward.1} parent=135 // pred_fallthru
              _
            %617 = shalt.err (0)
            %s619 = sshll.u32 %s611, 4
            %s620 = int_to_ptr.vmem [resolvable:$true] %s619
            %622 = dma.hbm_to_vmem [thread:$0]  %s609, 16, %s620, %s576
            %s623 = smul.addr %s607, 16
            %s624 = scalar_lea.hbm %s3, %s623
            %s625 = scalar_lea.vmem [#allocation3], %s610
            // Predicated region
            $region151: #{mlp_forward.1} parent=135 // pred_check
              _
            $region152: #{mlp_forward.1} parent=135 // pred_check_branch
              %627 = sbr.rel target = $region154
            $region153: #{mlp_forward.1} parent=135 // pred_region
              %628 = sst [smem:[#allocation15]] [#allocation54]
              %629 = sst [smem:[#allocation16]] [#allocation53]
            $region154: #{mlp_forward.1} parent=135 // pred_fallthru
              _
            %631 = shalt.err (0)
            %s633 = sshll.u32 %s625, 4
            %s634 = int_to_ptr.vmem [resolvable:$true] %s633
            %636 = dma.hbm_to_vmem [thread:$0]  %s624, 16, %s634, %s592
            %s637 = sadd.s32 %s567, 2
            %s638 = sadd.s32 %s560, %s637
            %s639 = sld [smem:[#allocation6 + %s638]]
            %s640 = sld [smem:[#allocation7 + %s638]]
            %s641 = smul.addr %s639, 16
            %s642 = scalar_lea.hbm %s2, %s641
            %s643 = sadd.s32 %s637, %s573
            %s644 = scalar_lea.vmem [#allocation2], %s643
            // Predicated region
            $region155: #{mlp_forward.1} parent=135 // pred_check
              _
            $region156: #{mlp_forward.1} parent=135 // pred_check_branch
              %646 = sbr.rel target = $region158
            $region157: #{mlp_forward.1} parent=135 // pred_region
              %647 = sst [smem:[#allocation15]] [#allocation56]
              %648 = sst [smem:[#allocation16]] [#allocation55]
            $region158: #{mlp_forward.1} parent=135 // pred_fallthru
              _
            %650 = shalt.err (0)
            %s652 = sshll.u32 %s644, 4
            %s653 = int_to_ptr.vmem [resolvable:$true] %s652
            %655 = dma.hbm_to_vmem [thread:$0]  %s642, 16, %s653, %s576
            %s656 = smul.addr %s640, 16
            %s657 = scalar_lea.hbm %s3, %s656
            %s658 = scalar_lea.vmem [#allocation3], %s643
            // Predicated region
            $region159: #{mlp_forward.1} parent=135 // pred_check
              _
            $region160: #{mlp_forward.1} parent=135 // pred_check_branch
              %660 = sbr.rel target = $region162
            $region161: #{mlp_forward.1} parent=135 // pred_region
              %661 = sst [smem:[#allocation15]] [#allocation58]
              %662 = sst [smem:[#allocation16]] [#allocation57]
            $region162: #{mlp_forward.1} parent=135 // pred_fallthru
              _
            %664 = shalt.err (0)
            %s666 = sshll.u32 %s658, 4
            %s667 = int_to_ptr.vmem [resolvable:$true] %s666
            %669 = dma.hbm_to_vmem [thread:$0]  %s657, 16, %s667, %s592
            %s670 = sadd.s32 %s567, 3
            %s671 = sadd.s32 %s560, %s670
            %s672 = sld [smem:[#allocation6 + %s671]]
            %s673 = sld [smem:[#allocation7 + %s671]]
            %s674 = smul.addr %s672, 16
            %s675 = scalar_lea.hbm %s2, %s674
            %s676 = sadd.s32 %s670, %s573
            %s677 = scalar_lea.vmem [#allocation2], %s676
            // Predicated region
            $region163: #{mlp_forward.1} parent=135 // pred_check
              _
            $region164: #{mlp_forward.1} parent=135 // pred_check_branch
              %679 = sbr.rel target = $region166
            $region165: #{mlp_forward.1} parent=135 // pred_region
              %680 = sst [smem:[#allocation15]] [#allocation60]
              %681 = sst [smem:[#allocation16]] [#allocation59]
            $region166: #{mlp_forward.1} parent=135 // pred_fallthru
              _
            %683 = shalt.err (0)
            %s685 = sshll.u32 %s677, 4
            %s686 = int_to_ptr.vmem [resolvable:$true] %s685
            %688 = dma.hbm_to_vmem [thread:$0]  %s675, 16, %s686, %s576
            %s689 = smul.addr %s673, 16
            %s690 = scalar_lea.hbm %s3, %s689
            %s691 = scalar_lea.vmem [#allocation3], %s676
            // Predicated region
            $region167: #{mlp_forward.1} parent=135 // pred_check
              _
            $region168: #{mlp_forward.1} parent=135 // pred_check_branch
              %693 = sbr.rel target = $region170
            $region169: #{mlp_forward.1} parent=135 // pred_region
              %694 = sst [smem:[#allocation15]] [#allocation62]
              %695 = sst [smem:[#allocation16]] [#allocation61]
            $region170: #{mlp_forward.1} parent=135 // pred_fallthru
              _
            %697 = shalt.err (0)
            %s699 = sshll.u32 %s691, 4
            %s700 = int_to_ptr.vmem [resolvable:$true] %s699
            %702 = dma.hbm_to_vmem [thread:$0]  %s690, 16, %s700, %s592
            %s703 = sadd.s32 %s567, 4
            %s704 = sadd.s32 %s560, %s703
            %s705 = sld [smem:[#allocation6 + %s704]]
            %s706 = sld [smem:[#allocation7 + %s704]]
            %s707 = smul.addr %s705, 16
            %s708 = scalar_lea.hbm %s2, %s707
            %s709 = sadd.s32 %s703, %s573
            %s710 = scalar_lea.vmem [#allocation2], %s709
            // Predicated region
            $region171: #{mlp_forward.1} parent=135 // pred_check
              _
            $region172: #{mlp_forward.1} parent=135 // pred_check_branch
              %712 = sbr.rel target = $region174
            $region173: #{mlp_forward.1} parent=135 // pred_region
              %713 = sst [smem:[#allocation15]] [#allocation64]
              %714 = sst [smem:[#allocation16]] [#allocation63]
            $region174: #{mlp_forward.1} parent=135 // pred_fallthru
              _
            %716 = shalt.err (0)
            %s718 = sshll.u32 %s710, 4
            %s719 = int_to_ptr.vmem [resolvable:$true] %s718
            %721 = dma.hbm_to_vmem [thread:$0]  %s708, 16, %s719, %s576
            %s722 = smul.addr %s706, 16
            %s723 = scalar_lea.hbm %s3, %s722
            %s724 = scalar_lea.vmem [#allocation3], %s709
            // Predicated region
            $region175: #{mlp_forward.1} parent=135 // pred_check
              _
            $region176: #{mlp_forward.1} parent=135 // pred_check_branch
              %726 = sbr.rel target = $region178
            $region177: #{mlp_forward.1} parent=135 // pred_region
              %727 = sst [smem:[#allocation15]] [#allocation66]
              %728 = sst [smem:[#allocation16]] [#allocation65]
            $region178: #{mlp_forward.1} parent=135 // pred_fallthru
              _
            %730 = shalt.err (0)
            %s732 = sshll.u32 %s724, 4
            %s733 = int_to_ptr.vmem [resolvable:$true] %s732
            %735 = dma.hbm_to_vmem [thread:$0]  %s723, 16, %s733, %s592
            %s736 = sadd.s32 %s567, 5
            %s737 = sadd.s32 %s560, %s736
            %s738 = sld [smem:[#allocation6 + %s737]]
            %s739 = sld [smem:[#allocation7 + %s737]]
            %s740 = smul.addr %s738, 16
            %s741 = scalar_lea.hbm %s2, %s740
            %s742 = sadd.s32 %s736, %s573
            %s743 = scalar_lea.vmem [#allocation2], %s742
            // Predicated region
            $region179: #{mlp_forward.1} parent=135 // pred_check
              _
            $region180: #{mlp_forward.1} parent=135 // pred_check_branch
              %745 = sbr.rel target = $region182
            $region181: #{mlp_forward.1} parent=135 // pred_region
              %746 = sst [smem:[#allocation15]] [#allocation68]
              %747 = sst [smem:[#allocation16]] [#allocation67]
            $region182: #{mlp_forward.1} parent=135 // pred_fallthru
              _
            %749 = shalt.err (0)
            %s751 = sshll.u32 %s743, 4
            %s752 = int_to_ptr.vmem [resolvable:$true] %s751
            %754 = dma.hbm_to_vmem [thread:$0]  %s741, 16, %s752, %s576
            %s755 = smul.addr %s739, 16
            %s756 = scalar_lea.hbm %s3, %s755
            %s757 = scalar_lea.vmem [#allocation3], %s742
            // Predicated region
            $region183: #{mlp_forward.1} parent=135 // pred_check
              _
            $region184: #{mlp_forward.1} parent=135 // pred_check_branch
              %759 = sbr.rel target = $region186
            $region185: #{mlp_forward.1} parent=135 // pred_region
              %760 = sst [smem:[#allocation15]] [#allocation70]
              %761 = sst [smem:[#allocation16]] [#allocation69]
            $region186: #{mlp_forward.1} parent=135 // pred_fallthru
              _
            %763 = shalt.err (0)
            %s765 = sshll.u32 %s757, 4
            %s766 = int_to_ptr.vmem [resolvable:$true] %s765
            %768 = dma.hbm_to_vmem [thread:$0]  %s756, 16, %s766, %s592
            %s769 = sadd.s32 %s567, 6
            %s770 = sadd.s32 %s560, %s769
            %s771 = sld [smem:[#allocation6 + %s770]]
            %s772 = sld [smem:[#allocation7 + %s770]]
            %s773 = smul.addr %s771, 16
            %s774 = scalar_lea.hbm %s2, %s773
            %s775 = sadd.s32 %s769, %s573
            %s776 = scalar_lea.vmem [#allocation2], %s775
            // Predicated region
            $region187: #{mlp_forward.1} parent=135 // pred_check
              _
            $region188: #{mlp_forward.1} parent=135 // pred_check_branch
              %778 = sbr.rel target = $region190
            $region189: #{mlp_forward.1} parent=135 // pred_region
              %779 = sst [smem:[#allocation15]] [#allocation72]
              %780 = sst [smem:[#allocation16]] [#allocation71]
            $region190: #{mlp_forward.1} parent=135 // pred_fallthru
              _
            %782 = shalt.err (0)
            %s784 = sshll.u32 %s776, 4
            %s785 = int_to_ptr.vmem [resolvable:$true] %s784
            %787 = dma.hbm_to_vmem [thread:$0]  %s774, 16, %s785, %s576
            %s788 = smul.addr %s772, 16
            %s789 = scalar_lea.hbm %s3, %s788
            %s790 = scalar_lea.vmem [#allocation3], %s775
            // Predicated region
            $region191: #{mlp_forward.1} parent=135 // pred_check
              _
            $region192: #{mlp_forward.1} parent=135 // pred_check_branch
              %792 = sbr.rel target = $region194
            $region193: #{mlp_forward.1} parent=135 // pred_region
              %793 = sst [smem:[#allocation15]] [#allocation74]
              %794 = sst [smem:[#allocation16]] [#allocation73]
            $region194: #{mlp_forward.1} parent=135 // pred_fallthru
              _
            %796 = shalt.err (0)
            %s798 = sshll.u32 %s790, 4
            %s799 = int_to_ptr.vmem [resolvable:$true] %s798
            %801 = dma.hbm_to_vmem [thread:$0]  %s789, 16, %s799, %s592
            %s802 = sadd.s32 %s567, 7
            %s803 = sadd.s32 %s560, %s802
            %s804 = sld [smem:[#allocation6 + %s803]]
            %s805 = sld [smem:[#allocation7 + %s803]]
            %s806 = smul.addr %s804, 16
            %s807 = scalar_lea.hbm %s2, %s806
            %s808 = sadd.s32 %s802, %s573
            %s809 = scalar_lea.vmem [#allocation2], %s808
            // Predicated region
            $region195: #{mlp_forward.1} parent=135 // pred_check
              _
            $region196: #{mlp_forward.1} parent=135 // pred_check_branch
              %811 = sbr.rel target = $region198
            $region197: #{mlp_forward.1} parent=135 // pred_region
              %812 = sst [smem:[#allocation15]] [#allocation76]
              %813 = sst [smem:[#allocation16]] [#allocation75]
            $region198: #{mlp_forward.1} parent=135 // pred_fallthru
              _
            %815 = shalt.err (0)
            %s817 = sshll.u32 %s809, 4
            %s818 = int_to_ptr.vmem [resolvable:$true] %s817
            %820 = dma.hbm_to_vmem [thread:$0]  %s807, 16, %s818, %s576
            %s821 = smul.addr %s805, 16
            %s822 = scalar_lea.hbm %s3, %s821
            %s823 = scalar_lea.vmem [#allocation3], %s808
            // Predicated region
            $region199: #{mlp_forward.1} parent=135 // pred_check
              _
            $region200: #{mlp_forward.1} parent=135 // pred_check_branch
              %825 = sbr.rel target = $region202
            $region201: #{mlp_forward.1} parent=135 // pred_region
              %826 = sst [smem:[#allocation15]] [#allocation78]
              %827 = sst [smem:[#allocation16]] [#allocation77]
            $region202: #{mlp_forward.1} parent=135 // pred_fallthru
              _
            %829 = shalt.err (0)
            %s831 = sshll.u32 %s823, 4
            %s832 = int_to_ptr.vmem [resolvable:$true] %s831
            %834 = dma.hbm_to_vmem [thread:$0]  %s822, 16, %s832, %s592
          $region136: #{mlp_forward.1} parent=130 // loop_footer
            %s566 = sadd.s32 1, %s562
          $region137: #{mlp_forward.1} parent=130 // loop_footer_branch
            %561 = sbr.rel target = $region133
          $region138: #{mlp_forward.1} parent=130 // loop_exit
            _
        $region131: #{mlp_forward.1} parent=43 // pred_fallthru
          _
        %v835 = vld [vmem:[%s544] sm:$0xff]
        %v836 = vld [vmem:[%s544 + $0x8] sm:$0xff]
        %v837 = vld [vmem:[%s544 + $0x10] sm:$0xff]
        %v838 = vld [vmem:[%s544 + $0x18] sm:$0xff]
        %v839 = vld [vmem:[%s544 + $0x20] sm:$0xff]
        %v840 = vld [vmem:[%s544 + $0x28] sm:$0xff]
        %v841 = vld [vmem:[%s544 + $0x30] sm:$0xff]
        %v842 = vld [vmem:[%s544 + $0x38] sm:$0xff]
        %v843 = vld [vmem:[%s544 + $0x40] sm:$0xff]
        %v844 = vld [vmem:[%s544 + $0x48] sm:$0xff]
        %v845 = vld [vmem:[%s544 + $0x50] sm:$0xff]
        %v846 = vld [vmem:[%s544 + $0x58] sm:$0xff]
        %v847 = vld [vmem:[%s544 + $0x60] sm:$0xff]
        %v848 = vld [vmem:[%s544 + $0x68] sm:$0xff]
        %v849 = vld [vmem:[%s544 + $0x70] sm:$0xff]
        %v850 = vld [vmem:[%s544 + $0x78] sm:$0xff]
        %v851 = vld [vmem:[%s544 + $0x80] sm:$0xff]
        %v852 = vld [vmem:[%s544 + $0x88] sm:$0xff]
        %v853 = vld [vmem:[%s544 + $0x90] sm:$0xff]
        %v854 = vld [vmem:[%s544 + $0x98] sm:$0xff]
        %v855 = vld [vmem:[%s544 + $0xa0] sm:$0xff]
        %v856 = vld [vmem:[%s544 + $0xa8] sm:$0xff]
        %v857 = vld [vmem:[%s544 + $0xb0] sm:$0xff]
        %v858 = vld [vmem:[%s544 + $0xb8] sm:$0xff]
        %v859 = vld [vmem:[%s544 + $0xc0] sm:$0xff]
        %v860 = vld [vmem:[%s544 + $0xc8] sm:$0xff]
        %v861 = vld [vmem:[%s544 + $0xd0] sm:$0xff]
        %v862 = vld [vmem:[%s544 + $0xd8] sm:$0xff]
        %v863 = vld [vmem:[%s544 + $0xe0] sm:$0xff]
        %v864 = vld [vmem:[%s544 + $0xe8] sm:$0xff]
        %v865 = vld [vmem:[%s544 + $0xf0] sm:$0xff]
        %v866 = vld [vmem:[%s544 + $0xf8] sm:$0xff]
        %v867 = vld [vmem:[%s549] sm:$0xff]
        %v868 = vld [vmem:[%s549 + $0x8] sm:$0xff]
        %v869 = vld [vmem:[%s549 + $0x10] sm:$0xff]
        %v870 = vld [vmem:[%s549 + $0x18] sm:$0xff]
        %v871 = vld [vmem:[%s549 + $0x20] sm:$0xff]
        %v872 = vld [vmem:[%s549 + $0x28] sm:$0xff]
        %v873 = vld [vmem:[%s549 + $0x30] sm:$0xff]
        %v874 = vld [vmem:[%s549 + $0x38] sm:$0xff]
        %v875 = vld [vmem:[%s549 + $0x40] sm:$0xff]
        %v876 = vld [vmem:[%s549 + $0x48] sm:$0xff]
        %v877 = vld [vmem:[%s549 + $0x50] sm:$0xff]
        %v878 = vld [vmem:[%s549 + $0x58] sm:$0xff]
        %v879 = vld [vmem:[%s549 + $0x60] sm:$0xff]
        %v880 = vld [vmem:[%s549 + $0x68] sm:$0xff]
        %v881 = vld [vmem:[%s549 + $0x70] sm:$0xff]
        %v882 = vld [vmem:[%s549 + $0x78] sm:$0xff]
        %v883 = vld [vmem:[%s549 + $0x80] sm:$0xff]
        %v884 = vld [vmem:[%s549 + $0x88] sm:$0xff]
        %v885 = vld [vmem:[%s549 + $0x90] sm:$0xff]
        %v886 = vld [vmem:[%s549 + $0x98] sm:$0xff]
        %v887 = vld [vmem:[%s549 + $0xa0] sm:$0xff]
        %v888 = vld [vmem:[%s549 + $0xa8] sm:$0xff]
        %v889 = vld [vmem:[%s549 + $0xb0] sm:$0xff]
        %v890 = vld [vmem:[%s549 + $0xb8] sm:$0xff]
        %v891 = vld [vmem:[%s549 + $0xc0] sm:$0xff]
        %v892 = vld [vmem:[%s549 + $0xc8] sm:$0xff]
        %v893 = vld [vmem:[%s549 + $0xd0] sm:$0xff]
        %v894 = vld [vmem:[%s549 + $0xd8] sm:$0xff]
        %v895 = vld [vmem:[%s549 + $0xe0] sm:$0xff]
        %v896 = vld [vmem:[%s549 + $0xe8] sm:$0xff]
        %v897 = vld [vmem:[%s549 + $0xf0] sm:$0xff]
        %v898 = vld [vmem:[%s549 + $0xf8] sm:$0xff]
        %v899 = vld [vmem:[#allocation9] sm:$0xff]
        %v900 = vld [vmem:[#allocation9 + $0x8] sm:$0xff]
        %v901 = vld [vmem:[#allocation9 + $0x10] sm:$0xff]
        %v902 = vld [vmem:[#allocation9 + $0x18] sm:$0xff]
        %v903 = vld [vmem:[#allocation9 + $0x20] sm:$0xff]
        %v904 = vld [vmem:[#allocation9 + $0x28] sm:$0xff]
        %v905 = vld [vmem:[#allocation9 + $0x30] sm:$0xff]
        %v906 = vld [vmem:[#allocation9 + $0x38] sm:$0xff]
        %v907 = vld [vmem:[#allocation9 + $0x40] sm:$0xff]
        %v908 = vld [vmem:[#allocation9 + $0x48] sm:$0xff]
        %v909 = vld [vmem:[#allocation9 + $0x50] sm:$0xff]
        %v910 = vld [vmem:[#allocation9 + $0x58] sm:$0xff]
        %v911 = vld [vmem:[#allocation9 + $0x60] sm:$0xff]
        %v912 = vld [vmem:[#allocation9 + $0x68] sm:$0xff]
        %v913 = vld [vmem:[#allocation9 + $0x70] sm:$0xff]
        %v914 = vld [vmem:[#allocation9 + $0x78] sm:$0xff]
        %v915 = vld [vmem:[#allocation9 + $0x80] sm:$0xff]
        %v916 = vld [vmem:[#allocation9 + $0x88] sm:$0xff]
        %v917 = vld [vmem:[#allocation9 + $0x90] sm:$0xff]
        %v918 = vld [vmem:[#allocation9 + $0x98] sm:$0xff]
        %v919 = vld [vmem:[#allocation9 + $0xa0] sm:$0xff]
        %v920 = vld [vmem:[#allocation9 + $0xa8] sm:$0xff]
        %v921 = vld [vmem:[#allocation9 + $0xb0] sm:$0xff]
        %v922 = vld [vmem:[#allocation9 + $0xb8] sm:$0xff]
        %v923 = vld [vmem:[#allocation9 + $0xc0] sm:$0xff]
        %v924 = vld [vmem:[#allocation9 + $0xc8] sm:$0xff]
        %v925 = vld [vmem:[#allocation9 + $0xd0] sm:$0xff]
        %v926 = vld [vmem:[#allocation9 + $0xd8] sm:$0xff]
        %v927 = vld [vmem:[#allocation9 + $0xe0] sm:$0xff]
        %v928 = vld [vmem:[#allocation9 + $0xe8] sm:$0xff]
        %v929 = vld [vmem:[#allocation9 + $0xf0] sm:$0xff]
        %v930 = vld [vmem:[#allocation9 + $0xf8] sm:$0xff]
        %931 = vmatprep.subr.mxu0 0.0
        %932 = vmatpush1.msra.mxu0 %v930
        %933 = vmatprep.subr.mxu0 0.0
        %934 = vmatpush1.msra.mxu0 %v929
        %935 = vmatprep.subr.mxu0 0.0
        %936 = vmatpush1.msra.mxu0 %v928
        %937 = vmatprep.subr.mxu0 0.0
        %938 = vmatpush1.msra.mxu0 %v927
        %939 = vmatprep.subr.mxu0 0.0
        %940 = vmatpush1.msra.mxu0 %v926
        %941 = vmatprep.subr.mxu0 0.0
        %942 = vmatpush1.msra.mxu0 %v925
        %943 = vmatprep.subr.mxu0 0.0
        %944 = vmatpush1.msra.mxu0 %v924
        %945 = vmatprep.subr.mxu0 0.0
        %946 = vmatpush1.msra.mxu0 %v923
        %947 = vmatprep.subr.mxu0 0.0
        %948 = vmatpush1.msra.mxu0 %v922
        %949 = vmatprep.subr.mxu0 0.0
        %950 = vmatpush1.msra.mxu0 %v921
        %951 = vmatprep.subr.mxu0 0.0
        %952 = vmatpush1.msra.mxu0 %v920
        %953 = vmatprep.subr.mxu0 0.0
        %954 = vmatpush1.msra.mxu0 %v919
        %955 = vmatprep.subr.mxu0 0.0
        %956 = vmatpush1.msra.mxu0 %v918
        %957 = vmatprep.subr.mxu0 0.0
        %958 = vmatpush1.msra.mxu0 %v917
        %959 = vmatprep.subr.mxu0 0.0
        %960 = vmatpush1.msra.mxu0 %v916
        %961 = vmatprep.subr.mxu0 0.0
        %962 = vmatpush1.msra.mxu0 %v915
        %963 = vmatprep.subr.mxu0 0.0
        %964 = vmatpush2.msra.mxu0 0.0
        %965 = vmatprep.subr.mxu0 0.0
        %966 = vmatpush2.msra.mxu0 0.0
        %967 = vmatprep.subr.mxu0 0.0
        %968 = vmatpush2.msra.mxu0 0.0
        %969 = vmatprep.subr.mxu0 0.0
        %970 = vmatpush2.msra.mxu0 0.0
        %971 = vmatprep.subr.mxu0 0.0
        %972 = vmatpush2.msra.mxu0 0.0
        %973 = vmatprep.subr.mxu0 0.0
        %974 = vmatpush2.msra.mxu0 0.0
        %975 = vmatprep.subr.mxu0 0.0
        %976 = vmatpush2.msra.mxu0 0.0
        %977 = vmatprep.subr.mxu0 0.0
        %978 = vmatpush2.msra.mxu0 0.0
        %979 = vmatprep.subr.mxu0 0.0
        %980 = vmatpush2.msra.mxu0 0.0
        %981 = vmatprep.subr.mxu0 0.0
        %982 = vmatpush2.msra.mxu0 0.0
        %983 = vmatprep.subr.mxu0 0.0
        %984 = vmatpush2.msra.mxu0 0.0
        %985 = vmatprep.subr.mxu0 0.0
        %986 = vmatpush2.msra.mxu0 0.0
        %987 = vmatprep.subr.mxu0 0.0
        %988 = vmatpush2.msra.mxu0 0.0
        %989 = vmatprep.subr.mxu0 0.0
        %990 = vmatpush2.msra.mxu0 0.0
        %991 = vmatprep.subr.mxu0 0.0
        %992 = vmatpush2.msra.mxu0 0.0
        %993 = vmatprep.subr.mxu0 0.0
        %994 = vmatpush2.msra.mxu0 0.0
        %995 = vmatprep.mubr.f32.mxu0 0.0
        %996 = vmatmul.mubr.f32.gmra.mxu0 %v867
        %v997 = vpop.f32.mrf.mxu0
        %v998 = vadd.f32 0.0, %v997
        %v999 = vpop.f32.mrf.mxu0
        %1000 = vmatprep.mubr.f32.mxu0 0.0
        %1001 = vmatmul.mubr.f32.gmra.mxu0 %v868
        %v1002 = vpop.f32.mrf.mxu0
        %v1003 = vadd.f32 0.0, %v1002
        %v1004 = vpop.f32.mrf.mxu0
        %1005 = vmatprep.mubr.f32.mxu0 0.0
        %1006 = vmatmul.mubr.f32.gmra.mxu0 %v869
        %v1007 = vpop.f32.mrf.mxu0
        %v1008 = vadd.f32 0.0, %v1007
        %v1009 = vpop.f32.mrf.mxu0
        %1010 = vmatprep.mubr.f32.mxu0 0.0
        %1011 = vmatmul.mubr.f32.gmra.mxu0 %v870
        %v1012 = vpop.f32.mrf.mxu0
        %v1013 = vadd.f32 0.0, %v1012
        %v1014 = vpop.f32.mrf.mxu0
        %1015 = vmatprep.mubr.f32.mxu0 0.0
        %1016 = vmatmul.mubr.f32.gmra.mxu0 %v871
        %v1017 = vpop.f32.mrf.mxu0
        %v1018 = vadd.f32 0.0, %v1017
        %v1019 = vpop.f32.mrf.mxu0
        %1020 = vmatprep.mubr.f32.mxu0 0.0
        %1021 = vmatmul.mubr.f32.gmra.mxu0 %v872
        %v1022 = vpop.f32.mrf.mxu0
        %v1023 = vadd.f32 0.0, %v1022
        %v1024 = vpop.f32.mrf.mxu0
        %1025 = vmatprep.mubr.f32.mxu0 0.0
        %1026 = vmatmul.mubr.f32.gmra.mxu0 %v873
        %v1027 = vpop.f32.mrf.mxu0
        %v1028 = vadd.f32 0.0, %v1027
        %v1029 = vpop.f32.mrf.mxu0
        %1030 = vmatprep.mubr.f32.mxu0 0.0
        %1031 = vmatmul.mubr.f32.gmra.mxu0 %v874
        %v1032 = vpop.f32.mrf.mxu0
        %v1033 = vadd.f32 0.0, %v1032
        %v1034 = vpop.f32.mrf.mxu0
        %1035 = vmatprep.mubr.f32.mxu0 0.0
        %1036 = vmatmul.mubr.f32.gmra.mxu0 %v875
        %v1037 = vpop.f32.mrf.mxu0
        %v1038 = vadd.f32 0.0, %v1037
        %v1039 = vpop.f32.mrf.mxu0
        %1040 = vmatprep.mubr.f32.mxu0 0.0
        %1041 = vmatmul.mubr.f32.gmra.mxu0 %v876
        %v1042 = vpop.f32.mrf.mxu0
        %v1043 = vadd.f32 0.0, %v1042
        %v1044 = vpop.f32.mrf.mxu0
        %1045 = vmatprep.mubr.f32.mxu0 0.0
        %1046 = vmatmul.mubr.f32.gmra.mxu0 %v877
        %v1047 = vpop.f32.mrf.mxu0
        %v1048 = vadd.f32 0.0, %v1047
        %v1049 = vpop.f32.mrf.mxu0
        %1050 = vmatprep.mubr.f32.mxu0 0.0
        %1051 = vmatmul.mubr.f32.gmra.mxu0 %v878
        %v1052 = vpop.f32.mrf.mxu0
        %v1053 = vadd.f32 0.0, %v1052
        %v1054 = vpop.f32.mrf.mxu0
        %1055 = vmatprep.mubr.f32.mxu0 0.0
        %1056 = vmatmul.mubr.f32.gmra.mxu0 %v879
        %v1057 = vpop.f32.mrf.mxu0
        %v1058 = vadd.f32 0.0, %v1057
        %v1059 = vpop.f32.mrf.mxu0
        %1060 = vmatprep.mubr.f32.mxu0 0.0
        %1061 = vmatmul.mubr.f32.gmra.mxu0 %v880
        %v1062 = vpop.f32.mrf.mxu0
        %v1063 = vadd.f32 0.0, %v1062
        %v1064 = vpop.f32.mrf.mxu0
        %1065 = vmatprep.mubr.f32.mxu0 0.0
        %1066 = vmatmul.mubr.f32.gmra.mxu0 %v881
        %v1067 = vpop.f32.mrf.mxu0
        %v1068 = vadd.f32 0.0, %v1067
        %v1069 = vpop.f32.mrf.mxu0
        %1070 = vmatprep.mubr.f32.mxu0 0.0
        %1071 = vmatmul.mubr.f32.gmra.mxu0 %v882
        %v1072 = vpop.f32.mrf.mxu0
        %v1073 = vadd.f32 0.0, %v1072
        %v1074 = vpop.f32.mrf.mxu0
        %1075 = vmatprep.mubr.f32.mxu0 0.0
        %1076 = vmatmul.mubr.f32.gmra.mxu0 %v883
        %v1077 = vpop.f32.mrf.mxu0
        %v1078 = vadd.f32 0.0, %v1077
        %v1079 = vpop.f32.mrf.mxu0
        %1080 = vmatprep.mubr.f32.mxu0 0.0
        %1081 = vmatmul.mubr.f32.gmra.mxu0 %v884
        %v1082 = vpop.f32.mrf.mxu0
        %v1083 = vadd.f32 0.0, %v1082
        %v1084 = vpop.f32.mrf.mxu0
        %1085 = vmatprep.mubr.f32.mxu0 0.0
        %1086 = vmatmul.mubr.f32.gmra.mxu0 %v885
        %v1087 = vpop.f32.mrf.mxu0
        %v1088 = vadd.f32 0.0, %v1087
        %v1089 = vpop.f32.mrf.mxu0
        %1090 = vmatprep.mubr.f32.mxu0 0.0
        %1091 = vmatmul.mubr.f32.gmra.mxu0 %v886
        %v1092 = vpop.f32.mrf.mxu0
        %v1093 = vadd.f32 0.0, %v1092
        %v1094 = vpop.f32.mrf.mxu0
        %1095 = vmatprep.mubr.f32.mxu0 0.0
        %1096 = vmatmul.mubr.f32.gmra.mxu0 %v887
        %v1097 = vpop.f32.mrf.mxu0
        %v1098 = vadd.f32 0.0, %v1097
        %v1099 = vpop.f32.mrf.mxu0
        %1100 = vmatprep.mubr.f32.mxu0 0.0
        %1101 = vmatmul.mubr.f32.gmra.mxu0 %v888
        %v1102 = vpop.f32.mrf.mxu0
        %v1103 = vadd.f32 0.0, %v1102
        %v1104 = vpop.f32.mrf.mxu0
        %1105 = vmatprep.mubr.f32.mxu0 0.0
        %1106 = vmatmul.mubr.f32.gmra.mxu0 %v889
        %v1107 = vpop.f32.mrf.mxu0
        %v1108 = vadd.f32 0.0, %v1107
        %v1109 = vpop.f32.mrf.mxu0
        %1110 = vmatprep.mubr.f32.mxu0 0.0
        %1111 = vmatmul.mubr.f32.gmra.mxu0 %v890
        %v1112 = vpop.f32.mrf.mxu0
        %v1113 = vadd.f32 0.0, %v1112
        %v1114 = vpop.f32.mrf.mxu0
        %1115 = vmatprep.mubr.f32.mxu0 0.0
        %1116 = vmatmul.mubr.f32.gmra.mxu0 %v891
        %v1117 = vpop.f32.mrf.mxu0
        %v1118 = vadd.f32 0.0, %v1117
        %v1119 = vpop.f32.mrf.mxu0
        %1120 = vmatprep.mubr.f32.mxu0 0.0
        %1121 = vmatmul.mubr.f32.gmra.mxu0 %v892
        %v1122 = vpop.f32.mrf.mxu0
        %v1123 = vadd.f32 0.0, %v1122
        %v1124 = vpop.f32.mrf.mxu0
        %1125 = vmatprep.mubr.f32.mxu0 0.0
        %1126 = vmatmul.mubr.f32.gmra.mxu0 %v893
        %v1127 = vpop.f32.mrf.mxu0
        %v1128 = vadd.f32 0.0, %v1127
        %v1129 = vpop.f32.mrf.mxu0
        %1130 = vmatprep.mubr.f32.mxu0 0.0
        %1131 = vmatmul.mubr.f32.gmra.mxu0 %v894
        %v1132 = vpop.f32.mrf.mxu0
        %v1133 = vadd.f32 0.0, %v1132
        %v1134 = vpop.f32.mrf.mxu0
        %1135 = vmatprep.mubr.f32.mxu0 0.0
        %1136 = vmatmul.mubr.f32.gmra.mxu0 %v895
        %v1137 = vpop.f32.mrf.mxu0
        %v1138 = vadd.f32 0.0, %v1137
        %v1139 = vpop.f32.mrf.mxu0
        %1140 = vmatprep.mubr.f32.mxu0 0.0
        %1141 = vmatmul.mubr.f32.gmra.mxu0 %v896
        %v1142 = vpop.f32.mrf.mxu0
        %v1143 = vadd.f32 0.0, %v1142
        %v1144 = vpop.f32.mrf.mxu0
        %1145 = vmatprep.mubr.f32.mxu0 0.0
        %1146 = vmatmul.mubr.f32.gmra.mxu0 %v897
        %v1147 = vpop.f32.mrf.mxu0
        %v1148 = vadd.f32 0.0, %v1147
        %v1149 = vpop.f32.mrf.mxu0
        %1150 = vmatprep.mubr.f32.mxu0 0.0
        %1151 = vmatmul.mubr.f32.gmra.mxu0 %v898
        %v1152 = vpop.f32.mrf.mxu0
        %v1153 = vadd.f32 0.0, %v1152
        %v1154 = vpop.f32.mrf.mxu0
        %1155 = vdwg.mxu0
        %1156 = vmatprep.subr.mxu0 0.0
        %1157 = vmatpush1.msra.mxu0 %v914
        %1158 = vmatprep.subr.mxu0 0.0
        %1159 = vmatpush1.msra.mxu0 %v913
        %1160 = vmatprep.subr.mxu0 0.0
        %1161 = vmatpush1.msra.mxu0 %v912
        %1162 = vmatprep.subr.mxu0 0.0
        %1163 = vmatpush1.msra.mxu0 %v911
        %1164 = vmatprep.subr.mxu0 0.0
        %1165 = vmatpush1.msra.mxu0 %v910
        %1166 = vmatprep.subr.mxu0 0.0
        %1167 = vmatpush1.msra.mxu0 %v909
        %1168 = vmatprep.subr.mxu0 0.0
        %1169 = vmatpush1.msra.mxu0 %v908
        %1170 = vmatprep.subr.mxu0 0.0
        %1171 = vmatpush1.msra.mxu0 %v907
        %1172 = vmatprep.subr.mxu0 0.0
        %1173 = vmatpush1.msra.mxu0 %v906
        %1174 = vmatprep.subr.mxu0 0.0
        %1175 = vmatpush1.msra.mxu0 %v905
        %1176 = vmatprep.subr.mxu0 0.0
        %1177 = vmatpush1.msra.mxu0 %v904
        %1178 = vmatprep.subr.mxu0 0.0
        %1179 = vmatpush1.msra.mxu0 %v903
        %1180 = vmatprep.subr.mxu0 0.0
        %1181 = vmatpush1.msra.mxu0 %v902
        %1182 = vmatprep.subr.mxu0 0.0
        %1183 = vmatpush1.msra.mxu0 %v901
        %1184 = vmatprep.subr.mxu0 0.0
        %1185 = vmatpush1.msra.mxu0 %v900
        %1186 = vmatprep.subr.mxu0 0.0
        %1187 = vmatpush1.msra.mxu0 %v899
        %1188 = vmatprep.subr.mxu0 0.0
        %1189 = vmatpush2.msra.mxu0 0.0
        %1190 = vmatprep.subr.mxu0 0.0
        %1191 = vmatpush2.msra.mxu0 0.0
        %1192 = vmatprep.subr.mxu0 0.0
        %1193 = vmatpush2.msra.mxu0 0.0
        %1194 = vmatprep.subr.mxu0 0.0
        %1195 = vmatpush2.msra.mxu0 0.0
        %1196 = vmatprep.subr.mxu0 0.0
        %1197 = vmatpush2.msra.mxu0 0.0
        %1198 = vmatprep.subr.mxu0 0.0
        %1199 = vmatpush2.msra.mxu0 0.0
        %1200 = vmatprep.subr.mxu0 0.0
        %1201 = vmatpush2.msra.mxu0 0.0
        %1202 = vmatprep.subr.mxu0 0.0
        %1203 = vmatpush2.msra.mxu0 0.0
        %1204 = vmatprep.subr.mxu0 0.0
        %1205 = vmatpush2.msra.mxu0 0.0
        %1206 = vmatprep.subr.mxu0 0.0
        %1207 = vmatpush2.msra.mxu0 0.0
        %1208 = vmatprep.subr.mxu0 0.0
        %1209 = vmatpush2.msra.mxu0 0.0
        %1210 = vmatprep.subr.mxu0 0.0
        %1211 = vmatpush2.msra.mxu0 0.0
        %1212 = vmatprep.subr.mxu0 0.0
        %1213 = vmatpush2.msra.mxu0 0.0
        %1214 = vmatprep.subr.mxu0 0.0
        %1215 = vmatpush2.msra.mxu0 0.0
        %1216 = vmatprep.subr.mxu0 0.0
        %1217 = vmatpush2.msra.mxu0 0.0
        %1218 = vmatprep.subr.mxu0 0.0
        %1219 = vmatpush2.msra.mxu0 0.0
        %1220 = vmatprep.mubr.f32.mxu0 0.0
        %1221 = vmatmul.mubr.f32.gmra.mxu0 %v835
        %v1222 = vpop.f32.mrf.mxu0
        %v1223 = vadd.f32 %v998, %v1222
        %v1224 = vpop.f32.mrf.mxu0
        %1225 = vmatprep.mubr.f32.mxu0 0.0
        %1226 = vmatmul.mubr.f32.gmra.mxu0 %v836
        %v1227 = vpop.f32.mrf.mxu0
        %v1228 = vadd.f32 %v1003, %v1227
        %v1229 = vpop.f32.mrf.mxu0
        %1230 = vmatprep.mubr.f32.mxu0 0.0
        %1231 = vmatmul.mubr.f32.gmra.mxu0 %v837
        %v1232 = vpop.f32.mrf.mxu0
        %v1233 = vadd.f32 %v1008, %v1232
        %v1234 = vpop.f32.mrf.mxu0
        %1235 = vmatprep.mubr.f32.mxu0 0.0
        %1236 = vmatmul.mubr.f32.gmra.mxu0 %v838
        %v1237 = vpop.f32.mrf.mxu0
        %v1238 = vadd.f32 %v1013, %v1237
        %v1239 = vpop.f32.mrf.mxu0
        %1240 = vmatprep.mubr.f32.mxu0 0.0
        %1241 = vmatmul.mubr.f32.gmra.mxu0 %v839
        %v1242 = vpop.f32.mrf.mxu0
        %v1243 = vadd.f32 %v1018, %v1242
        %v1244 = vpop.f32.mrf.mxu0
        %1245 = vmatprep.mubr.f32.mxu0 0.0
        %1246 = vmatmul.mubr.f32.gmra.mxu0 %v840
        %v1247 = vpop.f32.mrf.mxu0
        %v1248 = vadd.f32 %v1023, %v1247
        %v1249 = vpop.f32.mrf.mxu0
        %1250 = vmatprep.mubr.f32.mxu0 0.0
        %1251 = vmatmul.mubr.f32.gmra.mxu0 %v841
        %v1252 = vpop.f32.mrf.mxu0
        %v1253 = vadd.f32 %v1028, %v1252
        %v1254 = vpop.f32.mrf.mxu0
        %1255 = vmatprep.mubr.f32.mxu0 0.0
        %1256 = vmatmul.mubr.f32.gmra.mxu0 %v842
        %v1257 = vpop.f32.mrf.mxu0
        %v1258 = vadd.f32 %v1033, %v1257
        %v1259 = vpop.f32.mrf.mxu0
        %1260 = vmatprep.mubr.f32.mxu0 0.0
        %1261 = vmatmul.mubr.f32.gmra.mxu0 %v843
        %v1262 = vpop.f32.mrf.mxu0
        %v1263 = vadd.f32 %v1038, %v1262
        %v1264 = vpop.f32.mrf.mxu0
        %1265 = vmatprep.mubr.f32.mxu0 0.0
        %1266 = vmatmul.mubr.f32.gmra.mxu0 %v844
        %v1267 = vpop.f32.mrf.mxu0
        %v1268 = vadd.f32 %v1043, %v1267
        %v1269 = vpop.f32.mrf.mxu0
        %1270 = vmatprep.mubr.f32.mxu0 0.0
        %1271 = vmatmul.mubr.f32.gmra.mxu0 %v845
        %v1272 = vpop.f32.mrf.mxu0
        %v1273 = vadd.f32 %v1048, %v1272
        %v1274 = vpop.f32.mrf.mxu0
        %1275 = vmatprep.mubr.f32.mxu0 0.0
        %1276 = vmatmul.mubr.f32.gmra.mxu0 %v846
        %v1277 = vpop.f32.mrf.mxu0
        %v1278 = vadd.f32 %v1053, %v1277
        %v1279 = vpop.f32.mrf.mxu0
        %1280 = vmatprep.mubr.f32.mxu0 0.0
        %1281 = vmatmul.mubr.f32.gmra.mxu0 %v847
        %v1282 = vpop.f32.mrf.mxu0
        %v1283 = vadd.f32 %v1058, %v1282
        %v1284 = vpop.f32.mrf.mxu0
        %1285 = vmatprep.mubr.f32.mxu0 0.0
        %1286 = vmatmul.mubr.f32.gmra.mxu0 %v848
        %v1287 = vpop.f32.mrf.mxu0
        %v1288 = vadd.f32 %v1063, %v1287
        %v1289 = vpop.f32.mrf.mxu0
        %1290 = vmatprep.mubr.f32.mxu0 0.0
        %1291 = vmatmul.mubr.f32.gmra.mxu0 %v849
        %v1292 = vpop.f32.mrf.mxu0
        %v1293 = vadd.f32 %v1068, %v1292
        %v1294 = vpop.f32.mrf.mxu0
        %1295 = vmatprep.mubr.f32.mxu0 0.0
        %1296 = vmatmul.mubr.f32.gmra.mxu0 %v850
        %v1297 = vpop.f32.mrf.mxu0
        %v1298 = vadd.f32 %v1073, %v1297
        %v1299 = vpop.f32.mrf.mxu0
        %1300 = vmatprep.mubr.f32.mxu0 0.0
        %1301 = vmatmul.mubr.f32.gmra.mxu0 %v851
        %v1302 = vpop.f32.mrf.mxu0
        %v1303 = vadd.f32 %v1078, %v1302
        %v1304 = vpop.f32.mrf.mxu0
        %1305 = vmatprep.mubr.f32.mxu0 0.0
        %1306 = vmatmul.mubr.f32.gmra.mxu0 %v852
        %v1307 = vpop.f32.mrf.mxu0
        %v1308 = vadd.f32 %v1083, %v1307
        %v1309 = vpop.f32.mrf.mxu0
        %1310 = vmatprep.mubr.f32.mxu0 0.0
        %1311 = vmatmul.mubr.f32.gmra.mxu0 %v853
        %v1312 = vpop.f32.mrf.mxu0
        %v1313 = vadd.f32 %v1088, %v1312
        %v1314 = vpop.f32.mrf.mxu0
        %1315 = vmatprep.mubr.f32.mxu0 0.0
        %1316 = vmatmul.mubr.f32.gmra.mxu0 %v854
        %v1317 = vpop.f32.mrf.mxu0
        %v1318 = vadd.f32 %v1093, %v1317
        %v1319 = vpop.f32.mrf.mxu0
        %1320 = vmatprep.mubr.f32.mxu0 0.0
        %1321 = vmatmul.mubr.f32.gmra.mxu0 %v855
        %v1322 = vpop.f32.mrf.mxu0
        %v1323 = vadd.f32 %v1098, %v1322
        %v1324 = vpop.f32.mrf.mxu0
        %1325 = vmatprep.mubr.f32.mxu0 0.0
        %1326 = vmatmul.mubr.f32.gmra.mxu0 %v856
        %v1327 = vpop.f32.mrf.mxu0
        %v1328 = vadd.f32 %v1103, %v1327
        %v1329 = vpop.f32.mrf.mxu0
        %1330 = vmatprep.mubr.f32.mxu0 0.0
        %1331 = vmatmul.mubr.f32.gmra.mxu0 %v857
        %v1332 = vpop.f32.mrf.mxu0
        %v1333 = vadd.f32 %v1108, %v1332
        %v1334 = vpop.f32.mrf.mxu0
        %1335 = vmatprep.mubr.f32.mxu0 0.0
        %1336 = vmatmul.mubr.f32.gmra.mxu0 %v858
        %v1337 = vpop.f32.mrf.mxu0
        %v1338 = vadd.f32 %v1113, %v1337
        %v1339 = vpop.f32.mrf.mxu0
        %1340 = vmatprep.mubr.f32.mxu0 0.0
        %1341 = vmatmul.mubr.f32.gmra.mxu0 %v859
        %v1342 = vpop.f32.mrf.mxu0
        %v1343 = vadd.f32 %v1118, %v1342
        %v1344 = vpop.f32.mrf.mxu0
        %1345 = vmatprep.mubr.f32.mxu0 0.0
        %1346 = vmatmul.mubr.f32.gmra.mxu0 %v860
        %v1347 = vpop.f32.mrf.mxu0
        %v1348 = vadd.f32 %v1123, %v1347
        %v1349 = vpop.f32.mrf.mxu0
        %1350 = vmatprep.mubr.f32.mxu0 0.0
        %1351 = vmatmul.mubr.f32.gmra.mxu0 %v861
        %v1352 = vpop.f32.mrf.mxu0
        %v1353 = vadd.f32 %v1128, %v1352
        %v1354 = vpop.f32.mrf.mxu0
        %1355 = vmatprep.mubr.f32.mxu0 0.0
        %1356 = vmatmul.mubr.f32.gmra.mxu0 %v862
        %v1357 = vpop.f32.mrf.mxu0
        %v1358 = vadd.f32 %v1133, %v1357
        %v1359 = vpop.f32.mrf.mxu0
        %1360 = vmatprep.mubr.f32.mxu0 0.0
        %1361 = vmatmul.mubr.f32.gmra.mxu0 %v863
        %v1362 = vpop.f32.mrf.mxu0
        %v1363 = vadd.f32 %v1138, %v1362
        %v1364 = vpop.f32.mrf.mxu0
        %1365 = vmatprep.mubr.f32.mxu0 0.0
        %1366 = vmatmul.mubr.f32.gmra.mxu0 %v864
        %v1367 = vpop.f32.mrf.mxu0
        %v1368 = vadd.f32 %v1143, %v1367
        %v1369 = vpop.f32.mrf.mxu0
        %1370 = vmatprep.mubr.f32.mxu0 0.0
        %1371 = vmatmul.mubr.f32.gmra.mxu0 %v865
        %v1372 = vpop.f32.mrf.mxu0
        %v1373 = vadd.f32 %v1148, %v1372
        %v1374 = vpop.f32.mrf.mxu0
        %1375 = vmatprep.mubr.f32.mxu0 0.0
        %1376 = vmatmul.mubr.f32.gmra.mxu0 %v866
        %v1377 = vpop.f32.mrf.mxu0
        %v1378 = vadd.f32 %v1153, %v1377
        %v1379 = vpop.f32.mrf.mxu0
        %1380 = vdwg.mxu0
        %v1381 = vld [vmem:[%s5] sm:$0x1]
        %v1383 = vlaneseq
        %v1384 = vshrl.u32 %v1383, 7
        %v1385 = vsub.s32 0, %v1384
        %v1386 = vrot.slane %v1381, %v1385
        %v1388 = vadd.f32 %v1223, %v1386
        %v1389 = vadd.f32 %v1228, %v1386
        %v1390 = vadd.f32 %v1233, %v1386
        %v1391 = vadd.f32 %v1238, %v1386
        %v1392 = vadd.f32 %v1243, %v1386
        %v1393 = vadd.f32 %v1248, %v1386
        %v1394 = vadd.f32 %v1253, %v1386
        %v1395 = vadd.f32 %v1258, %v1386
        %v1396 = vadd.f32 %v1263, %v1386
        %v1397 = vadd.f32 %v1268, %v1386
        %v1398 = vadd.f32 %v1273, %v1386
        %v1399 = vadd.f32 %v1278, %v1386
        %v1400 = vadd.f32 %v1283, %v1386
        %v1401 = vadd.f32 %v1288, %v1386
        %v1402 = vadd.f32 %v1293, %v1386
        %v1403 = vadd.f32 %v1298, %v1386
        %v1404 = vadd.f32 %v1303, %v1386
        %v1405 = vadd.f32 %v1308, %v1386
        %v1406 = vadd.f32 %v1313, %v1386
        %v1407 = vadd.f32 %v1318, %v1386
        %v1408 = vadd.f32 %v1323, %v1386
        %v1409 = vadd.f32 %v1328, %v1386
        %v1410 = vadd.f32 %v1333, %v1386
        %v1411 = vadd.f32 %v1338, %v1386
        %v1412 = vadd.f32 %v1343, %v1386
        %v1413 = vadd.f32 %v1348, %v1386
        %v1414 = vadd.f32 %v1353, %v1386
        %v1415 = vadd.f32 %v1358, %v1386
        %v1416 = vadd.f32 %v1363, %v1386
        %v1417 = vadd.f32 %v1368, %v1386
        %v1418 = vadd.f32 %v1373, %v1386
        %v1419 = vadd.f32 %v1378, %v1386
        %v1420 = vmax.f32 %v1388, 0.0
        %v1421 = vmax.f32 %v1389, 0.0
        %v1422 = vmax.f32 %v1390, 0.0
        %v1423 = vmax.f32 %v1391, 0.0
        %v1424 = vmax.f32 %v1392, 0.0
        %v1425 = vmax.f32 %v1393, 0.0
        %v1426 = vmax.f32 %v1394, 0.0
        %v1427 = vmax.f32 %v1395, 0.0
        %v1428 = vmax.f32 %v1396, 0.0
        %v1429 = vmax.f32 %v1397, 0.0
        %v1430 = vmax.f32 %v1398, 0.0
        %v1431 = vmax.f32 %v1399, 0.0
        %v1432 = vmax.f32 %v1400, 0.0
        %v1433 = vmax.f32 %v1401, 0.0
        %v1434 = vmax.f32 %v1402, 0.0
        %v1435 = vmax.f32 %v1403, 0.0
        %v1436 = vmax.f32 %v1404, 0.0
        %v1437 = vmax.f32 %v1405, 0.0
        %v1438 = vmax.f32 %v1406, 0.0
        %v1439 = vmax.f32 %v1407, 0.0
        %v1440 = vmax.f32 %v1408, 0.0
        %v1441 = vmax.f32 %v1409, 0.0
        %v1442 = vmax.f32 %v1410, 0.0
        %v1443 = vmax.f32 %v1411, 0.0
        %v1444 = vmax.f32 %v1412, 0.0
        %v1445 = vmax.f32 %v1413, 0.0
        %v1446 = vmax.f32 %v1414, 0.0
        %v1447 = vmax.f32 %v1415, 0.0
        %v1448 = vmax.f32 %v1416, 0.0
        %v1449 = vmax.f32 %v1417, 0.0
        %v1450 = vmax.f32 %v1418, 0.0
        %v1451 = vmax.f32 %v1419, 0.0
        %v1452 = vld [vmem:[#allocation11] sm:$0xff]
        %v1453 = vld [vmem:[#allocation11 + $0x8] sm:$0xff]
        %v1454 = vld [vmem:[#allocation11 + $0x10] sm:$0xff]
        %v1455 = vld [vmem:[#allocation11 + $0x18] sm:$0xff]
        %v1456 = vld [vmem:[#allocation11 + $0x20] sm:$0xff]
        %v1457 = vld [vmem:[#allocation11 + $0x28] sm:$0xff]
        %v1458 = vld [vmem:[#allocation11 + $0x30] sm:$0xff]
        %v1459 = vld [vmem:[#allocation11 + $0x38] sm:$0xff]
        %v1460 = vld [vmem:[#allocation11 + $0x40] sm:$0xff]
        %v1461 = vld [vmem:[#allocation11 + $0x48] sm:$0xff]
        %v1462 = vld [vmem:[#allocation11 + $0x50] sm:$0xff]
        %v1463 = vld [vmem:[#allocation11 + $0x58] sm:$0xff]
        %v1464 = vld [vmem:[#allocation11 + $0x60] sm:$0xff]
        %v1465 = vld [vmem:[#allocation11 + $0x68] sm:$0xff]
        %v1466 = vld [vmem:[#allocation11 + $0x70] sm:$0xff]
        %v1467 = vld [vmem:[#allocation11 + $0x78] sm:$0xff]
        %v1468 = vld [vmem:[%s7] sm:$0x1]
        %v1470 = vlaneseq
        %v1471 = vshrl.u32 %v1470, 7
        %v1472 = vsub.s32 0, %v1471
        %v1473 = vrot.slane %v1468, %v1472
        %1475 = vmatprep.subr.mxu0 0.0
        %1476 = vmatpush1.msra.mxu0 %v1467
        %1477 = vmatprep.subr.mxu0 0.0
        %1478 = vmatpush1.msra.mxu0 %v1466
        %1479 = vmatprep.subr.mxu0 0.0
        %1480 = vmatpush1.msra.mxu0 %v1465
        %1481 = vmatprep.subr.mxu0 0.0
        %1482 = vmatpush1.msra.mxu0 %v1464
        %1483 = vmatprep.subr.mxu0 0.0
        %1484 = vmatpush1.msra.mxu0 %v1463
        %1485 = vmatprep.subr.mxu0 0.0
        %1486 = vmatpush1.msra.mxu0 %v1462
        %1487 = vmatprep.subr.mxu0 0.0
        %1488 = vmatpush1.msra.mxu0 %v1461
        %1489 = vmatprep.subr.mxu0 0.0
        %1490 = vmatpush1.msra.mxu0 %v1460
        %1491 = vmatprep.subr.mxu0 0.0
        %1492 = vmatpush1.msra.mxu0 %v1459
        %1493 = vmatprep.subr.mxu0 0.0
        %1494 = vmatpush1.msra.mxu0 %v1458
        %1495 = vmatprep.subr.mxu0 0.0
        %1496 = vmatpush1.msra.mxu0 %v1457
        %1497 = vmatprep.subr.mxu0 0.0
        %1498 = vmatpush1.msra.mxu0 %v1456
        %1499 = vmatprep.subr.mxu0 0.0
        %1500 = vmatpush1.msra.mxu0 %v1455
        %1501 = vmatprep.subr.mxu0 0.0
        %1502 = vmatpush1.msra.mxu0 %v1454
        %1503 = vmatprep.subr.mxu0 0.0
        %1504 = vmatpush1.msra.mxu0 %v1453
        %1505 = vmatprep.subr.mxu0 0.0
        %1506 = vmatpush1.msra.mxu0 %v1452
        %1507 = vmatprep.subr.mxu0 0.0
        %1508 = vmatpush2.msra.mxu0 0.0
        %1509 = vmatprep.subr.mxu0 0.0
        %1510 = vmatpush2.msra.mxu0 0.0
        %1511 = vmatprep.subr.mxu0 0.0
        %1512 = vmatpush2.msra.mxu0 0.0
        %1513 = vmatprep.subr.mxu0 0.0
        %1514 = vmatpush2.msra.mxu0 0.0
        %1515 = vmatprep.subr.mxu0 0.0
        %1516 = vmatpush2.msra.mxu0 0.0
        %1517 = vmatprep.subr.mxu0 0.0
        %1518 = vmatpush2.msra.mxu0 0.0
        %1519 = vmatprep.subr.mxu0 0.0
        %1520 = vmatpush2.msra.mxu0 0.0
        %1521 = vmatprep.subr.mxu0 0.0
        %1522 = vmatpush2.msra.mxu0 0.0
        %1523 = vmatprep.subr.mxu0 0.0
        %1524 = vmatpush2.msra.mxu0 0.0
        %1525 = vmatprep.subr.mxu0 0.0
        %1526 = vmatpush2.msra.mxu0 0.0
        %1527 = vmatprep.subr.mxu0 0.0
        %1528 = vmatpush2.msra.mxu0 0.0
        %1529 = vmatprep.subr.mxu0 0.0
        %1530 = vmatpush2.msra.mxu0 0.0
        %1531 = vmatprep.subr.mxu0 0.0
        %1532 = vmatpush2.msra.mxu0 0.0
        %1533 = vmatprep.subr.mxu0 0.0
        %1534 = vmatpush2.msra.mxu0 0.0
        %1535 = vmatprep.subr.mxu0 0.0
        %1536 = vmatpush2.msra.mxu0 0.0
        %1537 = vmatprep.subr.mxu0 0.0
        %1538 = vmatpush2.msra.mxu0 0.0
        %1539 = vmatprep.mubr.f32.mxu0 0.0
        %1540 = vmatmul.mubr.f32.gmra.mxu0 %v1420
        %v1541 = vpop.f32.mrf.mxu0
        %v1542 = vadd.f32 %v1473, %v1541
        %v1543 = vpop.f32.mrf.mxu0
        %1544 = vmatprep.mubr.f32.mxu0 0.0
        %1545 = vmatmul.mubr.f32.gmra.mxu0 %v1421
        %v1546 = vpop.f32.mrf.mxu0
        %v1547 = vadd.f32 %v1473, %v1546
        %v1548 = vpop.f32.mrf.mxu0
        %1549 = vmatprep.mubr.f32.mxu0 0.0
        %1550 = vmatmul.mubr.f32.gmra.mxu0 %v1422
        %v1551 = vpop.f32.mrf.mxu0
        %v1552 = vadd.f32 %v1473, %v1551
        %v1553 = vpop.f32.mrf.mxu0
        %1554 = vmatprep.mubr.f32.mxu0 0.0
        %1555 = vmatmul.mubr.f32.gmra.mxu0 %v1423
        %v1556 = vpop.f32.mrf.mxu0
        %v1557 = vadd.f32 %v1473, %v1556
        %v1558 = vpop.f32.mrf.mxu0
        %1559 = vmatprep.mubr.f32.mxu0 0.0
        %1560 = vmatmul.mubr.f32.gmra.mxu0 %v1424
        %v1561 = vpop.f32.mrf.mxu0
        %v1562 = vadd.f32 %v1473, %v1561
        %v1563 = vpop.f32.mrf.mxu0
        %1564 = vmatprep.mubr.f32.mxu0 0.0
        %1565 = vmatmul.mubr.f32.gmra.mxu0 %v1425
        %v1566 = vpop.f32.mrf.mxu0
        %v1567 = vadd.f32 %v1473, %v1566
        %v1568 = vpop.f32.mrf.mxu0
        %1569 = vmatprep.mubr.f32.mxu0 0.0
        %1570 = vmatmul.mubr.f32.gmra.mxu0 %v1426
        %v1571 = vpop.f32.mrf.mxu0
        %v1572 = vadd.f32 %v1473, %v1571
        %v1573 = vpop.f32.mrf.mxu0
        %1574 = vmatprep.mubr.f32.mxu0 0.0
        %1575 = vmatmul.mubr.f32.gmra.mxu0 %v1427
        %v1576 = vpop.f32.mrf.mxu0
        %v1577 = vadd.f32 %v1473, %v1576
        %v1578 = vpop.f32.mrf.mxu0
        %1579 = vmatprep.mubr.f32.mxu0 0.0
        %1580 = vmatmul.mubr.f32.gmra.mxu0 %v1428
        %v1581 = vpop.f32.mrf.mxu0
        %v1582 = vadd.f32 %v1473, %v1581
        %v1583 = vpop.f32.mrf.mxu0
        %1584 = vmatprep.mubr.f32.mxu0 0.0
        %1585 = vmatmul.mubr.f32.gmra.mxu0 %v1429
        %v1586 = vpop.f32.mrf.mxu0
        %v1587 = vadd.f32 %v1473, %v1586
        %v1588 = vpop.f32.mrf.mxu0
        %1589 = vmatprep.mubr.f32.mxu0 0.0
        %1590 = vmatmul.mubr.f32.gmra.mxu0 %v1430
        %v1591 = vpop.f32.mrf.mxu0
        %v1592 = vadd.f32 %v1473, %v1591
        %v1593 = vpop.f32.mrf.mxu0
        %1594 = vmatprep.mubr.f32.mxu0 0.0
        %1595 = vmatmul.mubr.f32.gmra.mxu0 %v1431
        %v1596 = vpop.f32.mrf.mxu0
        %v1597 = vadd.f32 %v1473, %v1596
        %v1598 = vpop.f32.mrf.mxu0
        %1599 = vmatprep.mubr.f32.mxu0 0.0
        %1600 = vmatmul.mubr.f32.gmra.mxu0 %v1432
        %v1601 = vpop.f32.mrf.mxu0
        %v1602 = vadd.f32 %v1473, %v1601
        %v1603 = vpop.f32.mrf.mxu0
        %1604 = vmatprep.mubr.f32.mxu0 0.0
        %1605 = vmatmul.mubr.f32.gmra.mxu0 %v1433
        %v1606 = vpop.f32.mrf.mxu0
        %v1607 = vadd.f32 %v1473, %v1606
        %v1608 = vpop.f32.mrf.mxu0
        %1609 = vmatprep.mubr.f32.mxu0 0.0
        %1610 = vmatmul.mubr.f32.gmra.mxu0 %v1434
        %v1611 = vpop.f32.mrf.mxu0
        %v1612 = vadd.f32 %v1473, %v1611
        %v1613 = vpop.f32.mrf.mxu0
        %1614 = vmatprep.mubr.f32.mxu0 0.0
        %1615 = vmatmul.mubr.f32.gmra.mxu0 %v1435
        %v1616 = vpop.f32.mrf.mxu0
        %v1617 = vadd.f32 %v1473, %v1616
        %v1618 = vpop.f32.mrf.mxu0
        %1619 = vmatprep.mubr.f32.mxu0 0.0
        %1620 = vmatmul.mubr.f32.gmra.mxu0 %v1436
        %v1621 = vpop.f32.mrf.mxu0
        %v1622 = vadd.f32 %v1473, %v1621
        %v1623 = vpop.f32.mrf.mxu0
        %1624 = vmatprep.mubr.f32.mxu0 0.0
        %1625 = vmatmul.mubr.f32.gmra.mxu0 %v1437
        %v1626 = vpop.f32.mrf.mxu0
        %v1627 = vadd.f32 %v1473, %v1626
        %v1628 = vpop.f32.mrf.mxu0
        %1629 = vmatprep.mubr.f32.mxu0 0.0
        %1630 = vmatmul.mubr.f32.gmra.mxu0 %v1438
        %v1631 = vpop.f32.mrf.mxu0
        %v1632 = vadd.f32 %v1473, %v1631
        %v1633 = vpop.f32.mrf.mxu0
        %1634 = vmatprep.mubr.f32.mxu0 0.0
        %1635 = vmatmul.mubr.f32.gmra.mxu0 %v1439
        %v1636 = vpop.f32.mrf.mxu0
        %v1637 = vadd.f32 %v1473, %v1636
        %v1638 = vpop.f32.mrf.mxu0
        %1639 = vmatprep.mubr.f32.mxu0 0.0
        %1640 = vmatmul.mubr.f32.gmra.mxu0 %v1440
        %v1641 = vpop.f32.mrf.mxu0
        %v1642 = vadd.f32 %v1473, %v1641
        %v1643 = vpop.f32.mrf.mxu0
        %1644 = vmatprep.mubr.f32.mxu0 0.0
        %1645 = vmatmul.mubr.f32.gmra.mxu0 %v1441
        %v1646 = vpop.f32.mrf.mxu0
        %v1647 = vadd.f32 %v1473, %v1646
        %v1648 = vpop.f32.mrf.mxu0
        %1649 = vmatprep.mubr.f32.mxu0 0.0
        %1650 = vmatmul.mubr.f32.gmra.mxu0 %v1442
        %v1651 = vpop.f32.mrf.mxu0
        %v1652 = vadd.f32 %v1473, %v1651
        %v1653 = vpop.f32.mrf.mxu0
        %1654 = vmatprep.mubr.f32.mxu0 0.0
        %1655 = vmatmul.mubr.f32.gmra.mxu0 %v1443
        %v1656 = vpop.f32.mrf.mxu0
        %v1657 = vadd.f32 %v1473, %v1656
        %v1658 = vpop.f32.mrf.mxu0
        %1659 = vmatprep.mubr.f32.mxu0 0.0
        %1660 = vmatmul.mubr.f32.gmra.mxu0 %v1444
        %v1661 = vpop.f32.mrf.mxu0
        %v1662 = vadd.f32 %v1473, %v1661
        %v1663 = vpop.f32.mrf.mxu0
        %1664 = vmatprep.mubr.f32.mxu0 0.0
        %1665 = vmatmul.mubr.f32.gmra.mxu0 %v1445
        %v1666 = vpop.f32.mrf.mxu0
        %v1667 = vadd.f32 %v1473, %v1666
        %v1668 = vpop.f32.mrf.mxu0
        %1669 = vmatprep.mubr.f32.mxu0 0.0
        %1670 = vmatmul.mubr.f32.gmra.mxu0 %v1446
        %v1671 = vpop.f32.mrf.mxu0
        %v1672 = vadd.f32 %v1473, %v1671
        %v1673 = vpop.f32.mrf.mxu0
        %1674 = vmatprep.mubr.f32.mxu0 0.0
        %1675 = vmatmul.mubr.f32.gmra.mxu0 %v1447
        %v1676 = vpop.f32.mrf.mxu0
        %v1677 = vadd.f32 %v1473, %v1676
        %v1678 = vpop.f32.mrf.mxu0
        %1679 = vmatprep.mubr.f32.mxu0 0.0
        %1680 = vmatmul.mubr.f32.gmra.mxu0 %v1448
        %v1681 = vpop.f32.mrf.mxu0
        %v1682 = vadd.f32 %v1473, %v1681
        %v1683 = vpop.f32.mrf.mxu0
        %1684 = vmatprep.mubr.f32.mxu0 0.0
        %1685 = vmatmul.mubr.f32.gmra.mxu0 %v1449
        %v1686 = vpop.f32.mrf.mxu0
        %v1687 = vadd.f32 %v1473, %v1686
        %v1688 = vpop.f32.mrf.mxu0
        %1689 = vmatprep.mubr.f32.mxu0 0.0
        %1690 = vmatmul.mubr.f32.gmra.mxu0 %v1450
        %v1691 = vpop.f32.mrf.mxu0
        %v1692 = vadd.f32 %v1473, %v1691
        %v1693 = vpop.f32.mrf.mxu0
        %1694 = vmatprep.mubr.f32.mxu0 0.0
        %1695 = vmatmul.mubr.f32.gmra.mxu0 %v1451
        %v1696 = vpop.f32.mrf.mxu0
        %v1697 = vadd.f32 %v1473, %v1696
        %v1698 = vpop.f32.mrf.mxu0
        %1699 = vdwg.mxu0
        %v1700 = vmax.f32 %v1542, 0.0
        %v1701 = vmax.f32 %v1547, 0.0
        %v1702 = vmax.f32 %v1552, 0.0
        %v1703 = vmax.f32 %v1557, 0.0
        %v1704 = vmax.f32 %v1562, 0.0
        %v1705 = vmax.f32 %v1567, 0.0
        %v1706 = vmax.f32 %v1572, 0.0
        %v1707 = vmax.f32 %v1577, 0.0
        %v1708 = vmax.f32 %v1582, 0.0
        %v1709 = vmax.f32 %v1587, 0.0
        %v1710 = vmax.f32 %v1592, 0.0
        %v1711 = vmax.f32 %v1597, 0.0
        %v1712 = vmax.f32 %v1602, 0.0
        %v1713 = vmax.f32 %v1607, 0.0
        %v1714 = vmax.f32 %v1612, 0.0
        %v1715 = vmax.f32 %v1617, 0.0
        %v1716 = vmax.f32 %v1622, 0.0
        %v1717 = vmax.f32 %v1627, 0.0
        %v1718 = vmax.f32 %v1632, 0.0
        %v1719 = vmax.f32 %v1637, 0.0
        %v1720 = vmax.f32 %v1642, 0.0
        %v1721 = vmax.f32 %v1647, 0.0
        %v1722 = vmax.f32 %v1652, 0.0
        %v1723 = vmax.f32 %v1657, 0.0
        %v1724 = vmax.f32 %v1662, 0.0
        %v1725 = vmax.f32 %v1667, 0.0
        %v1726 = vmax.f32 %v1672, 0.0
        %v1727 = vmax.f32 %v1677, 0.0
        %v1728 = vmax.f32 %v1682, 0.0
        %v1729 = vmax.f32 %v1687, 0.0
        %v1730 = vmax.f32 %v1692, 0.0
        %v1731 = vmax.f32 %v1697, 0.0
        %v1732 = vld [vmem:[%s8] sm:$0x1]
        %v1734 = vlaneseq
        %v1735 = vshrl.u32 %v1734, 7
        %v1736 = vsub.s32 0, %v1735
        %v1737 = vrot.slane %v1732, %v1736
        %v1739 = vmul.f32 %v1700, %v1737
        %v1740 = vmul.f32 %v1701, %v1737
        %v1741 = vmul.f32 %v1702, %v1737
        %v1742 = vmul.f32 %v1703, %v1737
        %v1743 = vmul.f32 %v1704, %v1737
        %v1744 = vmul.f32 %v1705, %v1737
        %v1745 = vmul.f32 %v1706, %v1737
        %v1746 = vmul.f32 %v1707, %v1737
        %v1747 = vmul.f32 %v1708, %v1737
        %v1748 = vmul.f32 %v1709, %v1737
        %v1749 = vmul.f32 %v1710, %v1737
        %v1750 = vmul.f32 %v1711, %v1737
        %v1751 = vmul.f32 %v1712, %v1737
        %v1752 = vmul.f32 %v1713, %v1737
        %v1753 = vmul.f32 %v1714, %v1737
        %v1754 = vmul.f32 %v1715, %v1737
        %v1755 = vmul.f32 %v1716, %v1737
        %v1756 = vmul.f32 %v1717, %v1737
        %v1757 = vmul.f32 %v1718, %v1737
        %v1758 = vmul.f32 %v1719, %v1737
        %v1759 = vmul.f32 %v1720, %v1737
        %v1760 = vmul.f32 %v1721, %v1737
        %v1761 = vmul.f32 %v1722, %v1737
        %v1762 = vmul.f32 %v1723, %v1737
        %v1763 = vmul.f32 %v1724, %v1737
        %v1764 = vmul.f32 %v1725, %v1737
        %v1765 = vmul.f32 %v1726, %v1737
        %v1766 = vmul.f32 %v1727, %v1737
        %v1767 = vmul.f32 %v1728, %v1737
        %v1768 = vmul.f32 %v1729, %v1737
        %v1769 = vmul.f32 %v1730, %v1737
        %v1770 = vmul.f32 %v1731, %v1737
        %1771 = vadd.xlane.f32.xlu0 %v1739
        %v1772 = vpop.xlane.xlu0 %1771
        %1773 = vadd.xlane.f32.xlu0 %v1740
        %v1774 = vpop.xlane.xlu0 %1773
        %1775 = vadd.xlane.f32.xlu0 %v1741
        %v1776 = vpop.xlane.xlu0 %1775
        %1777 = vadd.xlane.f32.xlu0 %v1742
        %v1778 = vpop.xlane.xlu0 %1777
        %1779 = vadd.xlane.f32.xlu0 %v1743
        %v1780 = vpop.xlane.xlu0 %1779
        %1781 = vadd.xlane.f32.xlu0 %v1744
        %v1782 = vpop.xlane.xlu0 %1781
        %1783 = vadd.xlane.f32.xlu0 %v1745
        %v1784 = vpop.xlane.xlu0 %1783
        %1785 = vadd.xlane.f32.xlu0 %v1746
        %v1786 = vpop.xlane.xlu0 %1785
        %1787 = vadd.xlane.f32.xlu0 %v1747
        %v1788 = vpop.xlane.xlu0 %1787
        %1789 = vadd.xlane.f32.xlu0 %v1748
        %v1790 = vpop.xlane.xlu0 %1789
        %1791 = vadd.xlane.f32.xlu0 %v1749
        %v1792 = vpop.xlane.xlu0 %1791
        %1793 = vadd.xlane.f32.xlu0 %v1750
        %v1794 = vpop.xlane.xlu0 %1793
        %1795 = vadd.xlane.f32.xlu0 %v1751
        %v1796 = vpop.xlane.xlu0 %1795
        %1797 = vadd.xlane.f32.xlu0 %v1752
        %v1798 = vpop.xlane.xlu0 %1797
        %1799 = vadd.xlane.f32.xlu0 %v1753
        %v1800 = vpop.xlane.xlu0 %1799
        %1801 = vadd.xlane.f32.xlu0 %v1754
        %v1802 = vpop.xlane.xlu0 %1801
        %1803 = vadd.xlane.f32.xlu0 %v1755
        %v1804 = vpop.xlane.xlu0 %1803
        %1805 = vadd.xlane.f32.xlu0 %v1756
        %v1806 = vpop.xlane.xlu0 %1805
        %1807 = vadd.xlane.f32.xlu0 %v1757
        %v1808 = vpop.xlane.xlu0 %1807
        %1809 = vadd.xlane.f32.xlu0 %v1758
        %v1810 = vpop.xlane.xlu0 %1809
        %1811 = vadd.xlane.f32.xlu0 %v1759
        %v1812 = vpop.xlane.xlu0 %1811
        %1813 = vadd.xlane.f32.xlu0 %v1760
        %v1814 = vpop.xlane.xlu0 %1813
        %1815 = vadd.xlane.f32.xlu0 %v1761
        %v1816 = vpop.xlane.xlu0 %1815
        %1817 = vadd.xlane.f32.xlu0 %v1762
        %v1818 = vpop.xlane.xlu0 %1817
        %1819 = vadd.xlane.f32.xlu0 %v1763
        %v1820 = vpop.xlane.xlu0 %1819
        %1821 = vadd.xlane.f32.xlu0 %v1764
        %v1822 = vpop.xlane.xlu0 %1821
        %1823 = vadd.xlane.f32.xlu0 %v1765
        %v1824 = vpop.xlane.xlu0 %1823
        %1825 = vadd.xlane.f32.xlu0 %v1766
        %v1826 = vpop.xlane.xlu0 %1825
        %1827 = vadd.xlane.f32.xlu0 %v1767
        %v1828 = vpop.xlane.xlu0 %1827
        %1829 = vadd.xlane.f32.xlu0 %v1768
        %v1830 = vpop.xlane.xlu0 %1829
        %1831 = vadd.xlane.f32.xlu0 %v1769
        %v1832 = vpop.xlane.xlu0 %1831
        %1833 = vadd.xlane.f32.xlu0 %v1770
        %v1834 = vpop.xlane.xlu0 %1833
        %s1835 = sld [smem:[#allocation8]]
        %v1836 = vstv %s1835
        %v1837 = vadd.f32 %v1772, %v1836
        %v1838 = vadd.f32 %v1774, %v1836
        %v1839 = vadd.f32 %v1776, %v1836
        %v1840 = vadd.f32 %v1778, %v1836
        %v1841 = vadd.f32 %v1780, %v1836
        %v1842 = vadd.f32 %v1782, %v1836
        %v1843 = vadd.f32 %v1784, %v1836
        %v1844 = vadd.f32 %v1786, %v1836
        %v1845 = vadd.f32 %v1788, %v1836
        %v1846 = vadd.f32 %v1790, %v1836
        %v1847 = vadd.f32 %v1792, %v1836
        %v1848 = vadd.f32 %v1794, %v1836
        %v1849 = vadd.f32 %v1796, %v1836
        %v1850 = vadd.f32 %v1798, %v1836
        %v1851 = vadd.f32 %v1800, %v1836
        %v1852 = vadd.f32 %v1802, %v1836
        %v1853 = vadd.f32 %v1804, %v1836
        %v1854 = vadd.f32 %v1806, %v1836
        %v1855 = vadd.f32 %v1808, %v1836
        %v1856 = vadd.f32 %v1810, %v1836
        %v1857 = vadd.f32 %v1812, %v1836
        %v1858 = vadd.f32 %v1814, %v1836
        %v1859 = vadd.f32 %v1816, %v1836
        %v1860 = vadd.f32 %v1818, %v1836
        %v1861 = vadd.f32 %v1820, %v1836
        %v1862 = vadd.f32 %v1822, %v1836
        %v1863 = vadd.f32 %v1824, %v1836
        %v1864 = vadd.f32 %v1826, %v1836
        %v1865 = vadd.f32 %v1828, %v1836
        %v1866 = vadd.f32 %v1830, %v1836
        %v1867 = vadd.f32 %v1832, %v1836
        %v1868 = vadd.f32 %v1834, %v1836
        %vm1869 = vcmask 7168
        %1870 = vst.msk [vmem:[%s276] sm:$0xff] %vm1869, %v1837
        %1871 = vst.msk [vmem:[%s276 + $0x8] sm:$0xff] %vm1869, %v1838
        %1872 = vst.msk [vmem:[%s276 + $0x10] sm:$0xff] %vm1869, %v1839
        %1873 = vst.msk [vmem:[%s276 + $0x18] sm:$0xff] %vm1869, %v1840
        %1874 = vst.msk [vmem:[%s276 + $0x20] sm:$0xff] %vm1869, %v1841
        %1875 = vst.msk [vmem:[%s276 + $0x28] sm:$0xff] %vm1869, %v1842
        %1876 = vst.msk [vmem:[%s276 + $0x30] sm:$0xff] %vm1869, %v1843
        %1877 = vst.msk [vmem:[%s276 + $0x38] sm:$0xff] %vm1869, %v1844
        %1878 = vst.msk [vmem:[%s276 + $0x40] sm:$0xff] %vm1869, %v1845
        %1879 = vst.msk [vmem:[%s276 + $0x48] sm:$0xff] %vm1869, %v1846
        %1880 = vst.msk [vmem:[%s276 + $0x50] sm:$0xff] %vm1869, %v1847
        %1881 = vst.msk [vmem:[%s276 + $0x58] sm:$0xff] %vm1869, %v1848
        %1882 = vst.msk [vmem:[%s276 + $0x60] sm:$0xff] %vm1869, %v1849
        %1883 = vst.msk [vmem:[%s276 + $0x68] sm:$0xff] %vm1869, %v1850
        %1884 = vst.msk [vmem:[%s276 + $0x70] sm:$0xff] %vm1869, %v1851
        %1885 = vst.msk [vmem:[%s276 + $0x78] sm:$0xff] %vm1869, %v1852
        %1886 = vst.msk [vmem:[%s276 + $0x80] sm:$0xff] %vm1869, %v1853
        %1887 = vst.msk [vmem:[%s276 + $0x88] sm:$0xff] %vm1869, %v1854
        %1888 = vst.msk [vmem:[%s276 + $0x90] sm:$0xff] %vm1869, %v1855
        %1889 = vst.msk [vmem:[%s276 + $0x98] sm:$0xff] %vm1869, %v1856
        %1890 = vst.msk [vmem:[%s276 + $0xa0] sm:$0xff] %vm1869, %v1857
        %1891 = vst.msk [vmem:[%s276 + $0xa8] sm:$0xff] %vm1869, %v1858
        %1892 = vst.msk [vmem:[%s276 + $0xb0] sm:$0xff] %vm1869, %v1859
        %1893 = vst.msk [vmem:[%s276 + $0xb8] sm:$0xff] %vm1869, %v1860
        %1894 = vst.msk [vmem:[%s276 + $0xc0] sm:$0xff] %vm1869, %v1861
        %1895 = vst.msk [vmem:[%s276 + $0xc8] sm:$0xff] %vm1869, %v1862
        %1896 = vst.msk [vmem:[%s276 + $0xd0] sm:$0xff] %vm1869, %v1863
        %1897 = vst.msk [vmem:[%s276 + $0xd8] sm:$0xff] %vm1869, %v1864
        %1898 = vst.msk [vmem:[%s276 + $0xe0] sm:$0xff] %vm1869, %v1865
        %1899 = vst.msk [vmem:[%s276 + $0xe8] sm:$0xff] %vm1869, %v1866
        %1900 = vst.msk [vmem:[%s276 + $0xf0] sm:$0xff] %vm1869, %v1867
        %1901 = vst.msk [vmem:[%s276 + $0xf8] sm:$0xff] %vm1869, %v1868
        %s1902 = smul.u32 32, %s34
        %p1903 = scmp.lt.s32.totalorder %s1902, 63
        %s1904 = scalar_select %p1903, %s1902, 63
        %s1905 = smul.addr %s1904, 8
        %s1906 = scalar_lea.vmem %s10, %s1905
        // Predicated region
        $region203: #{mlp_forward.1} parent=43 // pred_check
          %p1907 = pneg %p178
        $region204: #{mlp_forward.1} parent=43 // pred_check_branch
          %1909 = sbr.rel (%p1907) target = $region206
        $region205: #{mlp_forward.1} parent=43 // pred_region
          %s1910 = smul.u32 32, %s34
        $region206: #{mlp_forward.1} parent=43 // pred_fallthru
          _
      $region44: #{mlp_forward.1} parent=5 // pred_fallthru
        _
      %p1911 = scmp.le.s32.totalorder 2, %s29
      // Predicated region
      $region207: #{mlp_forward.1} parent=5 // pred_check
        %p1912 = pneg %p1911
      $region208: #{mlp_forward.1} parent=5 // pred_check_branch
        %1914 = sbr.rel (%p1912) target = $region210
      $region209: #{mlp_forward.1} parent=5 // pred_region
        %s1915 = ssub.s32 %s29, 2
        // Predicated region
        $region211: #{mlp_forward.1} parent=209 // pred_check
          %p1916 = pneg %p184
        $region212: #{mlp_forward.1} parent=209 // pred_check_branch
          %1918 = sbr.rel (%p1916) target = $region214
        $region213: #{mlp_forward.1} parent=209 // pred_region
          %s1919 = smul.u32 32, %s35
          %p1920 = scmp.lt.s32.totalorder %s1919, 63
          %s1921 = scalar_select %p1920, %s1919, 63
          %s1922 = smul.addr %s1921, 8
          %s1923 = scalar_lea.vmem %s10, %s1922
        $region214: #{mlp_forward.1} parent=209 // pred_fallthru
          _
      $region210: #{mlp_forward.1} parent=5 // pred_fallthru
        _
    $region6: #{mlp_forward.1} parent=1 // loop_footer
      %s33 = sadd.s32 1, %s29
    $region7: #{mlp_forward.1} parent=1 // loop_footer_branch
      %28 = sbr.rel target = $region3
    $region8: #{mlp_forward.1} parent=1 // loop_exit
      _
    %1924 = vsyncpa [#allocation10], 1
    %s1925 = scalar_lea.sflag [#allocation10], 1
    %1926 = vsyncpa %s1925, 1
    %1927 = vsyncpa [#allocation12], 1
  %1928 = vsyncmov [#allocation4]
  %s1929 = vpop.sfrf %1928
  %p1930 = scmp.eq.s32.totalorder %s1929, 0
  %p1931 = pneg %p1930
  %1933 = shalt.err (%p1931)
  %s1934 = scalar_lea.sflag [#allocation4], 1
  %1935 = vsyncmov %s1934
  %s1936 = vpop.sfrf %1935
  %p1937 = scmp.eq.s32.totalorder %s1936, 0
  %p1938 = pneg %p1937
  %1940 = shalt.err (%p1938)
  %s1941 = scalar_lea.sflag [#allocation4], 2
  %1942 = vsyncmov %s1941
  %s1943 = vpop.sfrf %1942
  %p1944 = scmp.eq.s32.totalorder %s1943, 0
  %p1945 = pneg %p1944
  %1947 = shalt.err (%p1945)
  %s1948 = scalar_lea.sflag [#allocation4], 3
  %1949 = vsyncmov %s1948
  %s1950 = vpop.sfrf %1949
  %p1951 = scmp.eq.s32.totalorder %s1950, 0
  %p1952 = pneg %p1951
  %1954 = shalt.err (%p1952)

</llo_original>
